<compile_context>
chip_gen: v7x
topology: tpu7x:2x2x1
jax: 0.10.0
libtpu: 0.0.40
codegen_flags: <defaults>
</compile_context>

<pallas_src>
import jax
import jax.numpy as jnp
from jax import lax
from jax.experimental import pallas as pl
from jax.experimental.pallas import tpu as pltpu


_DILATIONS = (6, 12, 18)


def _make_kernel(H, W, C, groups):
    """groups: static tuple of (sj, ((si, tap_idx), ...)) column-shift groups."""
    HW = H * W
    inv_hw = 1.0 / float(HW)

    def kernel(x_ref, w_center_ref, w_pool_ref, w_taps_ref, bias_ref, o_ref):
        x = x_ref[...]                           # (H, W, C) bf16
        xf = x.reshape(HW, C)                    # layout no-op while W % 8 == 0

        # ---- global-avg-pool branch folded into a (1, C) bias row -----------
        # mean via a ones-row matmul -> f32 accumulation on the MXU; no f32
        # copy of the whole input tile is made.
        ones_row = jnp.ones((1, HW), x.dtype)
        mean = jnp.dot(ones_row, xf, preferred_element_type=jnp.float32) * inv_hw
        pooled = jnp.dot(mean.astype(x.dtype), w_pool_ref[...],
                         preferred_element_type=jnp.float32)             # (1, C)
        bias_row = pooled + bias_ref[...]                                 # (1, C) f32

        # ---- all center taps (1x1 branch + 3 dilated centers, pre-summed) ---
        center = jnp.dot(xf, w_center_ref[...],
                         preferred_element_type=jnp.float32)              # (HW, C)
        o_ref[...] = (center + bias_row).reshape(H, W, C)

        # ---- off-center dilated taps, grouped by column shift sj -------------
        for sj, taps in groups:
            if sj == 0:
                xs = x
            elif sj > 0:
                xs = jnp.concatenate(
                    [x[:, sj:, :], jnp.zeros((H, sj, C), x.dtype)], axis=1)
            else:
                xs = jnp.concatenate(
                    [jnp.zeros((H, -sj, C), x.dtype), x[:, :W + sj, :]], axis=1)
            xsf = xs.reshape(HW, C)
            for si, t in taps:
                y = jnp.dot(xsf, w_taps_ref[t],
                            preferred_element_type=jnp.float32)           # (HW, C)
                y = y.reshape(H, W, C)
                # out[i, j] += x_pad[i + si, j + sj] @ w.  The column shift is
                # baked into xs; the row shift is a static slice on the
                # un-tiled major dim H, so the accumulate never touches masked
                # sublane/lane stores.
                oi0 = max(0, -si)
                oi1 = min(H, H - si)
                o_ref[oi0:oi1, :, :] += y[oi0 + si:oi1 + si, :, :]

    return kernel


def fold_params(params, H, W):
    """Fold the output 1x1 conv into every branch; build the static tap table.

    Returns ((w_center, w_pool_f, w_taps, bias), groups) where the weights are
    bf16 (bias stays f32) and `groups` is a static column-shift tap table.
    Call once for frozen weights and reuse across forward calls.
    """
    (w_pool, b_pool, w_a1, b_a1, w_a6, b_a6,
     w_a12, b_a12, w_a18, b_a18, w_out, b_out) = params
    C = w_pool.shape[0]
    f32 = jnp.float32
    wo = w_out.astype(f32)                       # (5, C, C); order matches concat

    w_pool_f = w_pool.astype(f32) @ wo[0]
    w_center = w_a1.astype(f32) @ wo[1]
    bias = (b_out.astype(f32)
            + b_pool.astype(f32) @ wo[0] + b_a1.astype(f32) @ wo[1]
            + b_a6.astype(f32) @ wo[2] + b_a12.astype(f32) @ wo[3]
            + b_a18.astype(f32) @ wo[4])

    tap_ws = []
    groups = {}
    for w_d, d, oi in ((w_a6, _DILATIONS[0], 2),
                       (w_a12, _DILATIONS[1], 3),
                       (w_a18, _DILATIONS[2], 4)):
        w_fold = jnp.einsum('hwic,co->hwio', w_d.astype(f32), wo[oi])
        for kh in range(3):
            si = (kh - 1) * d
            if abs(si) >= H:
                continue                          # tap reads only zero padding
            for kw in range(3):
                sj = (kw - 1) * d
                if abs(sj) >= W:
                    continue
                if kh == 1 and kw == 1:
                    w_center = w_center + w_fold[1, 1]   # merge all center taps
                else:
                    groups.setdefault(sj, []).append((si, len(tap_ws)))
                    tap_ws.append(w_fold[kh, kw])

    w_taps = jnp.stack(tap_ws) if tap_ws else jnp.zeros((1, C, C), f32)
    groups = tuple((sj, tuple(t)) for sj, t in sorted(groups.items()))

    bf16 = jnp.bfloat16
    return (w_center.astype(bf16), w_pool_f.astype(bf16),
            w_taps.astype(bf16), bias), groups


def aspp_forward_nhwc(x_nhwc, params):
    """NHWC-native fused ASPP forward (preferred: no layout round-trips)."""
    B, H, W, C = x_nhwc.shape
    (w_center, w_pool_f, w_taps, bias), groups = fold_params(params, H, W)
    T = w_taps.shape[0]
    n_taps = sum(len(t) for _, t in groups)
    x = x_nhwc.astype(jnp.bfloat16)              # bf16 HBM DMA + bf16 MXU LHS

    def const(shape):
        return pl.BlockSpec(shape, lambda b: (0,) * len(shape))

    grid_spec = pltpu.PrefetchScalarGridSpec(
        num_scalar_prefetch=0,
        grid=(B,),
        in_specs=[
            pl.BlockSpec((None, H, W, C), lambda b: (b, 0, 0, 0)),  # x (per image)
            const((C, C)),       # w_center  (1x1 branch + all dilated centers)
            const((C, C)),       # w_pool_f  (pooled-branch weight, folded)
            const((T, C, C)),    # w_taps    (off-center taps, folded)
            const((1, C)),       # bias      (all branch + output biases, f32)
        ],
        out_specs=pl.BlockSpec((None, H, W, C), lambda b: (b, 0, 0, 0)),
    )

    flops = 2 * B * H * W * C * C * (n_taps + 1) + 2 * B * H * W * C + 2 * B * C * C
    bytes_accessed = (x.size * 2 + B * H * W * C * 4
                      + (2 * C * C + T * C * C) * 2 + C * 4)

    return pl.pallas_call(
        _make_kernel(H, W, C, groups),
        out_shape=jax.ShapeDtypeStruct((B, H, W, C), jnp.float32),
        grid_spec=grid_spec,
        compiler_params=pltpu.CompilerParams(
            dimension_semantics=("parallel",)),
        cost_estimate=pl.CostEstimate(
            flops=flops, transcendentals=0, bytes_accessed=bytes_accessed),
    )(x, w_center, w_pool_f, w_taps, bias)


def aspp_forward(x_nchw, params):
    """NCHW adapter for PyTorch parity (use aspp_forward_nhwc in NHWC models)."""
    x = jnp.transpose(x_nchw, (0, 2, 3, 1))
    out = aspp_forward_nhwc(x, params)
    return jnp.transpose(out, (0, 3, 1, 2))


def init_params(key, C):
    """Deterministic synthetic parameters (matmul-form layouts)."""
    ks = jax.random.split(key, 12)
    w = lambda k, shape: jax.random.normal(k, shape, jnp.float32) * 0.1
    return (
        w(ks[0], (C, C)),        w(ks[1], (1, C)),        # pooled 1x1 conv
        w(ks[2], (C, C)),        w(ks[3], (1, C)),        # atrous_block1
        w(ks[4], (3, 3, C, C)),  w(ks[5], (1, C)),        # atrous_block6
        w(ks[6], (3, 3, C, C)),  w(ks[7], (1, C)),        # atrous_block12
        w(ks[8], (3, 3, C, C)),  w(ks[9], (1, C)),        # atrous_block18
        w(ks[10], (5, C, C)),    w(ks[11], (1, C)),       # conv_1x1_output
    )


def aspp_reference(x_nchw, params):
    """Independent all-f32 plain-JAX (XLA) reference, faithful to the module."""
    (w_pool, b_pool, w_a1, b_a1, w_a6, b_a6,
     w_a12, b_a12, w_a18, b_a18, w_out, b_out) = params
    x = jnp.transpose(x_nchw, (0, 2, 3, 1)).astype(jnp.float32)
    B, H, W, C = x.shape
    mean = jnp.mean(x, axis=(1, 2), keepdims=True)
    img = jnp.einsum('bhwc,cd->bhwd', mean, w_pool) + b_pool
    img = jnp.broadcast_to(img, (B, H, W, C))    # bilinear upsample of 1x1 -> const
    a1 = jnp.einsum('bhwc,cd->bhwd', x, w_a1) + b_a1

    def dil(w, b, d):
        y = lax.conv_general_dilated(
            x, w, window_strides=(1, 1), padding=[(d, d), (d, d)],
            rhs_dilation=(d, d), dimension_numbers=('NHWC', 'HWIO', 'NHWC'))
        return y + b

    a6, a12, a18 = dil(w_a6, b_a6, 6), dil(w_a12, b_a12, 12), dil(w_a18, b_a18, 18)
    out = (jnp.einsum('bhwc,cd->bhwd', img, w_out[0])
           + jnp.einsum('bhwc,cd->bhwd', a1, w_out[1])
           + jnp.einsum('bhwc,cd->bhwd', a6, w_out[2])
           + jnp.einsum('bhwc,cd->bhwd', a12, w_out[3])
           + jnp.einsum('bhwc,cd->bhwd', a18, w_out[4])
           + b_out)
    return jnp.transpose(out, (0, 3, 1, 2))


if __name__ == "__main__":
    key = jax.random.PRNGKey(0)
    kx, kp = jax.random.split(key)
    B, C, H, W = 2, 4, 16, 16
    x = jax.random.normal(kx, (B, C, H, W), jnp.float32)   # NCHW, like PyTorch
    params = init_params(kp, C)

    fwd = jax.jit(aspp_forward)
    out = jax.block_until_ready(fwd(x, params))
    ref = jax.block_until_ready(aspp_reference(x, params))

    assert out.shape == (B, C, H, W), out.shape
    max_err = float(jnp.max(jnp.abs(out - ref)))
    # bf16 matmul operands (f32 accumulation) vs. the all-f32 reference:
    # expected max abs error at these magnitudes is a few 1e-3; 3e-2 is safe.
    if not (max_err <= 3e-2):
        raise AssertionError(f"mismatch vs reference, max abs err = {max_err}")
    print("KERNEL_OK")
</pallas_src>

<mosaic_0001>
module attributes {stable_mosaic.version = 11 : i64} {
  func.func @kernel(%arg0: i32, %arg1: memref<1x16x16x4xbf16, #tpu.memory_space<vmem>>, %arg2: memref<4x4xbf16, #tpu.memory_space<vmem>>, %arg3: memref<4x4xbf16, #tpu.memory_space<vmem>>, %arg4: memref<16x4x4xbf16, #tpu.memory_space<vmem>>, %arg5: memref<1x4xf32, #tpu.memory_space<vmem>>, %arg6: memref<1x16x16x4xf32, #tpu.memory_space<vmem>>) attributes {dimension_semantics = [#tpu.dimension_semantics<parallel>], iteration_bounds = array<i64: 2>, scalar_prefetch = 0 : i64, scratch_operands = 0 : i64, tpu.core_type = #tpu.core_type<tc>, window_params = [{transform_indices = @transform_0, window_bounds = array<i64: 1, 16, 16, 4>}, {pipeline_mode = #tpu.pipeline_mode<synchronous>, transform_indices = @transform_1, window_bounds = array<i64: 4, 4>}, {pipeline_mode = #tpu.pipeline_mode<synchronous>, transform_indices = @transform_2, window_bounds = array<i64: 4, 4>}, {pipeline_mode = #tpu.pipeline_mode<synchronous>, transform_indices = @transform_3, window_bounds = array<i64: 16, 4, 4>}, {pipeline_mode = #tpu.pipeline_mode<synchronous>, transform_indices = @transform_4, window_bounds = array<i64: 1, 4>}, {transform_indices = @transform_5, window_bounds = array<i64: 1, 16, 16, 4>}]} {
    %c0 = arith.constant 0 : index
    %c0_0 = arith.constant 0 : index
    %c0_1 = arith.constant 0 : index
    %c0_2 = arith.constant 0 : index
    %0 = vector.load %arg1[%c0, %c0_0, %c0_1, %c0_2] : memref<1x16x16x4xbf16, #tpu.memory_space<vmem>>, vector<1x16x16x4xbf16>
    %1 = vector.shape_cast %0 : vector<1x16x16x4xbf16> to vector<16x16x4xbf16>
    %2 = vector.shape_cast %1 : vector<16x16x4xbf16> to vector<256x4xbf16>
    %cst = arith.constant 1.000000e+00 : bf16
    %3 = vector.broadcast %cst : bf16 to vector<1x256xbf16>
    %cst_3 = arith.constant dense<0.000000e+00> : vector<1x4xf32>
    %4 = tpu.matmul %3, %2, %cst_3 {dimension_numbers = #tpu.dot_dimension_numbers<[1], [0], [0], [1], [0, 0, 1, 1], [], []>} : vector<1x256xbf16>, vector<256x4xbf16>, vector<1x4xf32> -> vector<1x4xf32>
    %cst_4 = arith.constant 3.906250e-03 : f32
    %5 = vector.broadcast %cst_4 : f32 to vector<1x4xf32>
    %6 = arith.mulf %4, %5 : vector<1x4xf32>
    %7 = arith.truncf %6 : vector<1x4xf32> to vector<1x4xbf16>
    %c0_5 = arith.constant 0 : index
    %c0_6 = arith.constant 0 : index
    %8 = vector.load %arg3[%c0_5, %c0_6] : memref<4x4xbf16, #tpu.memory_space<vmem>>, vector<4x4xbf16>
    %cst_7 = arith.constant dense<0.000000e+00> : vector<1x4xf32>
    %9 = tpu.matmul %7, %8, %cst_7 {dimension_numbers = #tpu.dot_dimension_numbers<[1], [0], [0], [1], [0, 0, 1, 1], [], []>} : vector<1x4xbf16>, vector<4x4xbf16>, vector<1x4xf32> -> vector<1x4xf32>
    %c0_8 = arith.constant 0 : index
    %c0_9 = arith.constant 0 : index
    %10 = vector.load %arg5[%c0_8, %c0_9] : memref<1x4xf32, #tpu.memory_space<vmem>>, vector<1x4xf32>
    %11 = arith.addf %9, %10 : vector<1x4xf32>
    %c0_10 = arith.constant 0 : index
    %c0_11 = arith.constant 0 : index
    %12 = vector.load %arg2[%c0_10, %c0_11] : memref<4x4xbf16, #tpu.memory_space<vmem>>, vector<4x4xbf16>
    %cst_12 = arith.constant dense<0.000000e+00> : vector<256x4xf32>
    %13 = tpu.matmul %2, %12, %cst_12 {dimension_numbers = #tpu.dot_dimension_numbers<[1], [0], [0], [1], [0, 0, 1, 1], [], []>} : vector<256x4xbf16>, vector<4x4xbf16>, vector<256x4xf32> -> vector<256x4xf32>
    %14 = vector.broadcast %11 : vector<1x4xf32> to vector<256x4xf32>
    %15 = arith.addf %13, %14 : vector<256x4xf32>
    %16 = vector.shape_cast %15 : vector<256x4xf32> to vector<16x16x4xf32>
    %c0_13 = arith.constant 0 : index
    %c0_14 = arith.constant 0 : index
    %c0_15 = arith.constant 0 : index
    %c0_16 = arith.constant 0 : index
    %17 = vector.load %arg6[%c0_13, %c0_14, %c0_15, %c0_16] : memref<1x16x16x4xf32, #tpu.memory_space<vmem>>, vector<1x16x16x4xf32>
    %18 = vector.shape_cast %17 : vector<1x16x16x4xf32> to vector<16x16x4xf32>
    %19 = vector.shape_cast %16 : vector<16x16x4xf32> to vector<1x16x16x4xf32>
    tpu.vector_store %arg6[%c0_13, %c0_14, %c0_15, %c0_16], %19 {strides = array<i32>} : memref<1x16x16x4xf32, #tpu.memory_space<vmem>>, vector<1x16x16x4xf32>,
    %cst_17 = arith.constant 0.000000e+00 : bf16
    %20 = vector.broadcast %cst_17 : bf16 to vector<16x12x4xbf16>
    %21 = vector.extract_strided_slice %1 {offsets = [0, 0, 0], sizes = [16, 4, 4], strides = [1, 1, 1]} : vector<16x16x4xbf16> to vector<16x4x4xbf16>
    %22 = tpu.concatenate %20, %21 in 1 : vector<16x12x4xbf16>, vector<16x4x4xbf16> -> vector<16x16x4xbf16>
    %23 = vector.shape_cast %22 : vector<16x16x4xbf16> to vector<256x4xbf16>
    %c8 = arith.constant 8 : index
    %c0_18 = arith.constant 0 : index
    %c0_19 = arith.constant 0 : index
    %24 = vector.load %arg4[%c8, %c0_18, %c0_19] : memref<16x4x4xbf16, #tpu.memory_space<vmem>>, vector<1x4x4xbf16>
    %25 = vector.shape_cast %24 : vector<1x4x4xbf16> to vector<4x4xbf16>
    %cst_20 = arith.constant dense<0.000000e+00> : vector<256x4xf32>
    %26 = tpu.matmul %23, %25, %cst_20 {dimension_numbers = #tpu.dot_dimension_numbers<[1], [0], [0], [1], [0, 0, 1, 1], [], []>} : vector<256x4xbf16>, vector<4x4xbf16>, vector<256x4xf32> -> vector<256x4xf32>
    %27 = vector.shape_cast %26 : vector<256x4xf32> to vector<16x16x4xf32>
    %c0_21 = arith.constant 0 : index
    %c12 = arith.constant 12 : index
    %c0_22 = arith.constant 0 : index
    %c0_23 = arith.constant 0 : index
    %28 = vector.load %arg6[%c0_21, %c12, %c0_22, %c0_23] : memref<1x16x16x4xf32, #tpu.memory_space<vmem>>, vector<1x4x16x4xf32>
    %29 = vector.shape_cast %28 : vector<1x4x16x4xf32> to vector<4x16x4xf32>
    %30 = vector.extract_strided_slice %27 {offsets = [0, 0, 0], sizes = [4, 16, 4], strides = [1, 1, 1]} : vector<16x16x4xf32> to vector<4x16x4xf32>
    %31 = arith.addf %29, %30 : vector<4x16x4xf32>
    %c0_24 = arith.constant 0 : index
    %c12_25 = arith.constant 12 : index
    %c0_26 = arith.constant 0 : index
    %c0_27 = arith.constant 0 : index
    %32 = vector.load %arg6[%c0_24, %c12_25, %c0_26, %c0_27] : memref<1x16x16x4xf32, #tpu.memory_space<vmem>>, vector<1x4x16x4xf32>
    %33 = vector.shape_cast %32 : vector<1x4x16x4xf32> to vector<4x16x4xf32>
    %34 = vector.shape_cast %31 : vector<4x16x4xf32> to vector<1x4x16x4xf32>
    tpu.vector_store %arg6[%c0_24, %c12_25, %c0_26, %c0_27], %34 {strides = array<i32>} : memref<1x16x16x4xf32, #tpu.memory_space<vmem>>, vector<1x4x16x4xf32>,
    %c11 = arith.constant 11 : index
    %c0_28 = arith.constant 0 : index
    %c0_29 = arith.constant 0 : index
    %35 = vector.load %arg4[%c11, %c0_28, %c0_29] : memref<16x4x4xbf16, #tpu.memory_space<vmem>>, vector<1x4x4xbf16>
    %36 = vector.shape_cast %35 : vector<1x4x4xbf16> to vector<4x4xbf16>
    %cst_30 = arith.constant dense<0.000000e+00> : vector<256x4xf32>
    %37 = tpu.matmul %23, %36, %cst_30 {dimension_numbers = #tpu.dot_dimension_numbers<[1], [0], [0], [1], [0, 0, 1, 1], [], []>} : vector<256x4xbf16>, vector<4x4xbf16>, vector<256x4xf32> -> vector<256x4xf32>
    %38 = vector.shape_cast %37 : vector<256x4xf32> to vector<16x16x4xf32>
    %c0_31 = arith.constant 0 : index
    %c0_32 = arith.constant 0 : index
    %c0_33 = arith.constant 0 : index
    %c0_34 = arith.constant 0 : index
    %39 = vector.load %arg6[%c0_31, %c0_32, %c0_33, %c0_34] : memref<1x16x16x4xf32, #tpu.memory_space<vmem>>, vector<1x16x16x4xf32>
    %40 = vector.shape_cast %39 : vector<1x16x16x4xf32> to vector<16x16x4xf32>
    %41 = arith.addf %40, %38 : vector<16x16x4xf32>
    %c0_35 = arith.constant 0 : index
    %c0_36 = arith.constant 0 : index
    %c0_37 = arith.constant 0 : index
    %c0_38 = arith.constant 0 : index
    %42 = vector.load %arg6[%c0_35, %c0_36, %c0_37, %c0_38] : memref<1x16x16x4xf32, #tpu.memory_space<vmem>>, vector<1x16x16x4xf32>
    %43 = vector.shape_cast %42 : vector<1x16x16x4xf32> to vector<16x16x4xf32>
    %44 = vector.shape_cast %41 : vector<16x16x4xf32> to vector<1x16x16x4xf32>
    tpu.vector_store %arg6[%c0_35, %c0_36, %c0_37, %c0_38], %44 {strides = array<i32>} : memref<1x16x16x4xf32, #tpu.memory_space<vmem>>, vector<1x16x16x4xf32>,
    %c13 = arith.constant 13 : index
    %c0_39 = arith.constant 0 : index
    %c0_40 = arith.constant 0 : index
    %45 = vector.load %arg4[%c13, %c0_39, %c0_40] : memref<16x4x4xbf16, #tpu.memory_space<vmem>>, vector<1x4x4xbf16>
    %46 = vector.shape_cast %45 : vector<1x4x4xbf16> to vector<4x4xbf16>
    %cst_41 = arith.constant dense<0.000000e+00> : vector<256x4xf32>
    %47 = tpu.matmul %23, %46, %cst_41 {dimension_numbers = #tpu.dot_dimension_numbers<[1], [0], [0], [1], [0, 0, 1, 1], [], []>} : vector<256x4xbf16>, vector<4x4xbf16>, vector<256x4xf32> -> vector<256x4xf32>
    %48 = vector.shape_cast %47 : vector<256x4xf32> to vector<16x16x4xf32>
    %c0_42 = arith.constant 0 : index
    %c0_43 = arith.constant 0 : index
    %c0_44 = arith.constant 0 : index
    %c0_45 = arith.constant 0 : index
    %49 = vector.load %arg6[%c0_42, %c0_43, %c0_44, %c0_45] : memref<1x16x16x4xf32, #tpu.memory_space<vmem>>, vector<1x4x16x4xf32>
    %50 = vector.shape_cast %49 : vector<1x4x16x4xf32> to vector<4x16x4xf32>
    %51 = vector.extract_strided_slice %48 {offsets = [12, 0, 0], sizes = [4, 16, 4], strides = [1, 1, 1]} : vector<16x16x4xf32> to vector<4x16x4xf32>
    %52 = arith.addf %50, %51 : vector<4x16x4xf32>
    %c0_46 = arith.constant 0 : index
    %c0_47 = arith.constant 0 : index
    %c0_48 = arith.constant 0 : index
    %c0_49 = arith.constant 0 : index
    %53 = vector.load %arg6[%c0_46, %c0_47, %c0_48, %c0_49] : memref<1x16x16x4xf32, #tpu.memory_space<vmem>>, vector<1x4x16x4xf32>
    %54 = vector.shape_cast %53 : vector<1x4x16x4xf32> to vector<4x16x4xf32>
    %55 = vector.shape_cast %52 : vector<4x16x4xf32> to vector<1x4x16x4xf32>
    tpu.vector_store %arg6[%c0_46, %c0_47, %c0_48, %c0_49], %55 {strides = array<i32>} : memref<1x16x16x4xf32, #tpu.memory_space<vmem>>, vector<1x4x16x4xf32>,
    %cst_50 = arith.constant 0.000000e+00 : bf16
    %56 = vector.broadcast %cst_50 : bf16 to vector<16x6x4xbf16>
    %57 = vector.extract_strided_slice %1 {offsets = [0, 0, 0], sizes = [16, 10, 4], strides = [1, 1, 1]} : vector<16x16x4xbf16> to vector<16x10x4xbf16>
    %58 = tpu.concatenate %56, %57 in 1 : vector<16x6x4xbf16>, vector<16x10x4xbf16> -> vector<16x16x4xbf16>
    %59 = vector.shape_cast %58 : vector<16x16x4xbf16> to vector<256x4xbf16>
    %c0_51 = arith.constant 0 : index
    %c0_52 = arith.constant 0 : index
    %c0_53 = arith.constant 0 : index
    %60 = vector.load %arg4[%c0_51, %c0_52, %c0_53] : memref<16x4x4xbf16, #tpu.memory_space<vmem>>, vector<1x4x4xbf16>
    %61 = vector.shape_cast %60 : vector<1x4x4xbf16> to vector<4x4xbf16>
    %cst_54 = arith.constant dense<0.000000e+00> : vector<256x4xf32>
    %62 = tpu.matmul %59, %61, %cst_54 {dimension_numbers = #tpu.dot_dimension_numbers<[1], [0], [0], [1], [0, 0, 1, 1], [], []>} : vector<256x4xbf16>, vector<4x4xbf16>, vector<256x4xf32> -> vector<256x4xf32>
    %63 = vector.shape_cast %62 : vector<256x4xf32> to vector<16x16x4xf32>
    %c0_55 = arith.constant 0 : index
    %c6 = arith.constant 6 : index
    %c0_56 = arith.constant 0 : index
    %c0_57 = arith.constant 0 : index
    %64 = vector.load %arg6[%c0_55, %c6, %c0_56, %c0_57] : memref<1x16x16x4xf32, #tpu.memory_space<vmem>>, vector<1x10x16x4xf32>
    %65 = vector.shape_cast %64 : vector<1x10x16x4xf32> to vector<10x16x4xf32>
    %66 = vector.extract_strided_slice %63 {offsets = [0, 0, 0], sizes = [10, 16, 4], strides = [1, 1, 1]} : vector<16x16x4xf32> to vector<10x16x4xf32>
    %67 = arith.addf %65, %66 : vector<10x16x4xf32>
    %c0_58 = arith.constant 0 : index
    %c6_59 = arith.constant 6 : index
    %c0_60 = arith.constant 0 : index
    %c0_61 = arith.constant 0 : index
    %68 = vector.load %arg6[%c0_58, %c6_59, %c0_60, %c0_61] : memref<1x16x16x4xf32, #tpu.memory_space<vmem>>, vector<1x10x16x4xf32>
    %69 = vector.shape_cast %68 : vector<1x10x16x4xf32> to vector<10x16x4xf32>
    %70 = vector.shape_cast %67 : vector<10x16x4xf32> to vector<1x10x16x4xf32>
    tpu.vector_store %arg6[%c0_58, %c6_59, %c0_60, %c0_61], %70 {strides = array<i32>} : memref<1x16x16x4xf32, #tpu.memory_space<vmem>>, vector<1x10x16x4xf32>,
    %c3 = arith.constant 3 : index
    %c0_62 = arith.constant 0 : index
    %c0_63 = arith.constant 0 : index
    %71 = vector.load %arg4[%c3, %c0_62, %c0_63] : memref<16x4x4xbf16, #tpu.memory_space<vmem>>, vector<1x4x4xbf16>
    %72 = vector.shape_cast %71 : vector<1x4x4xbf16> to vector<4x4xbf16>
    %cst_64 = arith.constant dense<0.000000e+00> : vector<256x4xf32>
    %73 = tpu.matmul %59, %72, %cst_64 {dimension_numbers = #tpu.dot_dimension_numbers<[1], [0], [0], [1], [0, 0, 1, 1], [], []>} : vector<256x4xbf16>, vector<4x4xbf16>, vector<256x4xf32> -> vector<256x4xf32>
    %74 = vector.shape_cast %73 : vector<256x4xf32> to vector<16x16x4xf32>
    %c0_65 = arith.constant 0 : index
    %c0_66 = arith.constant 0 : index
    %c0_67 = arith.constant 0 : index
    %c0_68 = arith.constant 0 : index
    %75 = vector.load %arg6[%c0_65, %c0_66, %c0_67, %c0_68] : memref<1x16x16x4xf32, #tpu.memory_space<vmem>>, vector<1x16x16x4xf32>
    %76 = vector.shape_cast %75 : vector<1x16x16x4xf32> to vector<16x16x4xf32>
    %77 = arith.addf %76, %74 : vector<16x16x4xf32>
    %c0_69 = arith.constant 0 : index
    %c0_70 = arith.constant 0 : index
    %c0_71 = arith.constant 0 : index
    %c0_72 = arith.constant 0 : index
    %78 = vector.load %arg6[%c0_69, %c0_70, %c0_71, %c0_72] : memref<1x16x16x4xf32, #tpu.memory_space<vmem>>, vector<1x16x16x4xf32>
    %79 = vector.shape_cast %78 : vector<1x16x16x4xf32> to vector<16x16x4xf32>
    %80 = vector.shape_cast %77 : vector<16x16x4xf32> to vector<1x16x16x4xf32>
    tpu.vector_store %arg6[%c0_69, %c0_70, %c0_71, %c0_72], %80 {strides = array<i32>} : memref<1x16x16x4xf32, #tpu.memory_space<vmem>>, vector<1x16x16x4xf32>,
    %c5 = arith.constant 5 : index
    %c0_73 = arith.constant 0 : index
    %c0_74 = arith.constant 0 : index
    %81 = vector.load %arg4[%c5, %c0_73, %c0_74] : memref<16x4x4xbf16, #tpu.memory_space<vmem>>, vector<1x4x4xbf16>
    %82 = vector.shape_cast %81 : vector<1x4x4xbf16> to vector<4x4xbf16>
    %cst_75 = arith.constant dense<0.000000e+00> : vector<256x4xf32>
    %83 = tpu.matmul %59, %82, %cst_75 {dimension_numbers = #tpu.dot_dimension_numbers<[1], [0], [0], [1], [0, 0, 1, 1], [], []>} : vector<256x4xbf16>, vector<4x4xbf16>, vector<256x4xf32> -> vector<256x4xf32>
    %84 = vector.shape_cast %83 : vector<256x4xf32> to vector<16x16x4xf32>
    %c0_76 = arith.constant 0 : index
    %c0_77 = arith.constant 0 : index
    %c0_78 = arith.constant 0 : index
    %c0_79 = arith.constant 0 : index
    %85 = vector.load %arg6[%c0_76, %c0_77, %c0_78, %c0_79] : memref<1x16x16x4xf32, #tpu.memory_space<vmem>>, vector<1x10x16x4xf32>
    %86 = vector.shape_cast %85 : vector<1x10x16x4xf32> to vector<10x16x4xf32>
    %87 = vector.extract_strided_slice %84 {offsets = [6, 0, 0], sizes = [10, 16, 4], strides = [1, 1, 1]} : vector<16x16x4xf32> to vector<10x16x4xf32>
    %88 = arith.addf %86, %87 : vector<10x16x4xf32>
    %c0_80 = arith.constant 0 : index
    %c0_81 = arith.constant 0 : index
    %c0_82 = arith.constant 0 : index
    %c0_83 = arith.constant 0 : index
    %89 = vector.load %arg6[%c0_80, %c0_81, %c0_82, %c0_83] : memref<1x16x16x4xf32, #tpu.memory_space<vmem>>, vector<1x10x16x4xf32>
    %90 = vector.shape_cast %89 : vector<1x10x16x4xf32> to vector<10x16x4xf32>
    %91 = vector.shape_cast %88 : vector<10x16x4xf32> to vector<1x10x16x4xf32>
    tpu.vector_store %arg6[%c0_80, %c0_81, %c0_82, %c0_83], %91 {strides = array<i32>} : memref<1x16x16x4xf32, #tpu.memory_space<vmem>>, vector<1x10x16x4xf32>,
    %92 = vector.shape_cast %1 : vector<16x16x4xbf16> to vector<256x4xbf16>
    %c1 = arith.constant 1 : index
    %c0_84 = arith.constant 0 : index
    %c0_85 = arith.constant 0 : index
    %93 = vector.load %arg4[%c1, %c0_84, %c0_85] : memref<16x4x4xbf16, #tpu.memory_space<vmem>>, vector<1x4x4xbf16>
    %94 = vector.shape_cast %93 : vector<1x4x4xbf16> to vector<4x4xbf16>
    %cst_86 = arith.constant dense<0.000000e+00> : vector<256x4xf32>
    %95 = tpu.matmul %92, %94, %cst_86 {dimension_numbers = #tpu.dot_dimension_numbers<[1], [0], [0], [1], [0, 0, 1, 1], [], []>} : vector<256x4xbf16>, vector<4x4xbf16>, vector<256x4xf32> -> vector<256x4xf32>
    %96 = vector.shape_cast %95 : vector<256x4xf32> to vector<16x16x4xf32>
    %c0_87 = arith.constant 0 : index
    %c6_88 = arith.constant 6 : index
    %c0_89 = arith.constant 0 : index
    %c0_90 = arith.constant 0 : index
    %97 = vector.load %arg6[%c0_87, %c6_88, %c0_89, %c0_90] : memref<1x16x16x4xf32, #tpu.memory_space<vmem>>, vector<1x10x16x4xf32>
    %98 = vector.shape_cast %97 : vector<1x10x16x4xf32> to vector<10x16x4xf32>
    %99 = vector.extract_strided_slice %96 {offsets = [0, 0, 0], sizes = [10, 16, 4], strides = [1, 1, 1]} : vector<16x16x4xf32> to vector<10x16x4xf32>
    %100 = arith.addf %98, %99 : vector<10x16x4xf32>
    %c0_91 = arith.constant 0 : index
    %c6_92 = arith.constant 6 : index
    %c0_93 = arith.constant 0 : index
    %c0_94 = arith.constant 0 : index
    %101 = vector.load %arg6[%c0_91, %c6_92, %c0_93, %c0_94] : memref<1x16x16x4xf32, #tpu.memory_space<vmem>>, vector<1x10x16x4xf32>
    %102 = vector.shape_cast %101 : vector<1x10x16x4xf32> to vector<10x16x4xf32>
    %103 = vector.shape_cast %100 : vector<10x16x4xf32> to vector<1x10x16x4xf32>
    tpu.vector_store %arg6[%c0_91, %c6_92, %c0_93, %c0_94], %103 {strides = array<i32>} : memref<1x16x16x4xf32, #tpu.memory_space<vmem>>, vector<1x10x16x4xf32>,
    %c6_95 = arith.constant 6 : index
    %c0_96 = arith.constant 0 : index
    %c0_97 = arith.constant 0 : index
    %104 = vector.load %arg4[%c6_95, %c0_96, %c0_97] : memref<16x4x4xbf16, #tpu.memory_space<vmem>>, vector<1x4x4xbf16>
    %105 = vector.shape_cast %104 : vector<1x4x4xbf16> to vector<4x4xbf16>
    %cst_98 = arith.constant dense<0.000000e+00> : vector<256x4xf32>
    %106 = tpu.matmul %92, %105, %cst_98 {dimension_numbers = #tpu.dot_dimension_numbers<[1], [0], [0], [1], [0, 0, 1, 1], [], []>} : vector<256x4xbf16>, vector<4x4xbf16>, vector<256x4xf32> -> vector<256x4xf32>
    %107 = vector.shape_cast %106 : vector<256x4xf32> to vector<16x16x4xf32>
    %c0_99 = arith.constant 0 : index
    %c0_100 = arith.constant 0 : index
    %c0_101 = arith.constant 0 : index
    %c0_102 = arith.constant 0 : index
    %108 = vector.load %arg6[%c0_99, %c0_100, %c0_101, %c0_102] : memref<1x16x16x4xf32, #tpu.memory_space<vmem>>, vector<1x10x16x4xf32>
    %109 = vector.shape_cast %108 : vector<1x10x16x4xf32> to vector<10x16x4xf32>
    %110 = vector.extract_strided_slice %107 {offsets = [6, 0, 0], sizes = [10, 16, 4], strides = [1, 1, 1]} : vector<16x16x4xf32> to vector<10x16x4xf32>
    %111 = arith.addf %109, %110 : vector<10x16x4xf32>
    %c0_103 = arith.constant 0 : index
    %c0_104 = arith.constant 0 : index
    %c0_105 = arith.constant 0 : index
    %c0_106 = arith.constant 0 : index
    %112 = vector.load %arg6[%c0_103, %c0_104, %c0_105, %c0_106] : memref<1x16x16x4xf32, #tpu.memory_space<vmem>>, vector<1x10x16x4xf32>
    %113 = vector.shape_cast %112 : vector<1x10x16x4xf32> to vector<10x16x4xf32>
    %114 = vector.shape_cast %111 : vector<10x16x4xf32> to vector<1x10x16x4xf32>
    tpu.vector_store %arg6[%c0_103, %c0_104, %c0_105, %c0_106], %114 {strides = array<i32>} : memref<1x16x16x4xf32, #tpu.memory_space<vmem>>, vector<1x10x16x4xf32>,
    %c9 = arith.constant 9 : index
    %c0_107 = arith.constant 0 : index
    %c0_108 = arith.constant 0 : index
    %115 = vector.load %arg4[%c9, %c0_107, %c0_108] : memref<16x4x4xbf16, #tpu.memory_space<vmem>>, vector<1x4x4xbf16>
    %116 = vector.shape_cast %115 : vector<1x4x4xbf16> to vector<4x4xbf16>
    %cst_109 = arith.constant dense<0.000000e+00> : vector<256x4xf32>
    %117 = tpu.matmul %92, %116, %cst_109 {dimension_numbers = #tpu.dot_dimension_numbers<[1], [0], [0], [1], [0, 0, 1, 1], [], []>} : vector<256x4xbf16>, vector<4x4xbf16>, vector<256x4xf32> -> vector<256x4xf32>
    %118 = vector.shape_cast %117 : vector<256x4xf32> to vector<16x16x4xf32>
    %c0_110 = arith.constant 0 : index
    %c12_111 = arith.constant 12 : index
    %c0_112 = arith.constant 0 : index
    %c0_113 = arith.constant 0 : index
    %119 = vector.load %arg6[%c0_110, %c12_111, %c0_112, %c0_113] : memref<1x16x16x4xf32, #tpu.memory_space<vmem>>, vector<1x4x16x4xf32>
    %120 = vector.shape_cast %119 : vector<1x4x16x4xf32> to vector<4x16x4xf32>
    %121 = vector.extract_strided_slice %118 {offsets = [0, 0, 0], sizes = [4, 16, 4], strides = [1, 1, 1]} : vector<16x16x4xf32> to vector<4x16x4xf32>
    %122 = arith.addf %120, %121 : vector<4x16x4xf32>
    %c0_114 = arith.constant 0 : index
    %c12_115 = arith.constant 12 : index
    %c0_116 = arith.constant 0 : index
    %c0_117 = arith.constant 0 : index
    %123 = vector.load %arg6[%c0_114, %c12_115, %c0_116, %c0_117] : memref<1x16x16x4xf32, #tpu.memory_space<vmem>>, vector<1x4x16x4xf32>
    %124 = vector.shape_cast %123 : vector<1x4x16x4xf32> to vector<4x16x4xf32>
    %125 = vector.shape_cast %122 : vector<4x16x4xf32> to vector<1x4x16x4xf32>
    tpu.vector_store %arg6[%c0_114, %c12_115, %c0_116, %c0_117], %125 {strides = array<i32>} : memref<1x16x16x4xf32, #tpu.memory_space<vmem>>, vector<1x4x16x4xf32>,
    %c14 = arith.constant 14 : index
    %c0_118 = arith.constant 0 : index
    %c0_119 = arith.constant 0 : index
    %126 = vector.load %arg4[%c14, %c0_118, %c0_119] : memref<16x4x4xbf16, #tpu.memory_space<vmem>>, vector<1x4x4xbf16>
    %127 = vector.shape_cast %126 : vector<1x4x4xbf16> to vector<4x4xbf16>
    %cst_120 = arith.constant dense<0.000000e+00> : vector<256x4xf32>
    %128 = tpu.matmul %92, %127, %cst_120 {dimension_numbers = #tpu.dot_dimension_numbers<[1], [0], [0], [1], [0, 0, 1, 1], [], []>} : vector<256x4xbf16>, vector<4x4xbf16>, vector<256x4xf32> -> vector<256x4xf32>
    %129 = vector.shape_cast %128 : vector<256x4xf32> to vector<16x16x4xf32>
    %c0_121 = arith.constant 0 : index
    %c0_122 = arith.constant 0 : index
    %c0_123 = arith.constant 0 : index
    %c0_124 = arith.constant 0 : index
    %130 = vector.load %arg6[%c0_121, %c0_122, %c0_123, %c0_124] : memref<1x16x16x4xf32, #tpu.memory_space<vmem>>, vector<1x4x16x4xf32>
    %131 = vector.shape_cast %130 : vector<1x4x16x4xf32> to vector<4x16x4xf32>
    %132 = vector.extract_strided_slice %129 {offsets = [12, 0, 0], sizes = [4, 16, 4], strides = [1, 1, 1]} : vector<16x16x4xf32> to vector<4x16x4xf32>
    %133 = arith.addf %131, %132 : vector<4x16x4xf32>
    %c0_125 = arith.constant 0 : index
    %c0_126 = arith.constant 0 : index
    %c0_127 = arith.constant 0 : index
    %c0_128 = arith.constant 0 : index
    %134 = vector.load %arg6[%c0_125, %c0_126, %c0_127, %c0_128] : memref<1x16x16x4xf32, #tpu.memory_space<vmem>>, vector<1x4x16x4xf32>
    %135 = vector.shape_cast %134 : vector<1x4x16x4xf32> to vector<4x16x4xf32>
    %136 = vector.shape_cast %133 : vector<4x16x4xf32> to vector<1x4x16x4xf32>
    tpu.vector_store %arg6[%c0_125, %c0_126, %c0_127, %c0_128], %136 {strides = array<i32>} : memref<1x16x16x4xf32, #tpu.memory_space<vmem>>, vector<1x4x16x4xf32>,
    %137 = vector.extract_strided_slice %1 {offsets = [0, 6, 0], sizes = [16, 10, 4], strides = [1, 1, 1]} : vector<16x16x4xbf16> to vector<16x10x4xbf16>
    %cst_129 = arith.constant 0.000000e+00 : bf16
    %138 = vector.broadcast %cst_129 : bf16 to vector<16x6x4xbf16>
    %139 = tpu.concatenate %137, %138 in 1 : vector<16x10x4xbf16>, vector<16x6x4xbf16> -> vector<16x16x4xbf16>
    %140 = vector.shape_cast %139 : vector<16x16x4xbf16> to vector<256x4xbf16>
    %c2 = arith.constant 2 : index
    %c0_130 = arith.constant 0 : index
    %c0_131 = arith.constant 0 : index
    %141 = vector.load %arg4[%c2, %c0_130, %c0_131] : memref<16x4x4xbf16, #tpu.memory_space<vmem>>, vector<1x4x4xbf16>
    %142 = vector.shape_cast %141 : vector<1x4x4xbf16> to vector<4x4xbf16>
    %cst_132 = arith.constant dense<0.000000e+00> : vector<256x4xf32>
    %143 = tpu.matmul %140, %142, %cst_132 {dimension_numbers = #tpu.dot_dimension_numbers<[1], [0], [0], [1], [0, 0, 1, 1], [], []>} : vector<256x4xbf16>, vector<4x4xbf16>, vector<256x4xf32> -> vector<256x4xf32>
    %144 = vector.shape_cast %143 : vector<256x4xf32> to vector<16x16x4xf32>
    %c0_133 = arith.constant 0 : index
    %c6_134 = arith.constant 6 : index
    %c0_135 = arith.constant 0 : index
    %c0_136 = arith.constant 0 : index
    %145 = vector.load %arg6[%c0_133, %c6_134, %c0_135, %c0_136] : memref<1x16x16x4xf32, #tpu.memory_space<vmem>>, vector<1x10x16x4xf32>
    %146 = vector.shape_cast %145 : vector<1x10x16x4xf32> to vector<10x16x4xf32>
    %147 = vector.extract_strided_slice %144 {offsets = [0, 0, 0], sizes = [10, 16, 4], strides = [1, 1, 1]} : vector<16x16x4xf32> to vector<10x16x4xf32>
    %148 = arith.addf %146, %147 : vector<10x16x4xf32>
    %c0_137 = arith.constant 0 : index
    %c6_138 = arith.constant 6 : index
    %c0_139 = arith.constant 0 : index
    %c0_140 = arith.constant 0 : index
    %149 = vector.load %arg6[%c0_137, %c6_138, %c0_139, %c0_140] : memref<1x16x16x4xf32, #tpu.memory_space<vmem>>, vector<1x10x16x4xf32>
    %150 = vector.shape_cast %149 : vector<1x10x16x4xf32> to vector<10x16x4xf32>
    %151 = vector.shape_cast %148 : vector<10x16x4xf32> to vector<1x10x16x4xf32>
    tpu.vector_store %arg6[%c0_137, %c6_138, %c0_139, %c0_140], %151 {strides = array<i32>} : memref<1x16x16x4xf32, #tpu.memory_space<vmem>>, vector<1x10x16x4xf32>,
    %c4 = arith.constant 4 : index
    %c0_141 = arith.constant 0 : index
    %c0_142 = arith.constant 0 : index
    %152 = vector.load %arg4[%c4, %c0_141, %c0_142] : memref<16x4x4xbf16, #tpu.memory_space<vmem>>, vector<1x4x4xbf16>
    %153 = vector.shape_cast %152 : vector<1x4x4xbf16> to vector<4x4xbf16>
    %cst_143 = arith.constant dense<0.000000e+00> : vector<256x4xf32>
    %154 = tpu.matmul %140, %153, %cst_143 {dimension_numbers = #tpu.dot_dimension_numbers<[1], [0], [0], [1], [0, 0, 1, 1], [], []>} : vector<256x4xbf16>, vector<4x4xbf16>, vector<256x4xf32> -> vector<256x4xf32>
    %155 = vector.shape_cast %154 : vector<256x4xf32> to vector<16x16x4xf32>
    %c0_144 = arith.constant 0 : index
    %c0_145 = arith.constant 0 : index
    %c0_146 = arith.constant 0 : index
    %c0_147 = arith.constant 0 : index
    %156 = vector.load %arg6[%c0_144, %c0_145, %c0_146, %c0_147] : memref<1x16x16x4xf32, #tpu.memory_space<vmem>>, vector<1x16x16x4xf32>
    %157 = vector.shape_cast %156 : vector<1x16x16x4xf32> to vector<16x16x4xf32>
    %158 = arith.addf %157, %155 : vector<16x16x4xf32>
    %c0_148 = arith.constant 0 : index
    %c0_149 = arith.constant 0 : index
    %c0_150 = arith.constant 0 : index
    %c0_151 = arith.constant 0 : index
    %159 = vector.load %arg6[%c0_148, %c0_149, %c0_150, %c0_151] : memref<1x16x16x4xf32, #tpu.memory_space<vmem>>, vector<1x16x16x4xf32>
    %160 = vector.shape_cast %159 : vector<1x16x16x4xf32> to vector<16x16x4xf32>
    %161 = vector.shape_cast %158 : vector<16x16x4xf32> to vector<1x16x16x4xf32>
    tpu.vector_store %arg6[%c0_148, %c0_149, %c0_150, %c0_151], %161 {strides = array<i32>} : memref<1x16x16x4xf32, #tpu.memory_space<vmem>>, vector<1x16x16x4xf32>,
    %c7 = arith.constant 7 : index
    %c0_152 = arith.constant 0 : index
    %c0_153 = arith.constant 0 : index
    %162 = vector.load %arg4[%c7, %c0_152, %c0_153] : memref<16x4x4xbf16, #tpu.memory_space<vmem>>, vector<1x4x4xbf16>
    %163 = vector.shape_cast %162 : vector<1x4x4xbf16> to vector<4x4xbf16>
    %cst_154 = arith.constant dense<0.000000e+00> : vector<256x4xf32>
    %164 = tpu.matmul %140, %163, %cst_154 {dimension_numbers = #tpu.dot_dimension_numbers<[1], [0], [0], [1], [0, 0, 1, 1], [], []>} : vector<256x4xbf16>, vector<4x4xbf16>, vector<256x4xf32> -> vector<256x4xf32>
    %165 = vector.shape_cast %164 : vector<256x4xf32> to vector<16x16x4xf32>
    %c0_155 = arith.constant 0 : index
    %c0_156 = arith.constant 0 : index
    %c0_157 = arith.constant 0 : index
    %c0_158 = arith.constant 0 : index
    %166 = vector.load %arg6[%c0_155, %c0_156, %c0_157, %c0_158] : memref<1x16x16x4xf32, #tpu.memory_space<vmem>>, vector<1x10x16x4xf32>
    %167 = vector.shape_cast %166 : vector<1x10x16x4xf32> to vector<10x16x4xf32>
    %168 = vector.extract_strided_slice %165 {offsets = [6, 0, 0], sizes = [10, 16, 4], strides = [1, 1, 1]} : vector<16x16x4xf32> to vector<10x16x4xf32>
    %169 = arith.addf %167, %168 : vector<10x16x4xf32>
    %c0_159 = arith.constant 0 : index
    %c0_160 = arith.constant 0 : index
    %c0_161 = arith.constant 0 : index
    %c0_162 = arith.constant 0 : index
    %170 = vector.load %arg6[%c0_159, %c0_160, %c0_161, %c0_162] : memref<1x16x16x4xf32, #tpu.memory_space<vmem>>, vector<1x10x16x4xf32>
    %171 = vector.shape_cast %170 : vector<1x10x16x4xf32> to vector<10x16x4xf32>
    %172 = vector.shape_cast %169 : vector<10x16x4xf32> to vector<1x10x16x4xf32>
    tpu.vector_store %arg6[%c0_159, %c0_160, %c0_161, %c0_162], %172 {strides = array<i32>} : memref<1x16x16x4xf32, #tpu.memory_space<vmem>>, vector<1x10x16x4xf32>,
    %173 = vector.extract_strided_slice %1 {offsets = [0, 12, 0], sizes = [16, 4, 4], strides = [1, 1, 1]} : vector<16x16x4xbf16> to vector<16x4x4xbf16>
    %cst_163 = arith.constant 0.000000e+00 : bf16
    %174 = vector.broadcast %cst_163 : bf16 to vector<16x12x4xbf16>
    %175 = tpu.concatenate %173, %174 in 1 : vector<16x4x4xbf16>, vector<16x12x4xbf16> -> vector<16x16x4xbf16>
    %176 = vector.shape_cast %175 : vector<16x16x4xbf16> to vector<256x4xbf16>
    %c10 = arith.constant 10 : index
    %c0_164 = arith.constant 0 : index
    %c0_165 = arith.constant 0 : index
    %177 = vector.load %arg4[%c10, %c0_164, %c0_165] : memref<16x4x4xbf16, #tpu.memory_space<vmem>>, vector<1x4x4xbf16>
    %178 = vector.shape_cast %177 : vector<1x4x4xbf16> to vector<4x4xbf16>
    %cst_166 = arith.constant dense<0.000000e+00> : vector<256x4xf32>
    %179 = tpu.matmul %176, %178, %cst_166 {dimension_numbers = #tpu.dot_dimension_numbers<[1], [0], [0], [1], [0, 0, 1, 1], [], []>} : vector<256x4xbf16>, vector<4x4xbf16>, vector<256x4xf32> -> vector<256x4xf32>
    %180 = vector.shape_cast %179 : vector<256x4xf32> to vector<16x16x4xf32>
    %c0_167 = arith.constant 0 : index
    %c12_168 = arith.constant 12 : index
    %c0_169 = arith.constant 0 : index
    %c0_170 = arith.constant 0 : index
    %181 = vector.load %arg6[%c0_167, %c12_168, %c0_169, %c0_170] : memref<1x16x16x4xf32, #tpu.memory_space<vmem>>, vector<1x4x16x4xf32>
    %182 = vector.shape_cast %181 : vector<1x4x16x4xf32> to vector<4x16x4xf32>
    %183 = vector.extract_strided_slice %180 {offsets = [0, 0, 0], sizes = [4, 16, 4], strides = [1, 1, 1]} : vector<16x16x4xf32> to vector<4x16x4xf32>
    %184 = arith.addf %182, %183 : vector<4x16x4xf32>
    %c0_171 = arith.constant 0 : index
    %c12_172 = arith.constant 12 : index
    %c0_173 = arith.constant 0 : index
    %c0_174 = arith.constant 0 : index
    %185 = vector.load %arg6[%c0_171, %c12_172, %c0_173, %c0_174] : memref<1x16x16x4xf32, #tpu.memory_space<vmem>>, vector<1x4x16x4xf32>
    %186 = vector.shape_cast %185 : vector<1x4x16x4xf32> to vector<4x16x4xf32>
    %187 = vector.shape_cast %184 : vector<4x16x4xf32> to vector<1x4x16x4xf32>
    tpu.vector_store %arg6[%c0_171, %c12_172, %c0_173, %c0_174], %187 {strides = array<i32>} : memref<1x16x16x4xf32, #tpu.memory_space<vmem>>, vector<1x4x16x4xf32>,
    %c12_175 = arith.constant 12 : index
    %c0_176 = arith.constant 0 : index
    %c0_177 = arith.constant 0 : index
    %188 = vector.load %arg4[%c12_175, %c0_176, %c0_177] : memref<16x4x4xbf16, #tpu.memory_space<vmem>>, vector<1x4x4xbf16>
    %189 = vector.shape_cast %188 : vector<1x4x4xbf16> to vector<4x4xbf16>
    %cst_178 = arith.constant dense<0.000000e+00> : vector<256x4xf32>
    %190 = tpu.matmul %176, %189, %cst_178 {dimension_numbers = #tpu.dot_dimension_numbers<[1], [0], [0], [1], [0, 0, 1, 1], [], []>} : vector<256x4xbf16>, vector<4x4xbf16>, vector<256x4xf32> -> vector<256x4xf32>
    %191 = vector.shape_cast %190 : vector<256x4xf32> to vector<16x16x4xf32>
    %c0_179 = arith.constant 0 : index
    %c0_180 = arith.constant 0 : index
    %c0_181 = arith.constant 0 : index
    %c0_182 = arith.constant 0 : index
    %192 = vector.load %arg6[%c0_179, %c0_180, %c0_181, %c0_182] : memref<1x16x16x4xf32, #tpu.memory_space<vmem>>, vector<1x16x16x4xf32>
    %193 = vector.shape_cast %192 : vector<1x16x16x4xf32> to vector<16x16x4xf32>
    %194 = arith.addf %193, %191 : vector<16x16x4xf32>
    %c0_183 = arith.constant 0 : index
    %c0_184 = arith.constant 0 : index
    %c0_185 = arith.constant 0 : index
    %c0_186 = arith.constant 0 : index
    %195 = vector.load %arg6[%c0_183, %c0_184, %c0_185, %c0_186] : memref<1x16x16x4xf32, #tpu.memory_space<vmem>>, vector<1x16x16x4xf32>
    %196 = vector.shape_cast %195 : vector<1x16x16x4xf32> to vector<16x16x4xf32>
    %197 = vector.shape_cast %194 : vector<16x16x4xf32> to vector<1x16x16x4xf32>
    tpu.vector_store %arg6[%c0_183, %c0_184, %c0_185, %c0_186], %197 {strides = array<i32>} : memref<1x16x16x4xf32, #tpu.memory_space<vmem>>, vector<1x16x16x4xf32>,
    %c15 = arith.constant 15 : index
    %c0_187 = arith.constant 0 : index
    %c0_188 = arith.constant 0 : index
    %198 = vector.load %arg4[%c15, %c0_187, %c0_188] : memref<16x4x4xbf16, #tpu.memory_space<vmem>>, vector<1x4x4xbf16>
    %199 = vector.shape_cast %198 : vector<1x4x4xbf16> to vector<4x4xbf16>
    %cst_189 = arith.constant dense<0.000000e+00> : vector<256x4xf32>
    %200 = tpu.matmul %176, %199, %cst_189 {dimension_numbers = #tpu.dot_dimension_numbers<[1], [0], [0], [1], [0, 0, 1, 1], [], []>} : vector<256x4xbf16>, vector<4x4xbf16>, vector<256x4xf32> -> vector<256x4xf32>
    %201 = vector.shape_cast %200 : vector<256x4xf32> to vector<16x16x4xf32>
    %c0_190 = arith.constant 0 : index
    %c0_191 = arith.constant 0 : index
    %c0_192 = arith.constant 0 : index
    %c0_193 = arith.constant 0 : index
    %202 = vector.load %arg6[%c0_190, %c0_191, %c0_192, %c0_193] : memref<1x16x16x4xf32, #tpu.memory_space<vmem>>, vector<1x4x16x4xf32>
    %203 = vector.shape_cast %202 : vector<1x4x16x4xf32> to vector<4x16x4xf32>
    %204 = vector.extract_strided_slice %201 {offsets = [12, 0, 0], sizes = [4, 16, 4], strides = [1, 1, 1]} : vector<16x16x4xf32> to vector<4x16x4xf32>
    %205 = arith.addf %203, %204 : vector<4x16x4xf32>
    %c0_194 = arith.constant 0 : index
    %c0_195 = arith.constant 0 : index
    %c0_196 = arith.constant 0 : index
    %c0_197 = arith.constant 0 : index
    %206 = vector.load %arg6[%c0_194, %c0_195, %c0_196, %c0_197] : memref<1x16x16x4xf32, #tpu.memory_space<vmem>>, vector<1x4x16x4xf32>
    %207 = vector.shape_cast %206 : vector<1x4x16x4xf32> to vector<4x16x4xf32>
    %208 = vector.shape_cast %205 : vector<4x16x4xf32> to vector<1x4x16x4xf32>
    tpu.vector_store %arg6[%c0_194, %c0_195, %c0_196, %c0_197], %208 {strides = array<i32>} : memref<1x16x16x4xf32, #tpu.memory_space<vmem>>, vector<1x4x16x4xf32>,
    return
  }
  func.func @transform_0(%arg0: i32) -> (i32, i32, i32, i32) {
    %c0_i32 = arith.constant 0 : i32
    %c0_i32_0 = arith.constant 0 : i32
    %c0_i32_1 = arith.constant 0 : i32
    %c0_i32_2 = arith.constant 0 : i32
    return %arg0, %c0_i32, %c0_i32_0, %c0_i32_1 : i32, i32, i32, i32
  }
  func.func @transform_1(%arg0: i32) -> (i32, i32) {
    %c0_i32 = arith.constant 0 : i32
    %c0_i32_0 = arith.constant 0 : i32
    %c0_i32_1 = arith.constant 0 : i32
    return %c0_i32, %c0_i32_0 : i32, i32
  }
  func.func @transform_2(%arg0: i32) -> (i32, i32) {
    %c0_i32 = arith.constant 0 : i32
    %c0_i32_0 = arith.constant 0 : i32
    %c0_i32_1 = arith.constant 0 : i32
    return %c0_i32, %c0_i32_0 : i32, i32
  }
  func.func @transform_3(%arg0: i32) -> (i32, i32, i32) {
    %c0_i32 = arith.constant 0 : i32
    %c0_i32_0 = arith.constant 0 : i32
    %c0_i32_1 = arith.constant 0 : i32
    %c0_i32_2 = arith.constant 0 : i32
    return %c0_i32, %c0_i32_0, %c0_i32_1 : i32, i32, i32
  }
  func.func @transform_4(%arg0: i32) -> (i32, i32) {
    %c0_i32 = arith.constant 0 : i32
    %c0_i32_0 = arith.constant 0 : i32
    %c0_i32_1 = arith.constant 0 : i32
    return %c0_i32, %c0_i32_0 : i32, i32
  }
  func.func @transform_5(%arg0: i32) -> (i32, i32, i32, i32) {
    %c0_i32 = arith.constant 0 : i32
    %c0_i32_0 = arith.constant 0 : i32
    %c0_i32_1 = arith.constant 0 : i32
    %c0_i32_2 = arith.constant 0 : i32
    return %arg0, %c0_i32, %c0_i32_0, %c0_i32_1 : i32, i32, i32, i32
  }
}

</mosaic_0001>

<llo_original>
// kernel: aspp_forward.1
$region0: #{aspp_forward.1}
  #allocation0 [shape = 'u32[]', space=smem, size = 0x4, offset = 0x4, fixed_abs, tag = 'smem constant byte address 0x4 - core index']
  #allocation1 [shape = 'u32[144,128]{1,0:T(1,128)}', space=vmem, size = 0x12000, scoped, tag = 'internal scratch']
  %s0 = inlined_call_operand.vmem [shape: bf16[2,16,16,4], index: 0, kind: input, shape index: {}]
  %s1 = inlined_call_operand.vmem [shape: bf16[4,4], index: 1, kind: input, shape index: {}]
  %s2 = inlined_call_operand.vmem [shape: bf16[4,4], index: 2, kind: input, shape index: {}]
  %s3 = inlined_call_operand.vmem [shape: bf16[16,4,4], index: 3, kind: input, shape index: {}]
  %s4 = inlined_call_operand.vmem [shape: f32[1,4], index: 4, kind: input, shape index: {}]
  %s5 = inlined_call_operand.vmem [shape: f32[2,16,16,4], index: 5, kind: output, shape index: {}]
  %s6 = sld [smem:[#allocation0]]
  $region53: #{aspp_forward.1} parent=0
    _
  %s8 = ssub.s32 1, %s6
  %s9 = scalar_select 0, %s8, %s6
  loop: start=0, step=1, limit=4
  $region2: #{aspp_forward.1} parent=0 // loop_pre_header
    _
  $region3: #{aspp_forward.1} parent=0 // loop_header
    %s11 = sphi 0, %s15
    %p12 = scmp.ge.s32.totalorder %s11, 4
    %s21 = sphi 0, %s23
    %s24 = sphi 0, %s21
    %s25 = sphi 0, %s24
    %s41 = sphi 0, %s25
    %s45 = sphi 0, %s45
    %s47 = sphi 0, %s45
    %s48 = sphi 0, %s47
    %s62 = sphi 0, %s48
    %s66 = sphi 0, %s66
    %s68 = sphi 0, %s66
    %s69 = sphi 0, %s68
    %s83 = sphi 0, %s69
    %s87 = sphi 0, %s87
    %s89 = sphi 0, %s87
    %s90 = sphi 0, %s89
    %s104 = sphi 0, %s90
    %s108 = sphi 0, %s108
    %s110 = sphi 0, %s108
    %s111 = sphi 0, %s110
    %s125 = sphi 0, %s111
    %s131 = sphi 0, %s133
    %s134 = sphi 0, %s131
    %s135 = sphi 0, %s134
    %s151 = sphi 0, %s135
  $region4: #{aspp_forward.1} parent=0 // loop_header_branch
    %14 = sbr.rel (%p12) target = $region8
  $region5: #{aspp_forward.1} parent=0 // loop_body
    %s16 = ssub.s32 %s11, 1
    %s17 = ssub.s32 %s11, 2
    %s18 = sadd.s32 %s11, 1
    %s19 = ssub.s32 %s11, %s18
    %p20 = scmp.eq.s32.totalorder %s19, 0
    %s22 = sadd.s32 %s21, 1
    %s23 = scalar_select %p20, %s21, %s22
    %p26 = pneg %p20
    %p27 = scmp.eq.s32.totalorder %s11, 1
    %p28 = por %p26, %p27
    %p29 = scmp.ne.s32.totalorder %s21, %s24
    %p30 = scmp.eq.s32.totalorder %s11, 0
    %p31 = por %p29, %p30
    %p32 = scmp.ne.s32.totalorder %s21, %s24
    %p33 = scmp.eq.s32.totalorder %s16, 1
    %p34 = por %p32, %p33
    %p35 = scmp.ne.s32.totalorder %s24, %s25
    %p36 = scmp.eq.s32.totalorder %s16, 0
    %p37 = por %p35, %p36
    %p38 = scmp.ne.s32.totalorder %s24, %s25
    %p39 = scmp.eq.s32.totalorder %s17, 1
    %p40 = por %p38, %p39
    %p42 = scmp.ne.s32.totalorder %s25, %s41
    %p43 = scmp.eq.s32.totalorder %s17, 0
    %p44 = por %p42, %p43
    %s46 = sadd.s32 %s45, 1
    %p49 = scmp.eq.s32.totalorder %s11, 1
    %p50 = scmp.ne.s32.totalorder %s45, %s47
    %p51 = scmp.eq.s32.totalorder %s11, 0
    %p52 = por %p50, %p51
    %p53 = scmp.ne.s32.totalorder %s45, %s47
    %p54 = scmp.eq.s32.totalorder %s16, 1
    %p55 = por %p53, %p54
    %p56 = scmp.ne.s32.totalorder %s47, %s48
    %p57 = scmp.eq.s32.totalorder %s16, 0
    %p58 = por %p56, %p57
    %p59 = scmp.ne.s32.totalorder %s47, %s48
    %p60 = scmp.eq.s32.totalorder %s17, 1
    %p61 = por %p59, %p60
    %p63 = scmp.ne.s32.totalorder %s48, %s62
    %p64 = scmp.eq.s32.totalorder %s17, 0
    %p65 = por %p63, %p64
    %s67 = sadd.s32 %s66, 1
    %p70 = scmp.eq.s32.totalorder %s11, 1
    %p71 = scmp.ne.s32.totalorder %s66, %s68
    %p72 = scmp.eq.s32.totalorder %s11, 0
    %p73 = por %p71, %p72
    %p74 = scmp.ne.s32.totalorder %s66, %s68
    %p75 = scmp.eq.s32.totalorder %s16, 1
    %p76 = por %p74, %p75
    %p77 = scmp.ne.s32.totalorder %s68, %s69
    %p78 = scmp.eq.s32.totalorder %s16, 0
    %p79 = por %p77, %p78
    %p80 = scmp.ne.s32.totalorder %s68, %s69
    %p81 = scmp.eq.s32.totalorder %s17, 1
    %p82 = por %p80, %p81
    %p84 = scmp.ne.s32.totalorder %s69, %s83
    %p85 = scmp.eq.s32.totalorder %s17, 0
    %p86 = por %p84, %p85
    %s88 = sadd.s32 %s87, 1
    %p91 = scmp.eq.s32.totalorder %s11, 1
    %p92 = scmp.ne.s32.totalorder %s87, %s89
    %p93 = scmp.eq.s32.totalorder %s11, 0
    %p94 = por %p92, %p93
    %p95 = scmp.ne.s32.totalorder %s87, %s89
    %p96 = scmp.eq.s32.totalorder %s16, 1
    %p97 = por %p95, %p96
    %p98 = scmp.ne.s32.totalorder %s89, %s90
    %p99 = scmp.eq.s32.totalorder %s16, 0
    %p100 = por %p98, %p99
    %p101 = scmp.ne.s32.totalorder %s89, %s90
    %p102 = scmp.eq.s32.totalorder %s17, 1
    %p103 = por %p101, %p102
    %p105 = scmp.ne.s32.totalorder %s90, %s104
    %p106 = scmp.eq.s32.totalorder %s17, 0
    %p107 = por %p105, %p106
    %s109 = sadd.s32 %s108, 1
    %p112 = scmp.eq.s32.totalorder %s11, 1
    %p113 = scmp.ne.s32.totalorder %s108, %s110
    %p114 = scmp.eq.s32.totalorder %s11, 0
    %p115 = por %p113, %p114
    %p116 = scmp.ne.s32.totalorder %s108, %s110
    %p117 = scmp.eq.s32.totalorder %s16, 1
    %p118 = por %p116, %p117
    %p119 = scmp.ne.s32.totalorder %s110, %s111
    %p120 = scmp.eq.s32.totalorder %s16, 0
    %p121 = por %p119, %p120
    %p122 = scmp.ne.s32.totalorder %s110, %s111
    %p123 = scmp.eq.s32.totalorder %s17, 1
    %p124 = por %p122, %p123
    %p126 = scmp.ne.s32.totalorder %s111, %s125
    %p127 = scmp.eq.s32.totalorder %s17, 0
    %p128 = por %p126, %p127
    %s129 = ssub.s32 %s11, %s18
    %p130 = scmp.eq.s32.totalorder %s129, 0
    %s132 = sadd.s32 %s131, 1
    %s133 = scalar_select %p130, %s131, %s132
    %p136 = pneg %p130
    %p137 = scmp.eq.s32.totalorder %s11, 1
    %p138 = por %p136, %p137
    %p139 = scmp.ne.s32.totalorder %s131, %s134
    %p140 = scmp.eq.s32.totalorder %s11, 0
    %p141 = por %p139, %p140
    %p142 = scmp.ne.s32.totalorder %s131, %s134
    %p143 = scmp.eq.s32.totalorder %s16, 1
    %p144 = por %p142, %p143
    %p145 = scmp.ne.s32.totalorder %s134, %s135
    %p146 = scmp.eq.s32.totalorder %s16, 0
    %p147 = por %p145, %p146
    %p148 = scmp.ne.s32.totalorder %s134, %s135
    %p149 = scmp.eq.s32.totalorder %s17, 1
    %p150 = por %p148, %p149
    %p152 = scmp.ne.s32.totalorder %s135, %s151
    %p153 = scmp.eq.s32.totalorder %s17, 0
    %p154 = por %p152, %p153
    %p155 = scmp.le.s32.totalorder 1, %s11
    %p156 = scmp.lt.s32.totalorder %s11, 3
    %p157 = pnand %p155, %p156
    %p158 = pneg %p157
    // Predicated region
    $region9: #{aspp_forward.1} parent=5 // pred_check
      _
    $region10: #{aspp_forward.1} parent=5 // pred_check_branch
      %160 = sbr.rel (%p157) target = $region12
    $region11: #{aspp_forward.1} parent=5 // pred_region
      %s161 = ssub.s32 %s11, 1
      // Predicated region
      $region13: #{aspp_forward.1} parent=11 // pred_check
        %p162 = pneg %p58
      $region14: #{aspp_forward.1} parent=11 // pred_check_branch
        %164 = sbr.rel (%p162) target = $region16
      $region15: #{aspp_forward.1} parent=11 // pred_region
        _
      $region16: #{aspp_forward.1} parent=11 // pred_fallthru
        _
      // Predicated region
      $region17: #{aspp_forward.1} parent=11 // pred_check
        %p165 = pneg %p79
      $region18: #{aspp_forward.1} parent=11 // pred_check_branch
        %167 = sbr.rel (%p165) target = $region20
      $region19: #{aspp_forward.1} parent=11 // pred_region
        _
      $region20: #{aspp_forward.1} parent=11 // pred_fallthru
        _
      // Predicated region
      $region21: #{aspp_forward.1} parent=11 // pred_check
        %p168 = pneg %p100
      $region22: #{aspp_forward.1} parent=11 // pred_check_branch
        %170 = sbr.rel (%p168) target = $region24
      $region23: #{aspp_forward.1} parent=11 // pred_region
        _
      $region24: #{aspp_forward.1} parent=11 // pred_fallthru
        _
      // Predicated region
      $region25: #{aspp_forward.1} parent=11 // pred_check
        %p171 = pneg %p121
      $region26: #{aspp_forward.1} parent=11 // pred_check_branch
        %173 = sbr.rel (%p171) target = $region28
      $region27: #{aspp_forward.1} parent=11 // pred_region
        _
      $region28: #{aspp_forward.1} parent=11 // pred_fallthru
        _
    $region12: #{aspp_forward.1} parent=5 // pred_fallthru
      _
    %p174 = scmp.lt.s32.totalorder %s11, 2
    // Predicated region
    $region29: #{aspp_forward.1} parent=5 // pred_check
      %p175 = pneg %p174
    $region30: #{aspp_forward.1} parent=5 // pred_check_branch
      %177 = sbr.rel (%p175) target = $region32
    $region31: #{aspp_forward.1} parent=5 // pred_region
      // Predicated region
      $region33: #{aspp_forward.1} parent=31 // pred_check
        %p178 = pneg %p31
      $region34: #{aspp_forward.1} parent=31 // pred_check_branch
        %180 = sbr.rel (%p178) target = $region36
      $region35: #{aspp_forward.1} parent=31 // pred_region
        %p181 = scmp.lt.s32.totalorder %s11, 1
        %s182 = scalar_select %p181, %s11, 1
        %s183 = smul.addr %s182, 32
        %s184 = smul.addr %s183, 4
        %s185 = scalar_lea.vmem %s0, %s184
      $region36: #{aspp_forward.1} parent=31 // pred_fallthru
        _
    $region32: #{aspp_forward.1} parent=5 // pred_fallthru
      _
    %p186 = scmp.le.s32.totalorder 1, %s11
    %p187 = scmp.lt.s32.totalorder %s11, 3
    %p188 = pnand %p186, %p187
    %p189 = pneg %p188
    // Predicated region
    $region37: #{aspp_forward.1} parent=5 // pred_check
      _
    $region38: #{aspp_forward.1} parent=5 // pred_check_branch
      %191 = sbr.rel (%p188) target = $region40
    $region39: #{aspp_forward.1} parent=5 // pred_region
      %s192 = ssub.s32 %s11, 1
      %p193 = scmp.lt.s32.totalorder %s16, 1
      %s194 = scalar_select %p193, %s16, 1
      %s195 = smul.addr %s194, 32
      %s196 = smul.addr %s195, 4
      %s197 = scalar_lea.vmem %s0, %s196
      %p198 = pneg %p37
      %p199 = pneg %p34
      %p200 = pneg %p58
      %p201 = pneg %p55
      %p202 = pneg %p79
      %p203 = pneg %p76
      %p204 = pneg %p100
      %p205 = pneg %p97
      %p206 = pneg %p121
      %p207 = pneg %p118
      %p208 = pneg %p147
      %p209 = pneg %p144
      %p210 = scmp.lt.s32.totalorder %s16, 1
      %s211 = scalar_select %p210, %s16, 1
      %s212 = smul.addr %s211, 32
      %s213 = smul.addr %s212, 8
      %s214 = scalar_lea.vmem %s5, %s213
      %p215 = scmp.lt.s32.totalorder %s16, 1
      %s216 = scalar_select %p215, %s16, 1
      %s217 = smul.addr %s216, 32
      %s218 = smul.addr %s217, 4
      %s219 = scalar_lea.vmem %s0, %s218
      %p220 = scmp.lt.s32.totalorder %s16, 1
      %s221 = scalar_select %p220, %s16, 1
      %s222 = smul.addr %s221, 32
      %s223 = smul.addr %s222, 8
      %s224 = scalar_lea.vmem %s5, %s223
      %v227 = vld [vmem:[%s219] sm:$0xf]
      %v228 = vld [vmem:[%s219 + $0x4] sm:$0xf]
      %v229 = vld [vmem:[%s219 + $0x8] sm:$0xf]
      %v230 = vld [vmem:[%s219 + $0xc] sm:$0xf]
      %v231 = vld [vmem:[%s219 + $0x10] sm:$0xf]
      %v232 = vld [vmem:[%s219 + $0x14] sm:$0xf]
      %v233 = vld [vmem:[%s219 + $0x18] sm:$0xf]
      %v234 = vld [vmem:[%s219 + $0x1c] sm:$0xf]
      %v235 = vld [vmem:[%s219 + $0x20] sm:$0xf]
      %v236 = vld [vmem:[%s219 + $0x24] sm:$0xf]
      %v237 = vld [vmem:[%s219 + $0x28] sm:$0xf]
      %v238 = vld [vmem:[%s219 + $0x2c] sm:$0xf]
      %v239 = vld [vmem:[%s219 + $0x30] sm:$0xf]
      %v240 = vld [vmem:[%s219 + $0x34] sm:$0xf]
      %v241 = vld [vmem:[%s219 + $0x38] sm:$0xf]
      %v242 = vld [vmem:[%s219 + $0x3c] sm:$0xf]
      %v243 = vld [vmem:[%s219 + $0x40] sm:$0xf]
      %v244 = vld [vmem:[%s219 + $0x44] sm:$0xf]
      %v245 = vld [vmem:[%s219 + $0x48] sm:$0xf]
      %v246 = vld [vmem:[%s219 + $0x4c] sm:$0xf]
      %v247 = vld [vmem:[%s219 + $0x50] sm:$0xf]
      %v248 = vld [vmem:[%s219 + $0x54] sm:$0xf]
      %v249 = vld [vmem:[%s219 + $0x58] sm:$0xf]
      %v250 = vld [vmem:[%s219 + $0x5c] sm:$0xf]
      %v251 = vld [vmem:[%s219 + $0x60] sm:$0xf]
      %v252 = vld [vmem:[%s219 + $0x64] sm:$0xf]
      %v253 = vld [vmem:[%s219 + $0x68] sm:$0xf]
      %v254 = vld [vmem:[%s219 + $0x6c] sm:$0xf]
      %v255 = vld [vmem:[%s219 + $0x70] sm:$0xf]
      %v256 = vld [vmem:[%s219 + $0x74] sm:$0xf]
      %v257 = vld [vmem:[%s219 + $0x78] sm:$0xf]
      %v258 = vld [vmem:[%s219 + $0x7c] sm:$0xf]
      %v291 = vunpack.c.l.b16 %v227
      %v292 = vunpack.c.l.b16 %v228
      %v293 = vunpack.c.l.b16 %v229
      %v294 = vunpack.c.l.b16 %v230
      %v295 = vunpack.c.l.b16 %v231
      %v296 = vunpack.c.l.b16 %v232
      %v297 = vunpack.c.l.b16 %v233
      %v298 = vunpack.c.l.b16 %v234
      %v299 = vunpack.c.l.b16 %v235
      %v300 = vunpack.c.l.b16 %v236
      %v301 = vunpack.c.l.b16 %v237
      %v302 = vunpack.c.l.b16 %v238
      %v303 = vunpack.c.l.b16 %v239
      %v304 = vunpack.c.l.b16 %v240
      %v305 = vunpack.c.l.b16 %v241
      %v306 = vunpack.c.l.b16 %v242
      %v307 = vunpack.c.l.b16 %v243
      %v308 = vunpack.c.l.b16 %v244
      %v309 = vunpack.c.l.b16 %v245
      %v310 = vunpack.c.l.b16 %v246
      %v311 = vunpack.c.l.b16 %v247
      %v312 = vunpack.c.l.b16 %v248
      %v313 = vunpack.c.l.b16 %v249
      %v314 = vunpack.c.l.b16 %v250
      %v315 = vunpack.c.l.b16 %v251
      %v316 = vunpack.c.l.b16 %v252
      %v317 = vunpack.c.l.b16 %v253
      %v318 = vunpack.c.l.b16 %v254
      %v319 = vunpack.c.l.b16 %v255
      %v320 = vunpack.c.l.b16 %v256
      %v321 = vunpack.c.l.b16 %v257
      %v322 = vunpack.c.l.b16 %v258
      %v323 = vpack.c.b16 %v292, %v291
      %v324 = vpack.c.b16 %v294, %v293
      %v325 = vpack.c.b16 %v296, %v295
      %v326 = vpack.c.b16 %v298, %v297
      %v327 = vpack.c.b16 %v300, %v299
      %v328 = vpack.c.b16 %v302, %v301
      %v329 = vpack.c.b16 %v304, %v303
      %v330 = vpack.c.b16 %v306, %v305
      %v331 = vpack.c.b16 %v308, %v307
      %v332 = vpack.c.b16 %v310, %v309
      %v333 = vpack.c.b16 %v312, %v311
      %v334 = vpack.c.b16 %v314, %v313
      %v335 = vpack.c.b16 %v316, %v315
      %v336 = vpack.c.b16 %v318, %v317
      %v337 = vpack.c.b16 %v320, %v319
      %v338 = vpack.c.b16 %v322, %v321
      %355 = vmatprep.subr.bf16.mxu0 0
      %356 = vmatpush1.bf16.msra.mxu0 %v323
      %357 = vmatprep.subr.bf16.mxu0 0
      %358 = vmatpush1.bf16.msra.mxu0 %v324
      %359 = vmatprep.subr.bf16.mxu0 0
      %360 = vmatpush1.bf16.msra.mxu0 %v325
      %361 = vmatprep.subr.bf16.mxu0 0
      %362 = vmatpush1.bf16.msra.mxu0 %v326
      %363 = vmatprep.subr.bf16.mxu0 0
      %364 = vmatpush1.bf16.msra.mxu0 %v327
      %365 = vmatprep.subr.bf16.mxu0 0
      %366 = vmatpush1.bf16.msra.mxu0 %v328
      %367 = vmatprep.subr.bf16.mxu0 0
      %368 = vmatpush1.bf16.msra.mxu0 %v329
      %369 = vmatprep.subr.bf16.mxu0 0
      %370 = vmatpush1.bf16.msra.mxu0 %v330
      %371 = vmatprep.subr.bf16.mxu0 0
      %372 = vmatpush1.bf16.msra.mxu0 %v331
      %373 = vmatprep.subr.bf16.mxu0 0
      %374 = vmatpush1.bf16.msra.mxu0 %v332
      %375 = vmatprep.subr.bf16.mxu0 0
      %376 = vmatpush1.bf16.msra.mxu0 %v333
      %377 = vmatprep.subr.bf16.mxu0 0
      %378 = vmatpush1.bf16.msra.mxu0 %v334
      %379 = vmatprep.subr.bf16.mxu0 0
      %380 = vmatpush1.bf16.msra.mxu0 %v335
      %381 = vmatprep.subr.bf16.mxu0 0
      %382 = vmatpush1.bf16.msra.mxu0 %v336
      %383 = vmatprep.subr.bf16.mxu0 0
      %384 = vmatpush1.bf16.msra.mxu0 %v337
      %385 = vmatprep.subr.bf16.mxu0 0
      %386 = vmatpush1.bf16.msra.mxu0 %v338
      %387 = vmatprep.mubr.bf16.mxu0 1065369472
      %388 = vmatmul.mubr.bf16.gmra.mrb[0].mxu0 1065369472
      %v389 = vpop.f32.mrb[0].mxu0
      %v390 = vadd.f32 0.0, %v389
      %v391 = vpop.f32.mrb[0].mxu0
      %v392 = vpop.f32.mrb[0].mxu0
      %v393 = vpop.f32.mrb[0].mxu0
      %394 = vdwg.mxu0
      %v395 = vmul.f32 %v390, 0.00390625
      %v396 = vpack.c.bf16 %v395, %v395
      %v397 = vld [vmem:[%s2] sm:$0x3]
      %v398 = vld [vmem:[%s4] sm:$0x1]
      %vm399 = vcmask 31744
      %v401 = vsel %vm399, %v396, 0
      %vm403 = vcmask 1041408
      %v405 = vsel %vm403, %v397, 0
      %407 = vmatprep.subr.bf16.mxu0 0
      %408 = vmatpush1.bf16.msra.mxu0 %v405
      %409 = vmatprep.subr.bf16.mxu0 0
      %410 = vmatpush1.bf16.msra.mxu0 0
      %411 = vmatprep.subr.bf16.mxu0 0
      %412 = vmatpush1.bf16.msra.mxu0 0
      %413 = vmatprep.subr.bf16.mxu0 0
      %414 = vmatpush1.bf16.msra.mxu0 0
      %415 = vmatprep.subr.bf16.mxu0 0
      %416 = vmatpush1.bf16.msra.mxu0 0
      %417 = vmatprep.subr.bf16.mxu0 0
      %418 = vmatpush1.bf16.msra.mxu0 0
      %419 = vmatprep.subr.bf16.mxu0 0
      %420 = vmatpush1.bf16.msra.mxu0 0
      %421 = vmatprep.subr.bf16.mxu0 0
      %422 = vmatpush1.bf16.msra.mxu0 0
      %423 = vmatprep.subr.bf16.mxu0 0
      %424 = vmatpush1.bf16.msra.mxu0 0
      %425 = vmatprep.subr.bf16.mxu0 0
      %426 = vmatpush1.bf16.msra.mxu0 0
      %427 = vmatprep.subr.bf16.mxu0 0
      %428 = vmatpush1.bf16.msra.mxu0 0
      %429 = vmatprep.subr.bf16.mxu0 0
      %430 = vmatpush1.bf16.msra.mxu0 0
      %431 = vmatprep.subr.bf16.mxu0 0
      %432 = vmatpush1.bf16.msra.mxu0 0
      %433 = vmatprep.subr.bf16.mxu0 0
      %434 = vmatpush1.bf16.msra.mxu0 0
      %435 = vmatprep.subr.bf16.mxu0 0
      %436 = vmatpush1.bf16.msra.mxu0 0
      %437 = vmatprep.subr.bf16.mxu0 0
      %438 = vmatpush1.bf16.msra.mxu0 0
      %439 = vmatprep.mubr.bf16.mxu0 0
      %440 = vmatmul.mubr.bf16.gmra.mrb[0].mxu0 %v401
      %v441 = vpop.f32.mrb[0].mxu0
      %v442 = vadd.f32 %v398, %v441
      %v443 = vpop.f32.mrb[0].mxu0
      %v444 = vpop.f32.mrb[0].mxu0
      %v445 = vpop.f32.mrb[0].mxu0
      %446 = vdwg.mxu0
      %v447 = vld [vmem:[%s1] sm:$0x3]
      %v448 = vlaneseq
      %v449 = vshrl.u32 %v448, 7
      %v450 = vsub.s32 0, %v449
      %v451 = vrot.slane %v442, %v450
      %v453 = vsel %vm399, %v323, 0
      %v456 = vsel %vm399, %v324, 0
      %v459 = vsel %vm399, %v325, 0
      %v462 = vsel %vm399, %v326, 0
      %v465 = vsel %vm399, %v327, 0
      %v468 = vsel %vm399, %v328, 0
      %v471 = vsel %vm399, %v329, 0
      %v474 = vsel %vm399, %v330, 0
      %v477 = vsel %vm399, %v331, 0
      %v480 = vsel %vm399, %v332, 0
      %v483 = vsel %vm399, %v333, 0
      %v486 = vsel %vm399, %v334, 0
      %v489 = vsel %vm399, %v335, 0
      %v492 = vsel %vm399, %v336, 0
      %v495 = vsel %vm399, %v337, 0
      %v498 = vsel %vm399, %v338, 0
      %v501 = vsel %vm403, %v447, 0
      %503 = vmatprep.subr.bf16.mxu0 0
      %504 = vmatpush1.bf16.msra.mxu0 %v501
      %505 = vmatprep.subr.bf16.mxu0 0
      %506 = vmatpush1.bf16.msra.mxu0 0
      %507 = vmatprep.subr.bf16.mxu0 0
      %508 = vmatpush1.bf16.msra.mxu0 0
      %509 = vmatprep.subr.bf16.mxu0 0
      %510 = vmatpush1.bf16.msra.mxu0 0
      %511 = vmatprep.subr.bf16.mxu0 0
      %512 = vmatpush1.bf16.msra.mxu0 0
      %513 = vmatprep.subr.bf16.mxu0 0
      %514 = vmatpush1.bf16.msra.mxu0 0
      %515 = vmatprep.subr.bf16.mxu0 0
      %516 = vmatpush1.bf16.msra.mxu0 0
      %517 = vmatprep.subr.bf16.mxu0 0
      %518 = vmatpush1.bf16.msra.mxu0 0
      %519 = vmatprep.subr.bf16.mxu0 0
      %520 = vmatpush1.bf16.msra.mxu0 0
      %521 = vmatprep.subr.bf16.mxu0 0
      %522 = vmatpush1.bf16.msra.mxu0 0
      %523 = vmatprep.subr.bf16.mxu0 0
      %524 = vmatpush1.bf16.msra.mxu0 0
      %525 = vmatprep.subr.bf16.mxu0 0
      %526 = vmatpush1.bf16.msra.mxu0 0
      %527 = vmatprep.subr.bf16.mxu0 0
      %528 = vmatpush1.bf16.msra.mxu0 0
      %529 = vmatprep.subr.bf16.mxu0 0
      %530 = vmatpush1.bf16.msra.mxu0 0
      %531 = vmatprep.subr.bf16.mxu0 0
      %532 = vmatpush1.bf16.msra.mxu0 0
      %533 = vmatprep.subr.bf16.mxu0 0
      %534 = vmatpush1.bf16.msra.mxu0 0
      %535 = vmatprep.mubr.bf16.mxu0 0
      %536 = vmatmul.mubr.bf16.gmra.mrb[0].mxu0 %v453
      %v537 = vpop.f32.mrb[0].mxu0
      %v538 = vadd.f32 %v451, %v537
      %v539 = vpop.f32.mrb[0].mxu0
      %v540 = vpop.f32.mrb[0].mxu0
      %v541 = vadd.f32 %v451, %v540
      %v542 = vpop.f32.mrb[0].mxu0
      %543 = vmatprep.mubr.bf16.mxu0 0
      %544 = vmatmul.mubr.bf16.gmra.mrb[0].mxu0 %v456
      %v545 = vpop.f32.mrb[0].mxu0
      %v546 = vadd.f32 %v451, %v545
      %v547 = vpop.f32.mrb[0].mxu0
      %v548 = vpop.f32.mrb[0].mxu0
      %v549 = vadd.f32 %v451, %v548
      %v550 = vpop.f32.mrb[0].mxu0
      %551 = vmatprep.mubr.bf16.mxu0 0
      %552 = vmatmul.mubr.bf16.gmra.mrb[0].mxu0 %v459
      %v553 = vpop.f32.mrb[0].mxu0
      %v554 = vadd.f32 %v451, %v553
      %v555 = vpop.f32.mrb[0].mxu0
      %v556 = vpop.f32.mrb[0].mxu0
      %v557 = vadd.f32 %v451, %v556
      %v558 = vpop.f32.mrb[0].mxu0
      %559 = vmatprep.mubr.bf16.mxu0 0
      %560 = vmatmul.mubr.bf16.gmra.mrb[0].mxu0 %v462
      %v561 = vpop.f32.mrb[0].mxu0
      %v562 = vadd.f32 %v451, %v561
      %v563 = vpop.f32.mrb[0].mxu0
      %v564 = vpop.f32.mrb[0].mxu0
      %v565 = vadd.f32 %v451, %v564
      %v566 = vpop.f32.mrb[0].mxu0
      %567 = vmatprep.mubr.bf16.mxu0 0
      %568 = vmatmul.mubr.bf16.gmra.mrb[0].mxu0 %v465
      %v569 = vpop.f32.mrb[0].mxu0
      %v570 = vadd.f32 %v451, %v569
      %v571 = vpop.f32.mrb[0].mxu0
      %v572 = vpop.f32.mrb[0].mxu0
      %v573 = vadd.f32 %v451, %v572
      %v574 = vpop.f32.mrb[0].mxu0
      %575 = vmatprep.mubr.bf16.mxu0 0
      %576 = vmatmul.mubr.bf16.gmra.mrb[0].mxu0 %v468
      %v577 = vpop.f32.mrb[0].mxu0
      %v578 = vadd.f32 %v451, %v577
      %v579 = vpop.f32.mrb[0].mxu0
      %v580 = vpop.f32.mrb[0].mxu0
      %v581 = vadd.f32 %v451, %v580
      %v582 = vpop.f32.mrb[0].mxu0
      %583 = vmatprep.mubr.bf16.mxu0 0
      %584 = vmatmul.mubr.bf16.gmra.mrb[0].mxu0 %v471
      %v585 = vpop.f32.mrb[0].mxu0
      %v586 = vadd.f32 %v451, %v585
      %v587 = vpop.f32.mrb[0].mxu0
      %v588 = vpop.f32.mrb[0].mxu0
      %v589 = vadd.f32 %v451, %v588
      %v590 = vpop.f32.mrb[0].mxu0
      %591 = vmatprep.mubr.bf16.mxu0 0
      %592 = vmatmul.mubr.bf16.gmra.mrb[0].mxu0 %v474
      %v593 = vpop.f32.mrb[0].mxu0
      %v594 = vadd.f32 %v451, %v593
      %v595 = vpop.f32.mrb[0].mxu0
      %v596 = vpop.f32.mrb[0].mxu0
      %v597 = vadd.f32 %v451, %v596
      %v598 = vpop.f32.mrb[0].mxu0
      %599 = vmatprep.mubr.bf16.mxu0 0
      %600 = vmatmul.mubr.bf16.gmra.mrb[0].mxu0 %v477
      %v601 = vpop.f32.mrb[0].mxu0
      %v602 = vadd.f32 %v451, %v601
      %v603 = vpop.f32.mrb[0].mxu0
      %v604 = vpop.f32.mrb[0].mxu0
      %v605 = vadd.f32 %v451, %v604
      %v606 = vpop.f32.mrb[0].mxu0
      %607 = vmatprep.mubr.bf16.mxu0 0
      %608 = vmatmul.mubr.bf16.gmra.mrb[0].mxu0 %v480
      %v609 = vpop.f32.mrb[0].mxu0
      %v610 = vadd.f32 %v451, %v609
      %v611 = vpop.f32.mrb[0].mxu0
      %v612 = vpop.f32.mrb[0].mxu0
      %v613 = vadd.f32 %v451, %v612
      %v614 = vpop.f32.mrb[0].mxu0
      %615 = vmatprep.mubr.bf16.mxu0 0
      %616 = vmatmul.mubr.bf16.gmra.mrb[0].mxu0 %v483
      %v617 = vpop.f32.mrb[0].mxu0
      %v618 = vadd.f32 %v451, %v617
      %v619 = vpop.f32.mrb[0].mxu0
      %v620 = vpop.f32.mrb[0].mxu0
      %v621 = vadd.f32 %v451, %v620
      %v622 = vpop.f32.mrb[0].mxu0
      %623 = vmatprep.mubr.bf16.mxu0 0
      %624 = vmatmul.mubr.bf16.gmra.mrb[0].mxu0 %v486
      %v625 = vpop.f32.mrb[0].mxu0
      %v626 = vadd.f32 %v451, %v625
      %v627 = vpop.f32.mrb[0].mxu0
      %v628 = vpop.f32.mrb[0].mxu0
      %v629 = vadd.f32 %v451, %v628
      %v630 = vpop.f32.mrb[0].mxu0
      %631 = vmatprep.mubr.bf16.mxu0 0
      %632 = vmatmul.mubr.bf16.gmra.mrb[0].mxu0 %v489
      %v633 = vpop.f32.mrb[0].mxu0
      %v634 = vadd.f32 %v451, %v633
      %v635 = vpop.f32.mrb[0].mxu0
      %v636 = vpop.f32.mrb[0].mxu0
      %v637 = vadd.f32 %v451, %v636
      %v638 = vpop.f32.mrb[0].mxu0
      %639 = vmatprep.mubr.bf16.mxu0 0
      %640 = vmatmul.mubr.bf16.gmra.mrb[0].mxu0 %v492
      %v641 = vpop.f32.mrb[0].mxu0
      %v642 = vadd.f32 %v451, %v641
      %v643 = vpop.f32.mrb[0].mxu0
      %v644 = vpop.f32.mrb[0].mxu0
      %v645 = vadd.f32 %v451, %v644
      %v646 = vpop.f32.mrb[0].mxu0
      %647 = vmatprep.mubr.bf16.mxu0 0
      %648 = vmatmul.mubr.bf16.gmra.mrb[0].mxu0 %v495
      %v649 = vpop.f32.mrb[0].mxu0
      %v650 = vadd.f32 %v451, %v649
      %v651 = vpop.f32.mrb[0].mxu0
      %v652 = vpop.f32.mrb[0].mxu0
      %v653 = vadd.f32 %v451, %v652
      %v654 = vpop.f32.mrb[0].mxu0
      %655 = vmatprep.mubr.bf16.mxu0 0
      %656 = vmatmul.mubr.bf16.gmra.mrb[0].mxu0 %v498
      %v657 = vpop.f32.mrb[0].mxu0
      %v658 = vadd.f32 %v451, %v657
      %v659 = vpop.f32.mrb[0].mxu0
      %v660 = vpop.f32.mrb[0].mxu0
      %v661 = vadd.f32 %v451, %v660
      %v662 = vpop.f32.mrb[0].mxu0
      %663 = vdwg.mxu0
      %664 = vst.msk [vmem:[%s224] sm:$0xff] %vm399, %v538
      %665 = vst.msk [vmem:[%s224 + $0x8] sm:$0xff] %vm399, %v541
      %666 = vst.msk [vmem:[%s224 + $0x10] sm:$0xff] %vm399, %v546
      %667 = vst.msk [vmem:[%s224 + $0x18] sm:$0xff] %vm399, %v549
      %668 = vst.msk [vmem:[%s224 + $0x20] sm:$0xff] %vm399, %v554
      %669 = vst.msk [vmem:[%s224 + $0x28] sm:$0xff] %vm399, %v557
      %670 = vst.msk [vmem:[%s224 + $0x30] sm:$0xff] %vm399, %v562
      %671 = vst.msk [vmem:[%s224 + $0x38] sm:$0xff] %vm399, %v565
      %672 = vst.msk [vmem:[%s224 + $0x40] sm:$0xff] %vm399, %v570
      %673 = vst.msk [vmem:[%s224 + $0x48] sm:$0xff] %vm399, %v573
      %674 = vst.msk [vmem:[%s224 + $0x50] sm:$0xff] %vm399, %v578
      %675 = vst.msk [vmem:[%s224 + $0x58] sm:$0xff] %vm399, %v581
      %676 = vst.msk [vmem:[%s224 + $0x60] sm:$0xff] %vm399, %v586
      %677 = vst.msk [vmem:[%s224 + $0x68] sm:$0xff] %vm399, %v589
      %678 = vst.msk [vmem:[%s224 + $0x70] sm:$0xff] %vm399, %v594
      %679 = vst.msk [vmem:[%s224 + $0x78] sm:$0xff] %vm399, %v597
      %680 = vst.msk [vmem:[%s224 + $0x80] sm:$0xff] %vm399, %v602
      %681 = vst.msk [vmem:[%s224 + $0x88] sm:$0xff] %vm399, %v605
      %682 = vst.msk [vmem:[%s224 + $0x90] sm:$0xff] %vm399, %v610
      %683 = vst.msk [vmem:[%s224 + $0x98] sm:$0xff] %vm399, %v613
      %684 = vst.msk [vmem:[%s224 + $0xa0] sm:$0xff] %vm399, %v618
      %685 = vst.msk [vmem:[%s224 + $0xa8] sm:$0xff] %vm399, %v621
      %686 = vst.msk [vmem:[%s224 + $0xb0] sm:$0xff] %vm399, %v626
      %687 = vst.msk [vmem:[%s224 + $0xb8] sm:$0xff] %vm399, %v629
      %688 = vst.msk [vmem:[%s224 + $0xc0] sm:$0xff] %vm399, %v634
      %689 = vst.msk [vmem:[%s224 + $0xc8] sm:$0xff] %vm399, %v637
      %690 = vst.msk [vmem:[%s224 + $0xd0] sm:$0xff] %vm399, %v642
      %691 = vst.msk [vmem:[%s224 + $0xd8] sm:$0xff] %vm399, %v645
      %692 = vst.msk [vmem:[%s224 + $0xe0] sm:$0xff] %vm399, %v650
      %693 = vst.msk [vmem:[%s224 + $0xe8] sm:$0xff] %vm399, %v653
      %694 = vst.msk [vmem:[%s224 + $0xf0] sm:$0xff] %vm399, %v658
      %695 = vst.msk [vmem:[%s224 + $0xf8] sm:$0xff] %vm399, %v661
      %v696 = vpack.c.b16 %v291, %v291
      %v697 = vpack.c.b16 %v293, %v293
      %v698 = vpack.c.b16 %v295, %v295
      %v699 = vpack.c.b16 %v297, %v297
      %v700 = vpack.c.b16 %v299, %v299
      %v701 = vpack.c.b16 %v301, %v301
      %v702 = vpack.c.b16 %v303, %v303
      %v703 = vpack.c.b16 %v305, %v305
      %v704 = vpack.c.b16 %v307, %v307
      %v705 = vpack.c.b16 %v309, %v309
      %v706 = vpack.c.b16 %v311, %v311
      %v707 = vpack.c.b16 %v313, %v313
      %v708 = vpack.c.b16 %v315, %v315
      %v709 = vpack.c.b16 %v317, %v317
      %v710 = vpack.c.b16 %v319, %v319
      %v711 = vpack.c.b16 %v321, %v321
      %v712 = vrot.slane %v696, 2
      %v713 = vrot.slane %v697, 2
      %v714 = vrot.slane %v698, 2
      %v715 = vrot.slane %v699, 2
      %v716 = vrot.slane %v700, 2
      %v717 = vrot.slane %v701, 2
      %v718 = vrot.slane %v702, 2
      %v719 = vrot.slane %v703, 2
      %v720 = vrot.slane %v704, 2
      %v721 = vrot.slane %v705, 2
      %v722 = vrot.slane %v706, 2
      %v723 = vrot.slane %v707, 2
      %v724 = vrot.slane %v708, 2
      %v725 = vrot.slane %v709, 2
      %v726 = vrot.slane %v710, 2
      %v727 = vrot.slane %v711, 2
      %vm728 = vcmask 1045504
      %v731 = vsel %vm728, 0, %v712
      %v733 = vsel %vm728, 0, %v713
      %v735 = vsel %vm728, 0, %v714
      %v737 = vsel %vm728, 0, %v715
      %v739 = vsel %vm728, 0, %v716
      %v741 = vsel %vm728, 0, %v717
      %v743 = vsel %vm728, 0, %v718
      %v745 = vsel %vm728, 0, %v719
      %v747 = vsel %vm728, 0, %v720
      %v749 = vsel %vm728, 0, %v721
      %v751 = vsel %vm728, 0, %v722
      %v753 = vsel %vm728, 0, %v723
      %v755 = vsel %vm728, 0, %v724
      %v757 = vsel %vm728, 0, %v725
      %v759 = vsel %vm728, 0, %v726
      %v761 = vsel %vm728, 0, %v727
      %s762 = scalar_lea.vmem %s3, 16
      %v763 = vld [vmem:[%s762] sm:$0x3]
      %v764 = vsel %vm399, %v731, 0
      %v766 = vsel %vm399, %v733, 0
      %v768 = vsel %vm399, %v735, 0
      %v770 = vsel %vm399, %v737, 0
      %v772 = vsel %vm399, %v739, 0
      %v774 = vsel %vm399, %v741, 0
      %v776 = vsel %vm399, %v743, 0
      %v778 = vsel %vm399, %v745, 0
      %v780 = vsel %vm399, %v747, 0
      %v782 = vsel %vm399, %v749, 0
      %v784 = vsel %vm399, %v751, 0
      %v786 = vsel %vm399, %v753, 0
      %v788 = vsel %vm399, %v755, 0
      %v790 = vsel %vm399, %v757, 0
      %v792 = vsel %vm399, %v759, 0
      %v794 = vsel %vm399, %v761, 0
      %v797 = vsel %vm403, %v763, 0
      %799 = vmatprep.subr.bf16.mxu0 0
      %800 = vmatpush1.bf16.msra.mxu0 %v797
      %801 = vmatprep.subr.bf16.mxu0 0
      %802 = vmatpush1.bf16.msra.mxu0 0
      %803 = vmatprep.subr.bf16.mxu0 0
      %804 = vmatpush1.bf16.msra.mxu0 0
      %805 = vmatprep.subr.bf16.mxu0 0
      %806 = vmatpush1.bf16.msra.mxu0 0
      %807 = vmatprep.subr.bf16.mxu0 0
      %808 = vmatpush1.bf16.msra.mxu0 0
      %809 = vmatprep.subr.bf16.mxu0 0
      %810 = vmatpush1.bf16.msra.mxu0 0
      %811 = vmatprep.subr.bf16.mxu0 0
      %812 = vmatpush1.bf16.msra.mxu0 0
      %813 = vmatprep.subr.bf16.mxu0 0
      %814 = vmatpush1.bf16.msra.mxu0 0
      %815 = vmatprep.subr.bf16.mxu0 0
      %816 = vmatpush1.bf16.msra.mxu0 0
      %817 = vmatprep.subr.bf16.mxu0 0
      %818 = vmatpush1.bf16.msra.mxu0 0
      %819 = vmatprep.subr.bf16.mxu0 0
      %820 = vmatpush1.bf16.msra.mxu0 0
      %821 = vmatprep.subr.bf16.mxu0 0
      %822 = vmatpush1.bf16.msra.mxu0 0
      %823 = vmatprep.subr.bf16.mxu0 0
      %824 = vmatpush1.bf16.msra.mxu0 0
      %825 = vmatprep.subr.bf16.mxu0 0
      %826 = vmatpush1.bf16.msra.mxu0 0
      %827 = vmatprep.subr.bf16.mxu0 0
      %828 = vmatpush1.bf16.msra.mxu0 0
      %829 = vmatprep.subr.bf16.mxu0 0
      %830 = vmatpush1.bf16.msra.mxu0 0
      %831 = vmatprep.mubr.bf16.mxu0 0
      %832 = vmatmul.mubr.bf16.gmra.mrb[0].mxu0 %v764
      %v833 = vpop.f32.mrb[0].mxu0
      %v834 = vadd.f32 0.0, %v833
      %v835 = vpop.f32.mrb[0].mxu0
      %v836 = vpop.f32.mrb[0].mxu0
      %v837 = vadd.f32 0.0, %v836
      %v838 = vpop.f32.mrb[0].mxu0
      %839 = vmatprep.mubr.bf16.mxu0 0
      %840 = vmatmul.mubr.bf16.gmra.mrb[0].mxu0 %v766
      %v841 = vpop.f32.mrb[0].mxu0
      %v842 = vadd.f32 0.0, %v841
      %v843 = vpop.f32.mrb[0].mxu0
      %v844 = vpop.f32.mrb[0].mxu0
      %v845 = vadd.f32 0.0, %v844
      %v846 = vpop.f32.mrb[0].mxu0
      %847 = vmatprep.mubr.bf16.mxu0 0
      %848 = vmatmul.mubr.bf16.gmra.mrb[0].mxu0 %v768
      %v849 = vpop.f32.mrb[0].mxu0
      %v850 = vadd.f32 0.0, %v849
      %v851 = vpop.f32.mrb[0].mxu0
      %v852 = vpop.f32.mrb[0].mxu0
      %v853 = vadd.f32 0.0, %v852
      %v854 = vpop.f32.mrb[0].mxu0
      %855 = vmatprep.mubr.bf16.mxu0 0
      %856 = vmatmul.mubr.bf16.gmra.mrb[0].mxu0 %v770
      %v857 = vpop.f32.mrb[0].mxu0
      %v858 = vadd.f32 0.0, %v857
      %v859 = vpop.f32.mrb[0].mxu0
      %v860 = vpop.f32.mrb[0].mxu0
      %v861 = vadd.f32 0.0, %v860
      %v862 = vpop.f32.mrb[0].mxu0
      %863 = vmatprep.mubr.bf16.mxu0 0
      %864 = vmatmul.mubr.bf16.gmra.mrb[0].mxu0 %v772
      %v865 = vpop.f32.mrb[0].mxu0
      %v866 = vpop.f32.mrb[0].mxu0
      %v867 = vpop.f32.mrb[0].mxu0
      %v868 = vpop.f32.mrb[0].mxu0
      %869 = vmatprep.mubr.bf16.mxu0 0
      %870 = vmatmul.mubr.bf16.gmra.mrb[0].mxu0 %v774
      %v871 = vpop.f32.mrb[0].mxu0
      %v872 = vpop.f32.mrb[0].mxu0
      %v873 = vpop.f32.mrb[0].mxu0
      %v874 = vpop.f32.mrb[0].mxu0
      %875 = vmatprep.mubr.bf16.mxu0 0
      %876 = vmatmul.mubr.bf16.gmra.mrb[0].mxu0 %v776
      %v877 = vpop.f32.mrb[0].mxu0
      %v878 = vpop.f32.mrb[0].mxu0
      %v879 = vpop.f32.mrb[0].mxu0
      %v880 = vpop.f32.mrb[0].mxu0
      %881 = vmatprep.mubr.bf16.mxu0 0
      %882 = vmatmul.mubr.bf16.gmra.mrb[0].mxu0 %v778
      %v883 = vpop.f32.mrb[0].mxu0
      %v884 = vpop.f32.mrb[0].mxu0
      %v885 = vpop.f32.mrb[0].mxu0
      %v886 = vpop.f32.mrb[0].mxu0
      %887 = vmatprep.mubr.bf16.mxu0 0
      %888 = vmatmul.mubr.bf16.gmra.mrb[0].mxu0 %v780
      %v889 = vpop.f32.mrb[0].mxu0
      %v890 = vpop.f32.mrb[0].mxu0
      %v891 = vpop.f32.mrb[0].mxu0
      %v892 = vpop.f32.mrb[0].mxu0
      %893 = vmatprep.mubr.bf16.mxu0 0
      %894 = vmatmul.mubr.bf16.gmra.mrb[0].mxu0 %v782
      %v895 = vpop.f32.mrb[0].mxu0
      %v896 = vpop.f32.mrb[0].mxu0
      %v897 = vpop.f32.mrb[0].mxu0
      %v898 = vpop.f32.mrb[0].mxu0
      %899 = vmatprep.mubr.bf16.mxu0 0
      %900 = vmatmul.mubr.bf16.gmra.mrb[0].mxu0 %v784
      %v901 = vpop.f32.mrb[0].mxu0
      %v902 = vpop.f32.mrb[0].mxu0
      %v903 = vpop.f32.mrb[0].mxu0
      %v904 = vpop.f32.mrb[0].mxu0
      %905 = vmatprep.mubr.bf16.mxu0 0
      %906 = vmatmul.mubr.bf16.gmra.mrb[0].mxu0 %v786
      %v907 = vpop.f32.mrb[0].mxu0
      %v908 = vpop.f32.mrb[0].mxu0
      %v909 = vpop.f32.mrb[0].mxu0
      %v910 = vpop.f32.mrb[0].mxu0
      %911 = vmatprep.mubr.bf16.mxu0 0
      %912 = vmatmul.mubr.bf16.gmra.mrb[0].mxu0 %v788
      %v913 = vpop.f32.mrb[0].mxu0
      %v914 = vpop.f32.mrb[0].mxu0
      %v915 = vpop.f32.mrb[0].mxu0
      %v916 = vpop.f32.mrb[0].mxu0
      %917 = vmatprep.mubr.bf16.mxu0 0
      %918 = vmatmul.mubr.bf16.gmra.mrb[0].mxu0 %v790
      %v919 = vpop.f32.mrb[0].mxu0
      %v920 = vpop.f32.mrb[0].mxu0
      %v921 = vpop.f32.mrb[0].mxu0
      %v922 = vpop.f32.mrb[0].mxu0
      %923 = vmatprep.mubr.bf16.mxu0 0
      %924 = vmatmul.mubr.bf16.gmra.mrb[0].mxu0 %v792
      %v925 = vpop.f32.mrb[0].mxu0
      %v926 = vpop.f32.mrb[0].mxu0
      %v927 = vpop.f32.mrb[0].mxu0
      %v928 = vpop.f32.mrb[0].mxu0
      %929 = vmatprep.mubr.bf16.mxu0 0
      %930 = vmatmul.mubr.bf16.gmra.mrb[0].mxu0 %v794
      %v931 = vpop.f32.mrb[0].mxu0
      %v932 = vpop.f32.mrb[0].mxu0
      %v933 = vpop.f32.mrb[0].mxu0
      %v934 = vpop.f32.mrb[0].mxu0
      %935 = vdwg.mxu0
      %s936 = scalar_lea.vmem %s224, 192
      %v937 = vld [vmem:[%s936] sm:$0xff]
      %v938 = vld [vmem:[%s936 + $0x8] sm:$0xff]
      %v939 = vld [vmem:[%s936 + $0x10] sm:$0xff]
      %v940 = vld [vmem:[%s936 + $0x18] sm:$0xff]
      %v941 = vld [vmem:[%s936 + $0x20] sm:$0xff]
      %v942 = vld [vmem:[%s936 + $0x28] sm:$0xff]
      %v943 = vld [vmem:[%s936 + $0x30] sm:$0xff]
      %v944 = vld [vmem:[%s936 + $0x38] sm:$0xff]
      %v945 = vadd.f32 %v937, %v834
      %v946 = vadd.f32 %v938, %v837
      %v947 = vadd.f32 %v939, %v842
      %v948 = vadd.f32 %v940, %v845
      %v949 = vadd.f32 %v941, %v850
      %v950 = vadd.f32 %v942, %v853
      %v951 = vadd.f32 %v943, %v858
      %v952 = vadd.f32 %v944, %v861
      %953 = vst.msk [vmem:[%s936] sm:$0xff] %vm399, %v945
      %954 = vst.msk [vmem:[%s936 + $0x8] sm:$0xff] %vm399, %v946
      %955 = vst.msk [vmem:[%s936 + $0x10] sm:$0xff] %vm399, %v947
      %956 = vst.msk [vmem:[%s936 + $0x18] sm:$0xff] %vm399, %v948
      %957 = vst.msk [vmem:[%s936 + $0x20] sm:$0xff] %vm399, %v949
      %958 = vst.msk [vmem:[%s936 + $0x28] sm:$0xff] %vm399, %v950
      %959 = vst.msk [vmem:[%s936 + $0x30] sm:$0xff] %vm399, %v951
      %960 = vst.msk [vmem:[%s936 + $0x38] sm:$0xff] %vm399, %v952
      %s961 = scalar_lea.vmem %s3, 22
      %v962 = vld [vmem:[%s961] sm:$0x3]
      %v964 = vsel %vm403, %v962, 0
      %966 = vmatprep.subr.bf16.mxu0 0
      %967 = vmatpush1.bf16.msra.mxu0 %v964
      %968 = vmatprep.subr.bf16.mxu0 0
      %969 = vmatpush1.bf16.msra.mxu0 0
      %970 = vmatprep.subr.bf16.mxu0 0
      %971 = vmatpush1.bf16.msra.mxu0 0
      %972 = vmatprep.subr.bf16.mxu0 0
      %973 = vmatpush1.bf16.msra.mxu0 0
      %974 = vmatprep.subr.bf16.mxu0 0
      %975 = vmatpush1.bf16.msra.mxu0 0
      %976 = vmatprep.subr.bf16.mxu0 0
      %977 = vmatpush1.bf16.msra.mxu0 0
      %978 = vmatprep.subr.bf16.mxu0 0
      %979 = vmatpush1.bf16.msra.mxu0 0
      %980 = vmatprep.subr.bf16.mxu0 0
      %981 = vmatpush1.bf16.msra.mxu0 0
      %982 = vmatprep.subr.bf16.mxu0 0
      %983 = vmatpush1.bf16.msra.mxu0 0
      %984 = vmatprep.subr.bf16.mxu0 0
      %985 = vmatpush1.bf16.msra.mxu0 0
      %986 = vmatprep.subr.bf16.mxu0 0
      %987 = vmatpush1.bf16.msra.mxu0 0
      %988 = vmatprep.subr.bf16.mxu0 0
      %989 = vmatpush1.bf16.msra.mxu0 0
      %990 = vmatprep.subr.bf16.mxu0 0
      %991 = vmatpush1.bf16.msra.mxu0 0
      %992 = vmatprep.subr.bf16.mxu0 0
      %993 = vmatpush1.bf16.msra.mxu0 0
      %994 = vmatprep.subr.bf16.mxu0 0
      %995 = vmatpush1.bf16.msra.mxu0 0
      %996 = vmatprep.subr.bf16.mxu0 0
      %997 = vmatpush1.bf16.msra.mxu0 0
      %998 = vmatprep.mubr.bf16.mxu0 0
      %999 = vmatmul.mubr.bf16.gmra.mrb[0].mxu0 %v764
      %v1000 = vpop.f32.mrb[0].mxu0
      %v1001 = vadd.f32 0.0, %v1000
      %v1002 = vpop.f32.mrb[0].mxu0
      %v1003 = vpop.f32.mrb[0].mxu0
      %v1004 = vadd.f32 0.0, %v1003
      %v1005 = vpop.f32.mrb[0].mxu0
      %1006 = vmatprep.mubr.bf16.mxu0 0
      %1007 = vmatmul.mubr.bf16.gmra.mrb[0].mxu0 %v766
      %v1008 = vpop.f32.mrb[0].mxu0
      %v1009 = vadd.f32 0.0, %v1008
      %v1010 = vpop.f32.mrb[0].mxu0
      %v1011 = vpop.f32.mrb[0].mxu0
      %v1012 = vadd.f32 0.0, %v1011
      %v1013 = vpop.f32.mrb[0].mxu0
      %1014 = vmatprep.mubr.bf16.mxu0 0
      %1015 = vmatmul.mubr.bf16.gmra.mrb[0].mxu0 %v768
      %v1016 = vpop.f32.mrb[0].mxu0
      %v1017 = vadd.f32 0.0, %v1016
      %v1018 = vpop.f32.mrb[0].mxu0
      %v1019 = vpop.f32.mrb[0].mxu0
      %v1020 = vadd.f32 0.0, %v1019
      %v1021 = vpop.f32.mrb[0].mxu0
      %1022 = vmatprep.mubr.bf16.mxu0 0
      %1023 = vmatmul.mubr.bf16.gmra.mrb[0].mxu0 %v770
      %v1024 = vpop.f32.mrb[0].mxu0
      %v1025 = vadd.f32 0.0, %v1024
      %v1026 = vpop.f32.mrb[0].mxu0
      %v1027 = vpop.f32.mrb[0].mxu0
      %v1028 = vadd.f32 0.0, %v1027
      %v1029 = vpop.f32.mrb[0].mxu0
      %1030 = vmatprep.mubr.bf16.mxu0 0
      %1031 = vmatmul.mubr.bf16.gmra.mrb[0].mxu0 %v772
      %v1032 = vpop.f32.mrb[0].mxu0
      %v1033 = vadd.f32 0.0, %v1032
      %v1034 = vpop.f32.mrb[0].mxu0
      %v1035 = vpop.f32.mrb[0].mxu0
      %v1036 = vadd.f32 0.0, %v1035
      %v1037 = vpop.f32.mrb[0].mxu0
      %1038 = vmatprep.mubr.bf16.mxu0 0
      %1039 = vmatmul.mubr.bf16.gmra.mrb[0].mxu0 %v774
      %v1040 = vpop.f32.mrb[0].mxu0
      %v1041 = vadd.f32 0.0, %v1040
      %v1042 = vpop.f32.mrb[0].mxu0
      %v1043 = vpop.f32.mrb[0].mxu0
      %v1044 = vadd.f32 0.0, %v1043
      %v1045 = vpop.f32.mrb[0].mxu0
      %1046 = vmatprep.mubr.bf16.mxu0 0
      %1047 = vmatmul.mubr.bf16.gmra.mrb[0].mxu0 %v776
      %v1048 = vpop.f32.mrb[0].mxu0
      %v1049 = vadd.f32 0.0, %v1048
      %v1050 = vpop.f32.mrb[0].mxu0
      %v1051 = vpop.f32.mrb[0].mxu0
      %v1052 = vadd.f32 0.0, %v1051
      %v1053 = vpop.f32.mrb[0].mxu0
      %1054 = vmatprep.mubr.bf16.mxu0 0
      %1055 = vmatmul.mubr.bf16.gmra.mrb[0].mxu0 %v778
      %v1056 = vpop.f32.mrb[0].mxu0
      %v1057 = vadd.f32 0.0, %v1056
      %v1058 = vpop.f32.mrb[0].mxu0
      %v1059 = vpop.f32.mrb[0].mxu0
      %v1060 = vadd.f32 0.0, %v1059
      %v1061 = vpop.f32.mrb[0].mxu0
      %1062 = vmatprep.mubr.bf16.mxu0 0
      %1063 = vmatmul.mubr.bf16.gmra.mrb[0].mxu0 %v780
      %v1064 = vpop.f32.mrb[0].mxu0
      %v1065 = vadd.f32 0.0, %v1064
      %v1066 = vpop.f32.mrb[0].mxu0
      %v1067 = vpop.f32.mrb[0].mxu0
      %v1068 = vadd.f32 0.0, %v1067
      %v1069 = vpop.f32.mrb[0].mxu0
      %1070 = vmatprep.mubr.bf16.mxu0 0
      %1071 = vmatmul.mubr.bf16.gmra.mrb[0].mxu0 %v782
      %v1072 = vpop.f32.mrb[0].mxu0
      %v1073 = vadd.f32 0.0, %v1072
      %v1074 = vpop.f32.mrb[0].mxu0
      %v1075 = vpop.f32.mrb[0].mxu0
      %v1076 = vadd.f32 0.0, %v1075
      %v1077 = vpop.f32.mrb[0].mxu0
      %1078 = vmatprep.mubr.bf16.mxu0 0
      %1079 = vmatmul.mubr.bf16.gmra.mrb[0].mxu0 %v784
      %v1080 = vpop.f32.mrb[0].mxu0
      %v1081 = vadd.f32 0.0, %v1080
      %v1082 = vpop.f32.mrb[0].mxu0
      %v1083 = vpop.f32.mrb[0].mxu0
      %v1084 = vadd.f32 0.0, %v1083
      %v1085 = vpop.f32.mrb[0].mxu0
      %1086 = vmatprep.mubr.bf16.mxu0 0
      %1087 = vmatmul.mubr.bf16.gmra.mrb[0].mxu0 %v786
      %v1088 = vpop.f32.mrb[0].mxu0
      %v1089 = vadd.f32 0.0, %v1088
      %v1090 = vpop.f32.mrb[0].mxu0
      %v1091 = vpop.f32.mrb[0].mxu0
      %v1092 = vadd.f32 0.0, %v1091
      %v1093 = vpop.f32.mrb[0].mxu0
      %1094 = vmatprep.mubr.bf16.mxu0 0
      %1095 = vmatmul.mubr.bf16.gmra.mrb[0].mxu0 %v788
      %v1096 = vpop.f32.mrb[0].mxu0
      %v1097 = vadd.f32 0.0, %v1096
      %v1098 = vpop.f32.mrb[0].mxu0
      %v1099 = vpop.f32.mrb[0].mxu0
      %v1100 = vadd.f32 0.0, %v1099
      %v1101 = vpop.f32.mrb[0].mxu0
      %1102 = vmatprep.mubr.bf16.mxu0 0
      %1103 = vmatmul.mubr.bf16.gmra.mrb[0].mxu0 %v790
      %v1104 = vpop.f32.mrb[0].mxu0
      %v1105 = vadd.f32 0.0, %v1104
      %v1106 = vpop.f32.mrb[0].mxu0
      %v1107 = vpop.f32.mrb[0].mxu0
      %v1108 = vadd.f32 0.0, %v1107
      %v1109 = vpop.f32.mrb[0].mxu0
      %1110 = vmatprep.mubr.bf16.mxu0 0
      %1111 = vmatmul.mubr.bf16.gmra.mrb[0].mxu0 %v792
      %v1112 = vpop.f32.mrb[0].mxu0
      %v1113 = vadd.f32 0.0, %v1112
      %v1114 = vpop.f32.mrb[0].mxu0
      %v1115 = vpop.f32.mrb[0].mxu0
      %v1116 = vadd.f32 0.0, %v1115
      %v1117 = vpop.f32.mrb[0].mxu0
      %1118 = vmatprep.mubr.bf16.mxu0 0
      %1119 = vmatmul.mubr.bf16.gmra.mrb[0].mxu0 %v794
      %v1120 = vpop.f32.mrb[0].mxu0
      %v1121 = vadd.f32 0.0, %v1120
      %v1122 = vpop.f32.mrb[0].mxu0
      %v1123 = vpop.f32.mrb[0].mxu0
      %v1124 = vadd.f32 0.0, %v1123
      %v1125 = vpop.f32.mrb[0].mxu0
      %1126 = vdwg.mxu0
      %v1127 = vld [vmem:[%s224] sm:$0xff]
      %v1128 = vld [vmem:[%s224 + $0x8] sm:$0xff]
      %v1129 = vld [vmem:[%s224 + $0x10] sm:$0xff]
      %v1130 = vld [vmem:[%s224 + $0x18] sm:$0xff]
      %v1131 = vld [vmem:[%s224 + $0x20] sm:$0xff]
      %v1132 = vld [vmem:[%s224 + $0x28] sm:$0xff]
      %v1133 = vld [vmem:[%s224 + $0x30] sm:$0xff]
      %v1134 = vld [vmem:[%s224 + $0x38] sm:$0xff]
      %v1135 = vld [vmem:[%s224 + $0x40] sm:$0xff]
      %v1136 = vld [vmem:[%s224 + $0x48] sm:$0xff]
      %v1137 = vld [vmem:[%s224 + $0x50] sm:$0xff]
      %v1138 = vld [vmem:[%s224 + $0x58] sm:$0xff]
      %v1139 = vld [vmem:[%s224 + $0x60] sm:$0xff]
      %v1140 = vld [vmem:[%s224 + $0x68] sm:$0xff]
      %v1141 = vld [vmem:[%s224 + $0x70] sm:$0xff]
      %v1142 = vld [vmem:[%s224 + $0x78] sm:$0xff]
      %v1143 = vld [vmem:[%s224 + $0x80] sm:$0xff]
      %v1144 = vld [vmem:[%s224 + $0x88] sm:$0xff]
      %v1145 = vld [vmem:[%s224 + $0x90] sm:$0xff]
      %v1146 = vld [vmem:[%s224 + $0x98] sm:$0xff]
      %v1147 = vld [vmem:[%s224 + $0xa0] sm:$0xff]
      %v1148 = vld [vmem:[%s224 + $0xa8] sm:$0xff]
      %v1149 = vld [vmem:[%s224 + $0xb0] sm:$0xff]
      %v1150 = vld [vmem:[%s224 + $0xb8] sm:$0xff]
      %v1151 = vld [vmem:[%s224 + $0xc0] sm:$0xff]
      %v1152 = vld [vmem:[%s224 + $0xc8] sm:$0xff]
      %v1153 = vld [vmem:[%s224 + $0xd0] sm:$0xff]
      %v1154 = vld [vmem:[%s224 + $0xd8] sm:$0xff]
      %v1155 = vld [vmem:[%s224 + $0xe0] sm:$0xff]
      %v1156 = vld [vmem:[%s224 + $0xe8] sm:$0xff]
      %v1157 = vld [vmem:[%s224 + $0xf0] sm:$0xff]
      %v1158 = vld [vmem:[%s224 + $0xf8] sm:$0xff]
      %v1159 = vadd.f32 %v1127, %v1001
      %v1160 = vadd.f32 %v1128, %v1004
      %v1161 = vadd.f32 %v1129, %v1009
      %v1162 = vadd.f32 %v1130, %v1012
      %v1163 = vadd.f32 %v1131, %v1017
      %v1164 = vadd.f32 %v1132, %v1020
      %v1165 = vadd.f32 %v1133, %v1025
      %v1166 = vadd.f32 %v1134, %v1028
      %v1167 = vadd.f32 %v1135, %v1033
      %v1168 = vadd.f32 %v1136, %v1036
      %v1169 = vadd.f32 %v1137, %v1041
      %v1170 = vadd.f32 %v1138, %v1044
      %v1171 = vadd.f32 %v1139, %v1049
      %v1172 = vadd.f32 %v1140, %v1052
      %v1173 = vadd.f32 %v1141, %v1057
      %v1174 = vadd.f32 %v1142, %v1060
      %v1175 = vadd.f32 %v1143, %v1065
      %v1176 = vadd.f32 %v1144, %v1068
      %v1177 = vadd.f32 %v1145, %v1073
      %v1178 = vadd.f32 %v1146, %v1076
      %v1179 = vadd.f32 %v1147, %v1081
      %v1180 = vadd.f32 %v1148, %v1084
      %v1181 = vadd.f32 %v1149, %v1089
      %v1182 = vadd.f32 %v1150, %v1092
      %v1183 = vadd.f32 %v1151, %v1097
      %v1184 = vadd.f32 %v1152, %v1100
      %v1185 = vadd.f32 %v1153, %v1105
      %v1186 = vadd.f32 %v1154, %v1108
      %v1187 = vadd.f32 %v1155, %v1113
      %v1188 = vadd.f32 %v1156, %v1116
      %v1189 = vadd.f32 %v1157, %v1121
      %v1190 = vadd.f32 %v1158, %v1124
      %1191 = vst.msk [vmem:[%s224] sm:$0xff] %vm399, %v1159
      %1192 = vst.msk [vmem:[%s224 + $0x8] sm:$0xff] %vm399, %v1160
      %1193 = vst.msk [vmem:[%s224 + $0x10] sm:$0xff] %vm399, %v1161
      %1194 = vst.msk [vmem:[%s224 + $0x18] sm:$0xff] %vm399, %v1162
      %1195 = vst.msk [vmem:[%s224 + $0x20] sm:$0xff] %vm399, %v1163
      %1196 = vst.msk [vmem:[%s224 + $0x28] sm:$0xff] %vm399, %v1164
      %1197 = vst.msk [vmem:[%s224 + $0x30] sm:$0xff] %vm399, %v1165
      %1198 = vst.msk [vmem:[%s224 + $0x38] sm:$0xff] %vm399, %v1166
      %1199 = vst.msk [vmem:[%s224 + $0x40] sm:$0xff] %vm399, %v1167
      %1200 = vst.msk [vmem:[%s224 + $0x48] sm:$0xff] %vm399, %v1168
      %1201 = vst.msk [vmem:[%s224 + $0x50] sm:$0xff] %vm399, %v1169
      %1202 = vst.msk [vmem:[%s224 + $0x58] sm:$0xff] %vm399, %v1170
      %1203 = vst.msk [vmem:[%s224 + $0x60] sm:$0xff] %vm399, %v1171
      %1204 = vst.msk [vmem:[%s224 + $0x68] sm:$0xff] %vm399, %v1172
      %1205 = vst.msk [vmem:[%s224 + $0x70] sm:$0xff] %vm399, %v1173
      %1206 = vst.msk [vmem:[%s224 + $0x78] sm:$0xff] %vm399, %v1174
      %1207 = vst.msk [vmem:[%s224 + $0x80] sm:$0xff] %vm399, %v1175
      %1208 = vst.msk [vmem:[%s224 + $0x88] sm:$0xff] %vm399, %v1176
      %1209 = vst.msk [vmem:[%s224 + $0x90] sm:$0xff] %vm399, %v1177
      %1210 = vst.msk [vmem:[%s224 + $0x98] sm:$0xff] %vm399, %v1178
      %1211 = vst.msk [vmem:[%s224 + $0xa0] sm:$0xff] %vm399, %v1179
      %1212 = vst.msk [vmem:[%s224 + $0xa8] sm:$0xff] %vm399, %v1180
      %1213 = vst.msk [vmem:[%s224 + $0xb0] sm:$0xff] %vm399, %v1181
      %1214 = vst.msk [vmem:[%s224 + $0xb8] sm:$0xff] %vm399, %v1182
      %1215 = vst.msk [vmem:[%s224 + $0xc0] sm:$0xff] %vm399, %v1183
      %1216 = vst.msk [vmem:[%s224 + $0xc8] sm:$0xff] %vm399, %v1184
      %1217 = vst.msk [vmem:[%s224 + $0xd0] sm:$0xff] %vm399, %v1185
      %1218 = vst.msk [vmem:[%s224 + $0xd8] sm:$0xff] %vm399, %v1186
      %1219 = vst.msk [vmem:[%s224 + $0xe0] sm:$0xff] %vm399, %v1187
      %1220 = vst.msk [vmem:[%s224 + $0xe8] sm:$0xff] %vm399, %v1188
      %1221 = vst.msk [vmem:[%s224 + $0xf0] sm:$0xff] %vm399, %v1189
      %1222 = vst.msk [vmem:[%s224 + $0xf8] sm:$0xff] %vm399, %v1190
      %s1223 = scalar_lea.vmem %s3, 26
      %v1224 = vld [vmem:[%s1223] sm:$0x3]
      %v1226 = vsel %vm403, %v1224, 0
      %1228 = vmatprep.subr.bf16.mxu0 0
      %1229 = vmatpush1.bf16.msra.mxu0 %v1226
      %1230 = vmatprep.subr.bf16.mxu0 0
      %1231 = vmatpush1.bf16.msra.mxu0 0
      %1232 = vmatprep.subr.bf16.mxu0 0
      %1233 = vmatpush1.bf16.msra.mxu0 0
      %1234 = vmatprep.subr.bf16.mxu0 0
      %1235 = vmatpush1.bf16.msra.mxu0 0
      %1236 = vmatprep.subr.bf16.mxu0 0
      %1237 = vmatpush1.bf16.msra.mxu0 0
      %1238 = vmatprep.subr.bf16.mxu0 0
      %1239 = vmatpush1.bf16.msra.mxu0 0
      %1240 = vmatprep.subr.bf16.mxu0 0
      %1241 = vmatpush1.bf16.msra.mxu0 0
      %1242 = vmatprep.subr.bf16.mxu0 0
      %1243 = vmatpush1.bf16.msra.mxu0 0
      %1244 = vmatprep.subr.bf16.mxu0 0
      %1245 = vmatpush1.bf16.msra.mxu0 0
      %1246 = vmatprep.subr.bf16.mxu0 0
      %1247 = vmatpush1.bf16.msra.mxu0 0
      %1248 = vmatprep.subr.bf16.mxu0 0
      %1249 = vmatpush1.bf16.msra.mxu0 0
      %1250 = vmatprep.subr.bf16.mxu0 0
      %1251 = vmatpush1.bf16.msra.mxu0 0
      %1252 = vmatprep.subr.bf16.mxu0 0
      %1253 = vmatpush1.bf16.msra.mxu0 0
      %1254 = vmatprep.subr.bf16.mxu0 0
      %1255 = vmatpush1.bf16.msra.mxu0 0
      %1256 = vmatprep.subr.bf16.mxu0 0
      %1257 = vmatpush1.bf16.msra.mxu0 0
      %1258 = vmatprep.subr.bf16.mxu0 0
      %1259 = vmatpush1.bf16.msra.mxu0 0
      %1260 = vmatprep.mubr.bf16.mxu0 0
      %1261 = vmatmul.mubr.bf16.gmra.mrb[0].mxu0 %v764
      %v1262 = vpop.f32.mrb[0].mxu0
      %v1263 = vpop.f32.mrb[0].mxu0
      %v1264 = vpop.f32.mrb[0].mxu0
      %v1265 = vpop.f32.mrb[0].mxu0
      %1266 = vmatprep.mubr.bf16.mxu0 0
      %1267 = vmatmul.mubr.bf16.gmra.mrb[0].mxu0 %v766
      %v1268 = vpop.f32.mrb[0].mxu0
      %v1269 = vpop.f32.mrb[0].mxu0
      %v1270 = vpop.f32.mrb[0].mxu0
      %v1271 = vpop.f32.mrb[0].mxu0
      %1272 = vmatprep.mubr.bf16.mxu0 0
      %1273 = vmatmul.mubr.bf16.gmra.mrb[0].mxu0 %v768
      %v1274 = vpop.f32.mrb[0].mxu0
      %v1275 = vpop.f32.mrb[0].mxu0
      %v1276 = vpop.f32.mrb[0].mxu0
      %v1277 = vpop.f32.mrb[0].mxu0
      %1278 = vmatprep.mubr.bf16.mxu0 0
      %1279 = vmatmul.mubr.bf16.gmra.mrb[0].mxu0 %v770
      %v1280 = vpop.f32.mrb[0].mxu0
      %v1281 = vpop.f32.mrb[0].mxu0
      %v1282 = vpop.f32.mrb[0].mxu0
      %v1283 = vpop.f32.mrb[0].mxu0
      %1284 = vmatprep.mubr.bf16.mxu0 0
      %1285 = vmatmul.mubr.bf16.gmra.mrb[0].mxu0 %v772
      %v1286 = vpop.f32.mrb[0].mxu0
      %v1287 = vpop.f32.mrb[0].mxu0
      %v1288 = vpop.f32.mrb[0].mxu0
      %v1289 = vpop.f32.mrb[0].mxu0
      %1290 = vmatprep.mubr.bf16.mxu0 0
      %1291 = vmatmul.mubr.bf16.gmra.mrb[0].mxu0 %v774
      %v1292 = vpop.f32.mrb[0].mxu0
      %v1293 = vpop.f32.mrb[0].mxu0
      %v1294 = vpop.f32.mrb[0].mxu0
      %v1295 = vpop.f32.mrb[0].mxu0
      %1296 = vmatprep.mubr.bf16.mxu0 0
      %1297 = vmatmul.mubr.bf16.gmra.mrb[0].mxu0 %v776
      %v1298 = vpop.f32.mrb[0].mxu0
      %v1299 = vpop.f32.mrb[0].mxu0
      %v1300 = vpop.f32.mrb[0].mxu0
      %v1301 = vpop.f32.mrb[0].mxu0
      %1302 = vmatprep.mubr.bf16.mxu0 0
      %1303 = vmatmul.mubr.bf16.gmra.mrb[0].mxu0 %v778
      %v1304 = vpop.f32.mrb[0].mxu0
      %v1305 = vpop.f32.mrb[0].mxu0
      %v1306 = vpop.f32.mrb[0].mxu0
      %v1307 = vpop.f32.mrb[0].mxu0
      %1308 = vmatprep.mubr.bf16.mxu0 0
      %1309 = vmatmul.mubr.bf16.gmra.mrb[0].mxu0 %v780
      %v1310 = vpop.f32.mrb[0].mxu0
      %v1311 = vpop.f32.mrb[0].mxu0
      %v1312 = vpop.f32.mrb[0].mxu0
      %v1313 = vpop.f32.mrb[0].mxu0
      %1314 = vmatprep.mubr.bf16.mxu0 0
      %1315 = vmatmul.mubr.bf16.gmra.mrb[0].mxu0 %v782
      %v1316 = vpop.f32.mrb[0].mxu0
      %v1317 = vpop.f32.mrb[0].mxu0
      %v1318 = vpop.f32.mrb[0].mxu0
      %v1319 = vpop.f32.mrb[0].mxu0
      %1320 = vmatprep.mubr.bf16.mxu0 0
      %1321 = vmatmul.mubr.bf16.gmra.mrb[0].mxu0 %v784
      %v1322 = vpop.f32.mrb[0].mxu0
      %v1323 = vpop.f32.mrb[0].mxu0
      %v1324 = vpop.f32.mrb[0].mxu0
      %v1325 = vpop.f32.mrb[0].mxu0
      %1326 = vmatprep.mubr.bf16.mxu0 0
      %1327 = vmatmul.mubr.bf16.gmra.mrb[0].mxu0 %v786
      %v1328 = vpop.f32.mrb[0].mxu0
      %v1329 = vpop.f32.mrb[0].mxu0
      %v1330 = vpop.f32.mrb[0].mxu0
      %v1331 = vpop.f32.mrb[0].mxu0
      %1332 = vmatprep.mubr.bf16.mxu0 0
      %1333 = vmatmul.mubr.bf16.gmra.mrb[0].mxu0 %v788
      %v1334 = vpop.f32.mrb[0].mxu0
      %v1335 = vadd.f32 0.0, %v1334
      %v1336 = vpop.f32.mrb[0].mxu0
      %v1337 = vpop.f32.mrb[0].mxu0
      %v1338 = vadd.f32 0.0, %v1337
      %v1339 = vpop.f32.mrb[0].mxu0
      %1340 = vmatprep.mubr.bf16.mxu0 0
      %1341 = vmatmul.mubr.bf16.gmra.mrb[0].mxu0 %v790
      %v1342 = vpop.f32.mrb[0].mxu0
      %v1343 = vadd.f32 0.0, %v1342
      %v1344 = vpop.f32.mrb[0].mxu0
      %v1345 = vpop.f32.mrb[0].mxu0
      %v1346 = vadd.f32 0.0, %v1345
      %v1347 = vpop.f32.mrb[0].mxu0
      %1348 = vmatprep.mubr.bf16.mxu0 0
      %1349 = vmatmul.mubr.bf16.gmra.mrb[0].mxu0 %v792
      %v1350 = vpop.f32.mrb[0].mxu0
      %v1351 = vadd.f32 0.0, %v1350
      %v1352 = vpop.f32.mrb[0].mxu0
      %v1353 = vpop.f32.mrb[0].mxu0
      %v1354 = vadd.f32 0.0, %v1353
      %v1355 = vpop.f32.mrb[0].mxu0
      %1356 = vmatprep.mubr.bf16.mxu0 0
      %1357 = vmatmul.mubr.bf16.gmra.mrb[0].mxu0 %v794
      %v1358 = vpop.f32.mrb[0].mxu0
      %v1359 = vadd.f32 0.0, %v1358
      %v1360 = vpop.f32.mrb[0].mxu0
      %v1361 = vpop.f32.mrb[0].mxu0
      %v1362 = vadd.f32 0.0, %v1361
      %v1363 = vpop.f32.mrb[0].mxu0
      %1364 = vdwg.mxu0
      %v1365 = vld [vmem:[%s224] sm:$0xff]
      %v1366 = vld [vmem:[%s224 + $0x8] sm:$0xff]
      %v1367 = vld [vmem:[%s224 + $0x10] sm:$0xff]
      %v1368 = vld [vmem:[%s224 + $0x18] sm:$0xff]
      %v1369 = vld [vmem:[%s224 + $0x20] sm:$0xff]
      %v1370 = vld [vmem:[%s224 + $0x28] sm:$0xff]
      %v1371 = vld [vmem:[%s224 + $0x30] sm:$0xff]
      %v1372 = vld [vmem:[%s224 + $0x38] sm:$0xff]
      %v1373 = vadd.f32 %v1365, %v1335
      %v1374 = vadd.f32 %v1366, %v1338
      %v1375 = vadd.f32 %v1367, %v1343
      %v1376 = vadd.f32 %v1368, %v1346
      %v1377 = vadd.f32 %v1369, %v1351
      %v1378 = vadd.f32 %v1370, %v1354
      %v1379 = vadd.f32 %v1371, %v1359
      %v1380 = vadd.f32 %v1372, %v1362
      %1381 = vst.msk [vmem:[%s224] sm:$0xff] %vm399, %v1373
      %1382 = vst.msk [vmem:[%s224 + $0x8] sm:$0xff] %vm399, %v1374
      %1383 = vst.msk [vmem:[%s224 + $0x10] sm:$0xff] %vm399, %v1375
      %1384 = vst.msk [vmem:[%s224 + $0x18] sm:$0xff] %vm399, %v1376
      %1385 = vst.msk [vmem:[%s224 + $0x20] sm:$0xff] %vm399, %v1377
      %1386 = vst.msk [vmem:[%s224 + $0x28] sm:$0xff] %vm399, %v1378
      %1387 = vst.msk [vmem:[%s224 + $0x30] sm:$0xff] %vm399, %v1379
      %1388 = vst.msk [vmem:[%s224 + $0x38] sm:$0xff] %vm399, %v1380
      %v1389 = vrot.slane %v323, 5
      %v1390 = vrot.slane %v324, 5
      %v1391 = vrot.slane %v325, 5
      %v1392 = vrot.slane %v326, 5
      %v1393 = vrot.slane %v327, 5
      %v1394 = vrot.slane %v328, 5
      %v1395 = vrot.slane %v329, 5
      %v1396 = vrot.slane %v330, 5
      %v1397 = vrot.slane %v331, 5
      %v1398 = vrot.slane %v332, 5
      %v1399 = vrot.slane %v333, 5
      %v1400 = vrot.slane %v334, 5
      %v1401 = vrot.slane %v335, 5
      %v1402 = vrot.slane %v336, 5
      %v1403 = vrot.slane %v337, 5
      %v1404 = vrot.slane %v338, 5
      %vm1405 = vcmask 1042432
      %v1407 = vsel %vm1405, 0, %v1389
      %v1409 = vsel %vm1405, 0, %v1390
      %v1411 = vsel %vm1405, 0, %v1391
      %v1413 = vsel %vm1405, 0, %v1392
      %v1415 = vsel %vm1405, 0, %v1393
      %v1417 = vsel %vm1405, 0, %v1394
      %v1419 = vsel %vm1405, 0, %v1395
      %v1421 = vsel %vm1405, 0, %v1396
      %v1423 = vsel %vm1405, 0, %v1397
      %v1425 = vsel %vm1405, 0, %v1398
      %v1427 = vsel %vm1405, 0, %v1399
      %v1429 = vsel %vm1405, 0, %v1400
      %v1431 = vsel %vm1405, 0, %v1401
      %v1433 = vsel %vm1405, 0, %v1402
      %v1435 = vsel %vm1405, 0, %v1403
      %v1437 = vsel %vm1405, 0, %v1404
      %v1438 = vld [vmem:[%s3] sm:$0x3]
      %v1439 = vsel %vm399, %v1407, 0
      %v1441 = vsel %vm399, %v1409, 0
      %v1443 = vsel %vm399, %v1411, 0
      %v1445 = vsel %vm399, %v1413, 0
      %v1447 = vsel %vm399, %v1415, 0
      %v1449 = vsel %vm399, %v1417, 0
      %v1451 = vsel %vm399, %v1419, 0
      %v1453 = vsel %vm399, %v1421, 0
      %v1455 = vsel %vm399, %v1423, 0
      %v1457 = vsel %vm399, %v1425, 0
      %v1459 = vsel %vm399, %v1427, 0
      %v1461 = vsel %vm399, %v1429, 0
      %v1463 = vsel %vm399, %v1431, 0
      %v1465 = vsel %vm399, %v1433, 0
      %v1467 = vsel %vm399, %v1435, 0
      %v1469 = vsel %vm399, %v1437, 0
      %v1472 = vsel %vm403, %v1438, 0
      %1474 = vmatprep.subr.bf16.mxu0 0
      %1475 = vmatpush1.bf16.msra.mxu0 %v1472
      %1476 = vmatprep.subr.bf16.mxu0 0
      %1477 = vmatpush1.bf16.msra.mxu0 0
      %1478 = vmatprep.subr.bf16.mxu0 0
      %1479 = vmatpush1.bf16.msra.mxu0 0
      %1480 = vmatprep.subr.bf16.mxu0 0
      %1481 = vmatpush1.bf16.msra.mxu0 0
      %1482 = vmatprep.subr.bf16.mxu0 0
      %1483 = vmatpush1.bf16.msra.mxu0 0
      %1484 = vmatprep.subr.bf16.mxu0 0
      %1485 = vmatpush1.bf16.msra.mxu0 0
      %1486 = vmatprep.subr.bf16.mxu0 0
      %1487 = vmatpush1.bf16.msra.mxu0 0
      %1488 = vmatprep.subr.bf16.mxu0 0
      %1489 = vmatpush1.bf16.msra.mxu0 0
      %1490 = vmatprep.subr.bf16.mxu0 0
      %1491 = vmatpush1.bf16.msra.mxu0 0
      %1492 = vmatprep.subr.bf16.mxu0 0
      %1493 = vmatpush1.bf16.msra.mxu0 0
      %1494 = vmatprep.subr.bf16.mxu0 0
      %1495 = vmatpush1.bf16.msra.mxu0 0
      %1496 = vmatprep.subr.bf16.mxu0 0
      %1497 = vmatpush1.bf16.msra.mxu0 0
      %1498 = vmatprep.subr.bf16.mxu0 0
      %1499 = vmatpush1.bf16.msra.mxu0 0
      %1500 = vmatprep.subr.bf16.mxu0 0
      %1501 = vmatpush1.bf16.msra.mxu0 0
      %1502 = vmatprep.subr.bf16.mxu0 0
      %1503 = vmatpush1.bf16.msra.mxu0 0
      %1504 = vmatprep.subr.bf16.mxu0 0
      %1505 = vmatpush1.bf16.msra.mxu0 0
      %1506 = vmatprep.mubr.bf16.mxu0 0
      %1507 = vmatmul.mubr.bf16.gmra.mrb[0].mxu0 %v1439
      %v1508 = vpop.f32.mrb[0].mxu0
      %v1509 = vadd.f32 0.0, %v1508
      %v1510 = vpop.f32.mrb[0].mxu0
      %v1511 = vpop.f32.mrb[0].mxu0
      %v1512 = vadd.f32 0.0, %v1511
      %v1513 = vpop.f32.mrb[0].mxu0
      %1514 = vmatprep.mubr.bf16.mxu0 0
      %1515 = vmatmul.mubr.bf16.gmra.mrb[0].mxu0 %v1441
      %v1516 = vpop.f32.mrb[0].mxu0
      %v1517 = vadd.f32 0.0, %v1516
      %v1518 = vpop.f32.mrb[0].mxu0
      %v1519 = vpop.f32.mrb[0].mxu0
      %v1520 = vadd.f32 0.0, %v1519
      %v1521 = vpop.f32.mrb[0].mxu0
      %1522 = vmatprep.mubr.bf16.mxu0 0
      %1523 = vmatmul.mubr.bf16.gmra.mrb[0].mxu0 %v1443
      %v1524 = vpop.f32.mrb[0].mxu0
      %v1525 = vadd.f32 0.0, %v1524
      %v1526 = vpop.f32.mrb[0].mxu0
      %v1527 = vpop.f32.mrb[0].mxu0
      %v1528 = vadd.f32 0.0, %v1527
      %v1529 = vpop.f32.mrb[0].mxu0
      %1530 = vmatprep.mubr.bf16.mxu0 0
      %1531 = vmatmul.mubr.bf16.gmra.mrb[0].mxu0 %v1445
      %v1532 = vpop.f32.mrb[0].mxu0
      %v1533 = vadd.f32 0.0, %v1532
      %v1534 = vpop.f32.mrb[0].mxu0
      %v1535 = vpop.f32.mrb[0].mxu0
      %v1536 = vadd.f32 0.0, %v1535
      %v1537 = vpop.f32.mrb[0].mxu0
      %1538 = vmatprep.mubr.bf16.mxu0 0
      %1539 = vmatmul.mubr.bf16.gmra.mrb[0].mxu0 %v1447
      %v1540 = vpop.f32.mrb[0].mxu0
      %v1541 = vadd.f32 0.0, %v1540
      %v1542 = vpop.f32.mrb[0].mxu0
      %v1543 = vpop.f32.mrb[0].mxu0
      %v1544 = vadd.f32 0.0, %v1543
      %v1545 = vpop.f32.mrb[0].mxu0
      %1546 = vmatprep.mubr.bf16.mxu0 0
      %1547 = vmatmul.mubr.bf16.gmra.mrb[0].mxu0 %v1449
      %v1548 = vpop.f32.mrb[0].mxu0
      %v1549 = vadd.f32 0.0, %v1548
      %v1550 = vpop.f32.mrb[0].mxu0
      %v1551 = vpop.f32.mrb[0].mxu0
      %v1552 = vadd.f32 0.0, %v1551
      %v1553 = vpop.f32.mrb[0].mxu0
      %1554 = vmatprep.mubr.bf16.mxu0 0
      %1555 = vmatmul.mubr.bf16.gmra.mrb[0].mxu0 %v1451
      %v1556 = vpop.f32.mrb[0].mxu0
      %v1557 = vadd.f32 0.0, %v1556
      %v1558 = vpop.f32.mrb[0].mxu0
      %v1559 = vpop.f32.mrb[0].mxu0
      %v1560 = vadd.f32 0.0, %v1559
      %v1561 = vpop.f32.mrb[0].mxu0
      %1562 = vmatprep.mubr.bf16.mxu0 0
      %1563 = vmatmul.mubr.bf16.gmra.mrb[0].mxu0 %v1453
      %v1564 = vpop.f32.mrb[0].mxu0
      %v1565 = vadd.f32 0.0, %v1564
      %v1566 = vpop.f32.mrb[0].mxu0
      %v1567 = vpop.f32.mrb[0].mxu0
      %v1568 = vadd.f32 0.0, %v1567
      %v1569 = vpop.f32.mrb[0].mxu0
      %1570 = vmatprep.mubr.bf16.mxu0 0
      %1571 = vmatmul.mubr.bf16.gmra.mrb[0].mxu0 %v1455
      %v1572 = vpop.f32.mrb[0].mxu0
      %v1573 = vadd.f32 0.0, %v1572
      %v1574 = vpop.f32.mrb[0].mxu0
      %v1575 = vpop.f32.mrb[0].mxu0
      %v1576 = vadd.f32 0.0, %v1575
      %v1577 = vpop.f32.mrb[0].mxu0
      %1578 = vmatprep.mubr.bf16.mxu0 0
      %1579 = vmatmul.mubr.bf16.gmra.mrb[0].mxu0 %v1457
      %v1580 = vpop.f32.mrb[0].mxu0
      %v1581 = vadd.f32 0.0, %v1580
      %v1582 = vpop.f32.mrb[0].mxu0
      %v1583 = vpop.f32.mrb[0].mxu0
      %v1584 = vadd.f32 0.0, %v1583
      %v1585 = vpop.f32.mrb[0].mxu0
      %1586 = vmatprep.mubr.bf16.mxu0 0
      %1587 = vmatmul.mubr.bf16.gmra.mrb[0].mxu0 %v1459
      %v1588 = vpop.f32.mrb[0].mxu0
      %v1589 = vpop.f32.mrb[0].mxu0
      %v1590 = vpop.f32.mrb[0].mxu0
      %v1591 = vpop.f32.mrb[0].mxu0
      %1592 = vmatprep.mubr.bf16.mxu0 0
      %1593 = vmatmul.mubr.bf16.gmra.mrb[0].mxu0 %v1461
      %v1594 = vpop.f32.mrb[0].mxu0
      %v1595 = vpop.f32.mrb[0].mxu0
      %v1596 = vpop.f32.mrb[0].mxu0
      %v1597 = vpop.f32.mrb[0].mxu0
      %1598 = vmatprep.mubr.bf16.mxu0 0
      %1599 = vmatmul.mubr.bf16.gmra.mrb[0].mxu0 %v1463
      %v1600 = vpop.f32.mrb[0].mxu0
      %v1601 = vpop.f32.mrb[0].mxu0
      %v1602 = vpop.f32.mrb[0].mxu0
      %v1603 = vpop.f32.mrb[0].mxu0
      %1604 = vmatprep.mubr.bf16.mxu0 0
      %1605 = vmatmul.mubr.bf16.gmra.mrb[0].mxu0 %v1465
      %v1606 = vpop.f32.mrb[0].mxu0
      %v1607 = vpop.f32.mrb[0].mxu0
      %v1608 = vpop.f32.mrb[0].mxu0
      %v1609 = vpop.f32.mrb[0].mxu0
      %1610 = vmatprep.mubr.bf16.mxu0 0
      %1611 = vmatmul.mubr.bf16.gmra.mrb[0].mxu0 %v1467
      %v1612 = vpop.f32.mrb[0].mxu0
      %v1613 = vpop.f32.mrb[0].mxu0
      %v1614 = vpop.f32.mrb[0].mxu0
      %v1615 = vpop.f32.mrb[0].mxu0
      %1616 = vmatprep.mubr.bf16.mxu0 0
      %1617 = vmatmul.mubr.bf16.gmra.mrb[0].mxu0 %v1469
      %v1618 = vpop.f32.mrb[0].mxu0
      %v1619 = vpop.f32.mrb[0].mxu0
      %v1620 = vpop.f32.mrb[0].mxu0
      %v1621 = vpop.f32.mrb[0].mxu0
      %1622 = vdwg.mxu0
      %s1623 = scalar_lea.vmem %s224, 96
      %v1624 = vld [vmem:[%s1623] sm:$0xff]
      %v1625 = vld [vmem:[%s1623 + $0x8] sm:$0xff]
      %v1626 = vld [vmem:[%s1623 + $0x10] sm:$0xff]
      %v1627 = vld [vmem:[%s1623 + $0x18] sm:$0xff]
      %v1628 = vld [vmem:[%s1623 + $0x20] sm:$0xff]
      %v1629 = vld [vmem:[%s1623 + $0x28] sm:$0xff]
      %v1630 = vld [vmem:[%s1623 + $0x30] sm:$0xff]
      %v1631 = vld [vmem:[%s1623 + $0x38] sm:$0xff]
      %v1632 = vld [vmem:[%s1623 + $0x40] sm:$0xff]
      %v1633 = vld [vmem:[%s1623 + $0x48] sm:$0xff]
      %v1634 = vld [vmem:[%s1623 + $0x50] sm:$0xff]
      %v1635 = vld [vmem:[%s1623 + $0x58] sm:$0xff]
      %v1636 = vld [vmem:[%s1623 + $0x60] sm:$0xff]
      %v1637 = vld [vmem:[%s1623 + $0x68] sm:$0xff]
      %v1638 = vld [vmem:[%s1623 + $0x70] sm:$0xff]
      %v1639 = vld [vmem:[%s1623 + $0x78] sm:$0xff]
      %v1640 = vld [vmem:[%s1623 + $0x80] sm:$0xff]
      %v1641 = vld [vmem:[%s1623 + $0x88] sm:$0xff]
      %v1642 = vld [vmem:[%s1623 + $0x90] sm:$0xff]
      %v1643 = vld [vmem:[%s1623 + $0x98] sm:$0xff]
      %v1644 = vadd.f32 %v1624, %v1509
      %v1645 = vadd.f32 %v1625, %v1512
      %v1646 = vadd.f32 %v1626, %v1517
      %v1647 = vadd.f32 %v1627, %v1520
      %v1648 = vadd.f32 %v1628, %v1525
      %v1649 = vadd.f32 %v1629, %v1528
      %v1650 = vadd.f32 %v1630, %v1533
      %v1651 = vadd.f32 %v1631, %v1536
      %v1652 = vadd.f32 %v1632, %v1541
      %v1653 = vadd.f32 %v1633, %v1544
      %v1654 = vadd.f32 %v1634, %v1549
      %v1655 = vadd.f32 %v1635, %v1552
      %v1656 = vadd.f32 %v1636, %v1557
      %v1657 = vadd.f32 %v1637, %v1560
      %v1658 = vadd.f32 %v1638, %v1565
      %v1659 = vadd.f32 %v1639, %v1568
      %v1660 = vadd.f32 %v1640, %v1573
      %v1661 = vadd.f32 %v1641, %v1576
      %v1662 = vadd.f32 %v1642, %v1581
      %v1663 = vadd.f32 %v1643, %v1584
      %1664 = vst.msk [vmem:[%s1623] sm:$0xff] %vm399, %v1644
      %1665 = vst.msk [vmem:[%s1623 + $0x8] sm:$0xff] %vm399, %v1645
      %1666 = vst.msk [vmem:[%s1623 + $0x10] sm:$0xff] %vm399, %v1646
      %1667 = vst.msk [vmem:[%s1623 + $0x18] sm:$0xff] %vm399, %v1647
      %1668 = vst.msk [vmem:[%s1623 + $0x20] sm:$0xff] %vm399, %v1648
      %1669 = vst.msk [vmem:[%s1623 + $0x28] sm:$0xff] %vm399, %v1649
      %1670 = vst.msk [vmem:[%s1623 + $0x30] sm:$0xff] %vm399, %v1650
      %1671 = vst.msk [vmem:[%s1623 + $0x38] sm:$0xff] %vm399, %v1651
      %1672 = vst.msk [vmem:[%s1623 + $0x40] sm:$0xff] %vm399, %v1652
      %1673 = vst.msk [vmem:[%s1623 + $0x48] sm:$0xff] %vm399, %v1653
      %1674 = vst.msk [vmem:[%s1623 + $0x50] sm:$0xff] %vm399, %v1654
      %1675 = vst.msk [vmem:[%s1623 + $0x58] sm:$0xff] %vm399, %v1655
      %1676 = vst.msk [vmem:[%s1623 + $0x60] sm:$0xff] %vm399, %v1656
      %1677 = vst.msk [vmem:[%s1623 + $0x68] sm:$0xff] %vm399, %v1657
      %1678 = vst.msk [vmem:[%s1623 + $0x70] sm:$0xff] %vm399, %v1658
      %1679 = vst.msk [vmem:[%s1623 + $0x78] sm:$0xff] %vm399, %v1659
      %1680 = vst.msk [vmem:[%s1623 + $0x80] sm:$0xff] %vm399, %v1660
      %1681 = vst.msk [vmem:[%s1623 + $0x88] sm:$0xff] %vm399, %v1661
      %1682 = vst.msk [vmem:[%s1623 + $0x90] sm:$0xff] %vm399, %v1662
      %1683 = vst.msk [vmem:[%s1623 + $0x98] sm:$0xff] %vm399, %v1663
      %s1684 = scalar_lea.vmem %s3, 6
      %v1685 = vld [vmem:[%s1684] sm:$0x3]
      %v1687 = vsel %vm403, %v1685, 0
      %1689 = vmatprep.subr.bf16.mxu0 0
      %1690 = vmatpush1.bf16.msra.mxu0 %v1687
      %1691 = vmatprep.subr.bf16.mxu0 0
      %1692 = vmatpush1.bf16.msra.mxu0 0
      %1693 = vmatprep.subr.bf16.mxu0 0
      %1694 = vmatpush1.bf16.msra.mxu0 0
      %1695 = vmatprep.subr.bf16.mxu0 0
      %1696 = vmatpush1.bf16.msra.mxu0 0
      %1697 = vmatprep.subr.bf16.mxu0 0
      %1698 = vmatpush1.bf16.msra.mxu0 0
      %1699 = vmatprep.subr.bf16.mxu0 0
      %1700 = vmatpush1.bf16.msra.mxu0 0
      %1701 = vmatprep.subr.bf16.mxu0 0
      %1702 = vmatpush1.bf16.msra.mxu0 0
      %1703 = vmatprep.subr.bf16.mxu0 0
      %1704 = vmatpush1.bf16.msra.mxu0 0
      %1705 = vmatprep.subr.bf16.mxu0 0
      %1706 = vmatpush1.bf16.msra.mxu0 0
      %1707 = vmatprep.subr.bf16.mxu0 0
      %1708 = vmatpush1.bf16.msra.mxu0 0
      %1709 = vmatprep.subr.bf16.mxu0 0
      %1710 = vmatpush1.bf16.msra.mxu0 0
      %1711 = vmatprep.subr.bf16.mxu0 0
      %1712 = vmatpush1.bf16.msra.mxu0 0
      %1713 = vmatprep.subr.bf16.mxu0 0
      %1714 = vmatpush1.bf16.msra.mxu0 0
      %1715 = vmatprep.subr.bf16.mxu0 0
      %1716 = vmatpush1.bf16.msra.mxu0 0
      %1717 = vmatprep.subr.bf16.mxu0 0
      %1718 = vmatpush1.bf16.msra.mxu0 0
      %1719 = vmatprep.subr.bf16.mxu0 0
      %1720 = vmatpush1.bf16.msra.mxu0 0
      %1721 = vmatprep.mubr.bf16.mxu0 0
      %1722 = vmatmul.mubr.bf16.gmra.mrb[0].mxu0 %v1439
      %v1723 = vpop.f32.mrb[0].mxu0
      %v1724 = vadd.f32 0.0, %v1723
      %v1725 = vpop.f32.mrb[0].mxu0
      %v1726 = vpop.f32.mrb[0].mxu0
      %v1727 = vadd.f32 0.0, %v1726
      %v1728 = vpop.f32.mrb[0].mxu0
      %1729 = vmatprep.mubr.bf16.mxu0 0
      %1730 = vmatmul.mubr.bf16.gmra.mrb[0].mxu0 %v1441
      %v1731 = vpop.f32.mrb[0].mxu0
      %v1732 = vadd.f32 0.0, %v1731
      %v1733 = vpop.f32.mrb[0].mxu0
      %v1734 = vpop.f32.mrb[0].mxu0
      %v1735 = vadd.f32 0.0, %v1734
      %v1736 = vpop.f32.mrb[0].mxu0
      %1737 = vmatprep.mubr.bf16.mxu0 0
      %1738 = vmatmul.mubr.bf16.gmra.mrb[0].mxu0 %v1443
      %v1739 = vpop.f32.mrb[0].mxu0
      %v1740 = vadd.f32 0.0, %v1739
      %v1741 = vpop.f32.mrb[0].mxu0
      %v1742 = vpop.f32.mrb[0].mxu0
      %v1743 = vadd.f32 0.0, %v1742
      %v1744 = vpop.f32.mrb[0].mxu0
      %1745 = vmatprep.mubr.bf16.mxu0 0
      %1746 = vmatmul.mubr.bf16.gmra.mrb[0].mxu0 %v1445
      %v1747 = vpop.f32.mrb[0].mxu0
      %v1748 = vadd.f32 0.0, %v1747
      %v1749 = vpop.f32.mrb[0].mxu0
      %v1750 = vpop.f32.mrb[0].mxu0
      %v1751 = vadd.f32 0.0, %v1750
      %v1752 = vpop.f32.mrb[0].mxu0
      %1753 = vmatprep.mubr.bf16.mxu0 0
      %1754 = vmatmul.mubr.bf16.gmra.mrb[0].mxu0 %v1447
      %v1755 = vpop.f32.mrb[0].mxu0
      %v1756 = vadd.f32 0.0, %v1755
      %v1757 = vpop.f32.mrb[0].mxu0
      %v1758 = vpop.f32.mrb[0].mxu0
      %v1759 = vadd.f32 0.0, %v1758
      %v1760 = vpop.f32.mrb[0].mxu0
      %1761 = vmatprep.mubr.bf16.mxu0 0
      %1762 = vmatmul.mubr.bf16.gmra.mrb[0].mxu0 %v1449
      %v1763 = vpop.f32.mrb[0].mxu0
      %v1764 = vadd.f32 0.0, %v1763
      %v1765 = vpop.f32.mrb[0].mxu0
      %v1766 = vpop.f32.mrb[0].mxu0
      %v1767 = vadd.f32 0.0, %v1766
      %v1768 = vpop.f32.mrb[0].mxu0
      %1769 = vmatprep.mubr.bf16.mxu0 0
      %1770 = vmatmul.mubr.bf16.gmra.mrb[0].mxu0 %v1451
      %v1771 = vpop.f32.mrb[0].mxu0
      %v1772 = vadd.f32 0.0, %v1771
      %v1773 = vpop.f32.mrb[0].mxu0
      %v1774 = vpop.f32.mrb[0].mxu0
      %v1775 = vadd.f32 0.0, %v1774
      %v1776 = vpop.f32.mrb[0].mxu0
      %1777 = vmatprep.mubr.bf16.mxu0 0
      %1778 = vmatmul.mubr.bf16.gmra.mrb[0].mxu0 %v1453
      %v1779 = vpop.f32.mrb[0].mxu0
      %v1780 = vadd.f32 0.0, %v1779
      %v1781 = vpop.f32.mrb[0].mxu0
      %v1782 = vpop.f32.mrb[0].mxu0
      %v1783 = vadd.f32 0.0, %v1782
      %v1784 = vpop.f32.mrb[0].mxu0
      %1785 = vmatprep.mubr.bf16.mxu0 0
      %1786 = vmatmul.mubr.bf16.gmra.mrb[0].mxu0 %v1455
      %v1787 = vpop.f32.mrb[0].mxu0
      %v1788 = vadd.f32 0.0, %v1787
      %v1789 = vpop.f32.mrb[0].mxu0
      %v1790 = vpop.f32.mrb[0].mxu0
      %v1791 = vadd.f32 0.0, %v1790
      %v1792 = vpop.f32.mrb[0].mxu0
      %1793 = vmatprep.mubr.bf16.mxu0 0
      %1794 = vmatmul.mubr.bf16.gmra.mrb[0].mxu0 %v1457
      %v1795 = vpop.f32.mrb[0].mxu0
      %v1796 = vadd.f32 0.0, %v1795
      %v1797 = vpop.f32.mrb[0].mxu0
      %v1798 = vpop.f32.mrb[0].mxu0
      %v1799 = vadd.f32 0.0, %v1798
      %v1800 = vpop.f32.mrb[0].mxu0
      %1801 = vmatprep.mubr.bf16.mxu0 0
      %1802 = vmatmul.mubr.bf16.gmra.mrb[0].mxu0 %v1459
      %v1803 = vpop.f32.mrb[0].mxu0
      %v1804 = vadd.f32 0.0, %v1803
      %v1805 = vpop.f32.mrb[0].mxu0
      %v1806 = vpop.f32.mrb[0].mxu0
      %v1807 = vadd.f32 0.0, %v1806
      %v1808 = vpop.f32.mrb[0].mxu0
      %1809 = vmatprep.mubr.bf16.mxu0 0
      %1810 = vmatmul.mubr.bf16.gmra.mrb[0].mxu0 %v1461
      %v1811 = vpop.f32.mrb[0].mxu0
      %v1812 = vadd.f32 0.0, %v1811
      %v1813 = vpop.f32.mrb[0].mxu0
      %v1814 = vpop.f32.mrb[0].mxu0
      %v1815 = vadd.f32 0.0, %v1814
      %v1816 = vpop.f32.mrb[0].mxu0
      %1817 = vmatprep.mubr.bf16.mxu0 0
      %1818 = vmatmul.mubr.bf16.gmra.mrb[0].mxu0 %v1463
      %v1819 = vpop.f32.mrb[0].mxu0
      %v1820 = vadd.f32 0.0, %v1819
      %v1821 = vpop.f32.mrb[0].mxu0
      %v1822 = vpop.f32.mrb[0].mxu0
      %v1823 = vadd.f32 0.0, %v1822
      %v1824 = vpop.f32.mrb[0].mxu0
      %1825 = vmatprep.mubr.bf16.mxu0 0
      %1826 = vmatmul.mubr.bf16.gmra.mrb[0].mxu0 %v1465
      %v1827 = vpop.f32.mrb[0].mxu0
      %v1828 = vadd.f32 0.0, %v1827
      %v1829 = vpop.f32.mrb[0].mxu0
      %v1830 = vpop.f32.mrb[0].mxu0
      %v1831 = vadd.f32 0.0, %v1830
      %v1832 = vpop.f32.mrb[0].mxu0
      %1833 = vmatprep.mubr.bf16.mxu0 0
      %1834 = vmatmul.mubr.bf16.gmra.mrb[0].mxu0 %v1467
      %v1835 = vpop.f32.mrb[0].mxu0
      %v1836 = vadd.f32 0.0, %v1835
      %v1837 = vpop.f32.mrb[0].mxu0
      %v1838 = vpop.f32.mrb[0].mxu0
      %v1839 = vadd.f32 0.0, %v1838
      %v1840 = vpop.f32.mrb[0].mxu0
      %1841 = vmatprep.mubr.bf16.mxu0 0
      %1842 = vmatmul.mubr.bf16.gmra.mrb[0].mxu0 %v1469
      %v1843 = vpop.f32.mrb[0].mxu0
      %v1844 = vadd.f32 0.0, %v1843
      %v1845 = vpop.f32.mrb[0].mxu0
      %v1846 = vpop.f32.mrb[0].mxu0
      %v1847 = vadd.f32 0.0, %v1846
      %v1848 = vpop.f32.mrb[0].mxu0
      %1849 = vdwg.mxu0
      %v1850 = vld [vmem:[%s224] sm:$0xff]
      %v1851 = vld [vmem:[%s224 + $0x8] sm:$0xff]
      %v1852 = vld [vmem:[%s224 + $0x10] sm:$0xff]
      %v1853 = vld [vmem:[%s224 + $0x18] sm:$0xff]
      %v1854 = vld [vmem:[%s224 + $0x20] sm:$0xff]
      %v1855 = vld [vmem:[%s224 + $0x28] sm:$0xff]
      %v1856 = vld [vmem:[%s224 + $0x30] sm:$0xff]
      %v1857 = vld [vmem:[%s224 + $0x38] sm:$0xff]
      %v1858 = vld [vmem:[%s224 + $0x40] sm:$0xff]
      %v1859 = vld [vmem:[%s224 + $0x48] sm:$0xff]
      %v1860 = vld [vmem:[%s224 + $0x50] sm:$0xff]
      %v1861 = vld [vmem:[%s224 + $0x58] sm:$0xff]
      %v1862 = vld [vmem:[%s224 + $0x60] sm:$0xff]
      %v1863 = vld [vmem:[%s224 + $0x68] sm:$0xff]
      %v1864 = vld [vmem:[%s224 + $0x70] sm:$0xff]
      %v1865 = vld [vmem:[%s224 + $0x78] sm:$0xff]
      %v1866 = vld [vmem:[%s224 + $0x80] sm:$0xff]
      %v1867 = vld [vmem:[%s224 + $0x88] sm:$0xff]
      %v1868 = vld [vmem:[%s224 + $0x90] sm:$0xff]
      %v1869 = vld [vmem:[%s224 + $0x98] sm:$0xff]
      %v1870 = vld [vmem:[%s224 + $0xa0] sm:$0xff]
      %v1871 = vld [vmem:[%s224 + $0xa8] sm:$0xff]
      %v1872 = vld [vmem:[%s224 + $0xb0] sm:$0xff]
      %v1873 = vld [vmem:[%s224 + $0xb8] sm:$0xff]
      %v1874 = vld [vmem:[%s224 + $0xc0] sm:$0xff]
      %v1875 = vld [vmem:[%s224 + $0xc8] sm:$0xff]
      %v1876 = vld [vmem:[%s224 + $0xd0] sm:$0xff]
      %v1877 = vld [vmem:[%s224 + $0xd8] sm:$0xff]
      %v1878 = vld [vmem:[%s224 + $0xe0] sm:$0xff]
      %v1879 = vld [vmem:[%s224 + $0xe8] sm:$0xff]
      %v1880 = vld [vmem:[%s224 + $0xf0] sm:$0xff]
      %v1881 = vld [vmem:[%s224 + $0xf8] sm:$0xff]
      %v1882 = vadd.f32 %v1850, %v1724
      %v1883 = vadd.f32 %v1851, %v1727
      %v1884 = vadd.f32 %v1852, %v1732
      %v1885 = vadd.f32 %v1853, %v1735
      %v1886 = vadd.f32 %v1854, %v1740
      %v1887 = vadd.f32 %v1855, %v1743
      %v1888 = vadd.f32 %v1856, %v1748
      %v1889 = vadd.f32 %v1857, %v1751
      %v1890 = vadd.f32 %v1858, %v1756
      %v1891 = vadd.f32 %v1859, %v1759
      %v1892 = vadd.f32 %v1860, %v1764
      %v1893 = vadd.f32 %v1861, %v1767
      %v1894 = vadd.f32 %v1862, %v1772
      %v1895 = vadd.f32 %v1863, %v1775
      %v1896 = vadd.f32 %v1864, %v1780
      %v1897 = vadd.f32 %v1865, %v1783
      %v1898 = vadd.f32 %v1866, %v1788
      %v1899 = vadd.f32 %v1867, %v1791
      %v1900 = vadd.f32 %v1868, %v1796
      %v1901 = vadd.f32 %v1869, %v1799
      %v1902 = vadd.f32 %v1870, %v1804
      %v1903 = vadd.f32 %v1871, %v1807
      %v1904 = vadd.f32 %v1872, %v1812
      %v1905 = vadd.f32 %v1873, %v1815
      %v1906 = vadd.f32 %v1874, %v1820
      %v1907 = vadd.f32 %v1875, %v1823
      %v1908 = vadd.f32 %v1876, %v1828
      %v1909 = vadd.f32 %v1877, %v1831
      %v1910 = vadd.f32 %v1878, %v1836
      %v1911 = vadd.f32 %v1879, %v1839
      %v1912 = vadd.f32 %v1880, %v1844
      %v1913 = vadd.f32 %v1881, %v1847
      %1914 = vst.msk [vmem:[%s224] sm:$0xff] %vm399, %v1882
      %1915 = vst.msk [vmem:[%s224 + $0x8] sm:$0xff] %vm399, %v1883
      %1916 = vst.msk [vmem:[%s224 + $0x10] sm:$0xff] %vm399, %v1884
      %1917 = vst.msk [vmem:[%s224 + $0x18] sm:$0xff] %vm399, %v1885
      %1918 = vst.msk [vmem:[%s224 + $0x20] sm:$0xff] %vm399, %v1886
      %1919 = vst.msk [vmem:[%s224 + $0x28] sm:$0xff] %vm399, %v1887
      %1920 = vst.msk [vmem:[%s224 + $0x30] sm:$0xff] %vm399, %v1888
      %1921 = vst.msk [vmem:[%s224 + $0x38] sm:$0xff] %vm399, %v1889
      %1922 = vst.msk [vmem:[%s224 + $0x40] sm:$0xff] %vm399, %v1890
      %1923 = vst.msk [vmem:[%s224 + $0x48] sm:$0xff] %vm399, %v1891
      %1924 = vst.msk [vmem:[%s224 + $0x50] sm:$0xff] %vm399, %v1892
      %1925 = vst.msk [vmem:[%s224 + $0x58] sm:$0xff] %vm399, %v1893
      %1926 = vst.msk [vmem:[%s224 + $0x60] sm:$0xff] %vm399, %v1894
      %1927 = vst.msk [vmem:[%s224 + $0x68] sm:$0xff] %vm399, %v1895
      %1928 = vst.msk [vmem:[%s224 + $0x70] sm:$0xff] %vm399, %v1896
      %1929 = vst.msk [vmem:[%s224 + $0x78] sm:$0xff] %vm399, %v1897
      %1930 = vst.msk [vmem:[%s224 + $0x80] sm:$0xff] %vm399, %v1898
      %1931 = vst.msk [vmem:[%s224 + $0x88] sm:$0xff] %vm399, %v1899
      %1932 = vst.msk [vmem:[%s224 + $0x90] sm:$0xff] %vm399, %v1900
      %1933 = vst.msk [vmem:[%s224 + $0x98] sm:$0xff] %vm399, %v1901
      %1934 = vst.msk [vmem:[%s224 + $0xa0] sm:$0xff] %vm399, %v1902
      %1935 = vst.msk [vmem:[%s224 + $0xa8] sm:$0xff] %vm399, %v1903
      %1936 = vst.msk [vmem:[%s224 + $0xb0] sm:$0xff] %vm399, %v1904
      %1937 = vst.msk [vmem:[%s224 + $0xb8] sm:$0xff] %vm399, %v1905
      %1938 = vst.msk [vmem:[%s224 + $0xc0] sm:$0xff] %vm399, %v1906
      %1939 = vst.msk [vmem:[%s224 + $0xc8] sm:$0xff] %vm399, %v1907
      %1940 = vst.msk [vmem:[%s224 + $0xd0] sm:$0xff] %vm399, %v1908
      %1941 = vst.msk [vmem:[%s224 + $0xd8] sm:$0xff] %vm399, %v1909
      %1942 = vst.msk [vmem:[%s224 + $0xe0] sm:$0xff] %vm399, %v1910
      %1943 = vst.msk [vmem:[%s224 + $0xe8] sm:$0xff] %vm399, %v1911
      %1944 = vst.msk [vmem:[%s224 + $0xf0] sm:$0xff] %vm399, %v1912
      %1945 = vst.msk [vmem:[%s224 + $0xf8] sm:$0xff] %vm399, %v1913
      %s1946 = scalar_lea.vmem %s3, 10
      %v1947 = vld [vmem:[%s1946] sm:$0x3]
      %v1949 = vsel %vm403, %v1947, 0
      %1951 = vmatprep.subr.bf16.mxu0 0
      %1952 = vmatpush1.bf16.msra.mxu0 %v1949
      %1953 = vmatprep.subr.bf16.mxu0 0
      %1954 = vmatpush1.bf16.msra.mxu0 0
      %1955 = vmatprep.subr.bf16.mxu0 0
      %1956 = vmatpush1.bf16.msra.mxu0 0
      %1957 = vmatprep.subr.bf16.mxu0 0
      %1958 = vmatpush1.bf16.msra.mxu0 0
      %1959 = vmatprep.subr.bf16.mxu0 0
      %1960 = vmatpush1.bf16.msra.mxu0 0
      %1961 = vmatprep.subr.bf16.mxu0 0
      %1962 = vmatpush1.bf16.msra.mxu0 0
      %1963 = vmatprep.subr.bf16.mxu0 0
      %1964 = vmatpush1.bf16.msra.mxu0 0
      %1965 = vmatprep.subr.bf16.mxu0 0
      %1966 = vmatpush1.bf16.msra.mxu0 0
      %1967 = vmatprep.subr.bf16.mxu0 0
      %1968 = vmatpush1.bf16.msra.mxu0 0
      %1969 = vmatprep.subr.bf16.mxu0 0
      %1970 = vmatpush1.bf16.msra.mxu0 0
      %1971 = vmatprep.subr.bf16.mxu0 0
      %1972 = vmatpush1.bf16.msra.mxu0 0
      %1973 = vmatprep.subr.bf16.mxu0 0
      %1974 = vmatpush1.bf16.msra.mxu0 0
      %1975 = vmatprep.subr.bf16.mxu0 0
      %1976 = vmatpush1.bf16.msra.mxu0 0
      %1977 = vmatprep.subr.bf16.mxu0 0
      %1978 = vmatpush1.bf16.msra.mxu0 0
      %1979 = vmatprep.subr.bf16.mxu0 0
      %1980 = vmatpush1.bf16.msra.mxu0 0
      %1981 = vmatprep.subr.bf16.mxu0 0
      %1982 = vmatpush1.bf16.msra.mxu0 0
      %1983 = vmatprep.mubr.bf16.mxu0 0
      %1984 = vmatmul.mubr.bf16.gmra.mrb[0].mxu0 %v1439
      %v1985 = vpop.f32.mrb[0].mxu0
      %v1986 = vpop.f32.mrb[0].mxu0
      %v1987 = vpop.f32.mrb[0].mxu0
      %v1988 = vpop.f32.mrb[0].mxu0
      %1989 = vmatprep.mubr.bf16.mxu0 0
      %1990 = vmatmul.mubr.bf16.gmra.mrb[0].mxu0 %v1441
      %v1991 = vpop.f32.mrb[0].mxu0
      %v1992 = vpop.f32.mrb[0].mxu0
      %v1993 = vpop.f32.mrb[0].mxu0
      %v1994 = vpop.f32.mrb[0].mxu0
      %1995 = vmatprep.mubr.bf16.mxu0 0
      %1996 = vmatmul.mubr.bf16.gmra.mrb[0].mxu0 %v1443
      %v1997 = vpop.f32.mrb[0].mxu0
      %v1998 = vpop.f32.mrb[0].mxu0
      %v1999 = vpop.f32.mrb[0].mxu0
      %v2000 = vpop.f32.mrb[0].mxu0
      %2001 = vmatprep.mubr.bf16.mxu0 0
      %2002 = vmatmul.mubr.bf16.gmra.mrb[0].mxu0 %v1445
      %v2003 = vpop.f32.mrb[0].mxu0
      %v2004 = vpop.f32.mrb[0].mxu0
      %v2005 = vpop.f32.mrb[0].mxu0
      %v2006 = vpop.f32.mrb[0].mxu0
      %2007 = vmatprep.mubr.bf16.mxu0 0
      %2008 = vmatmul.mubr.bf16.gmra.mrb[0].mxu0 %v1447
      %v2009 = vpop.f32.mrb[0].mxu0
      %v2010 = vpop.f32.mrb[0].mxu0
      %v2011 = vpop.f32.mrb[0].mxu0
      %v2012 = vpop.f32.mrb[0].mxu0
      %2013 = vmatprep.mubr.bf16.mxu0 0
      %2014 = vmatmul.mubr.bf16.gmra.mrb[0].mxu0 %v1449
      %v2015 = vpop.f32.mrb[0].mxu0
      %v2016 = vpop.f32.mrb[0].mxu0
      %v2017 = vpop.f32.mrb[0].mxu0
      %v2018 = vpop.f32.mrb[0].mxu0
      %2019 = vmatprep.mubr.bf16.mxu0 0
      %2020 = vmatmul.mubr.bf16.gmra.mrb[0].mxu0 %v1451
      %v2021 = vpop.f32.mrb[0].mxu0
      %v2022 = vadd.f32 0.0, %v2021
      %v2023 = vpop.f32.mrb[0].mxu0
      %v2024 = vpop.f32.mrb[0].mxu0
      %v2025 = vadd.f32 0.0, %v2024
      %v2026 = vpop.f32.mrb[0].mxu0
      %2027 = vmatprep.mubr.bf16.mxu0 0
      %2028 = vmatmul.mubr.bf16.gmra.mrb[0].mxu0 %v1453
      %v2029 = vpop.f32.mrb[0].mxu0
      %v2030 = vadd.f32 0.0, %v2029
      %v2031 = vpop.f32.mrb[0].mxu0
      %v2032 = vpop.f32.mrb[0].mxu0
      %v2033 = vadd.f32 0.0, %v2032
      %v2034 = vpop.f32.mrb[0].mxu0
      %2035 = vmatprep.mubr.bf16.mxu0 0
      %2036 = vmatmul.mubr.bf16.gmra.mrb[0].mxu0 %v1455
      %v2037 = vpop.f32.mrb[0].mxu0
      %v2038 = vadd.f32 0.0, %v2037
      %v2039 = vpop.f32.mrb[0].mxu0
      %v2040 = vpop.f32.mrb[0].mxu0
      %v2041 = vadd.f32 0.0, %v2040
      %v2042 = vpop.f32.mrb[0].mxu0
      %2043 = vmatprep.mubr.bf16.mxu0 0
      %2044 = vmatmul.mubr.bf16.gmra.mrb[0].mxu0 %v1457
      %v2045 = vpop.f32.mrb[0].mxu0
      %v2046 = vadd.f32 0.0, %v2045
      %v2047 = vpop.f32.mrb[0].mxu0
      %v2048 = vpop.f32.mrb[0].mxu0
      %v2049 = vadd.f32 0.0, %v2048
      %v2050 = vpop.f32.mrb[0].mxu0
      %2051 = vmatprep.mubr.bf16.mxu0 0
      %2052 = vmatmul.mubr.bf16.gmra.mrb[0].mxu0 %v1459
      %v2053 = vpop.f32.mrb[0].mxu0
      %v2054 = vadd.f32 0.0, %v2053
      %v2055 = vpop.f32.mrb[0].mxu0
      %v2056 = vpop.f32.mrb[0].mxu0
      %v2057 = vadd.f32 0.0, %v2056
      %v2058 = vpop.f32.mrb[0].mxu0
      %2059 = vmatprep.mubr.bf16.mxu0 0
      %2060 = vmatmul.mubr.bf16.gmra.mrb[0].mxu0 %v1461
      %v2061 = vpop.f32.mrb[0].mxu0
      %v2062 = vadd.f32 0.0, %v2061
      %v2063 = vpop.f32.mrb[0].mxu0
      %v2064 = vpop.f32.mrb[0].mxu0
      %v2065 = vadd.f32 0.0, %v2064
      %v2066 = vpop.f32.mrb[0].mxu0
      %2067 = vmatprep.mubr.bf16.mxu0 0
      %2068 = vmatmul.mubr.bf16.gmra.mrb[0].mxu0 %v1463
      %v2069 = vpop.f32.mrb[0].mxu0
      %v2070 = vadd.f32 0.0, %v2069
      %v2071 = vpop.f32.mrb[0].mxu0
      %v2072 = vpop.f32.mrb[0].mxu0
      %v2073 = vadd.f32 0.0, %v2072
      %v2074 = vpop.f32.mrb[0].mxu0
      %2075 = vmatprep.mubr.bf16.mxu0 0
      %2076 = vmatmul.mubr.bf16.gmra.mrb[0].mxu0 %v1465
      %v2077 = vpop.f32.mrb[0].mxu0
      %v2078 = vadd.f32 0.0, %v2077
      %v2079 = vpop.f32.mrb[0].mxu0
      %v2080 = vpop.f32.mrb[0].mxu0
      %v2081 = vadd.f32 0.0, %v2080
      %v2082 = vpop.f32.mrb[0].mxu0
      %2083 = vmatprep.mubr.bf16.mxu0 0
      %2084 = vmatmul.mubr.bf16.gmra.mrb[0].mxu0 %v1467
      %v2085 = vpop.f32.mrb[0].mxu0
      %v2086 = vadd.f32 0.0, %v2085
      %v2087 = vpop.f32.mrb[0].mxu0
      %v2088 = vpop.f32.mrb[0].mxu0
      %v2089 = vadd.f32 0.0, %v2088
      %v2090 = vpop.f32.mrb[0].mxu0
      %2091 = vmatprep.mubr.bf16.mxu0 0
      %2092 = vmatmul.mubr.bf16.gmra.mrb[0].mxu0 %v1469
      %v2093 = vpop.f32.mrb[0].mxu0
      %v2094 = vadd.f32 0.0, %v2093
      %v2095 = vpop.f32.mrb[0].mxu0
      %v2096 = vpop.f32.mrb[0].mxu0
      %v2097 = vadd.f32 0.0, %v2096
      %v2098 = vpop.f32.mrb[0].mxu0
      %2099 = vdwg.mxu0
      %v2100 = vld [vmem:[%s224] sm:$0xff]
      %v2101 = vld [vmem:[%s224 + $0x8] sm:$0xff]
      %v2102 = vld [vmem:[%s224 + $0x10] sm:$0xff]
      %v2103 = vld [vmem:[%s224 + $0x18] sm:$0xff]
      %v2104 = vld [vmem:[%s224 + $0x20] sm:$0xff]
      %v2105 = vld [vmem:[%s224 + $0x28] sm:$0xff]
      %v2106 = vld [vmem:[%s224 + $0x30] sm:$0xff]
      %v2107 = vld [vmem:[%s224 + $0x38] sm:$0xff]
      %v2108 = vld [vmem:[%s224 + $0x40] sm:$0xff]
      %v2109 = vld [vmem:[%s224 + $0x48] sm:$0xff]
      %v2110 = vld [vmem:[%s224 + $0x50] sm:$0xff]
      %v2111 = vld [vmem:[%s224 + $0x58] sm:$0xff]
      %v2112 = vld [vmem:[%s224 + $0x60] sm:$0xff]
      %v2113 = vld [vmem:[%s224 + $0x68] sm:$0xff]
      %v2114 = vld [vmem:[%s224 + $0x70] sm:$0xff]
      %v2115 = vld [vmem:[%s224 + $0x78] sm:$0xff]
      %v2116 = vld [vmem:[%s224 + $0x80] sm:$0xff]
      %v2117 = vld [vmem:[%s224 + $0x88] sm:$0xff]
      %v2118 = vld [vmem:[%s224 + $0x90] sm:$0xff]
      %v2119 = vld [vmem:[%s224 + $0x98] sm:$0xff]
      %v2120 = vadd.f32 %v2100, %v2022
      %v2121 = vadd.f32 %v2101, %v2025
      %v2122 = vadd.f32 %v2102, %v2030
      %v2123 = vadd.f32 %v2103, %v2033
      %v2124 = vadd.f32 %v2104, %v2038
      %v2125 = vadd.f32 %v2105, %v2041
      %v2126 = vadd.f32 %v2106, %v2046
      %v2127 = vadd.f32 %v2107, %v2049
      %v2128 = vadd.f32 %v2108, %v2054
      %v2129 = vadd.f32 %v2109, %v2057
      %v2130 = vadd.f32 %v2110, %v2062
      %v2131 = vadd.f32 %v2111, %v2065
      %v2132 = vadd.f32 %v2112, %v2070
      %v2133 = vadd.f32 %v2113, %v2073
      %v2134 = vadd.f32 %v2114, %v2078
      %v2135 = vadd.f32 %v2115, %v2081
      %v2136 = vadd.f32 %v2116, %v2086
      %v2137 = vadd.f32 %v2117, %v2089
      %v2138 = vadd.f32 %v2118, %v2094
      %v2139 = vadd.f32 %v2119, %v2097
      %2140 = vst.msk [vmem:[%s224] sm:$0xff] %vm399, %v2120
      %2141 = vst.msk [vmem:[%s224 + $0x8] sm:$0xff] %vm399, %v2121
      %2142 = vst.msk [vmem:[%s224 + $0x10] sm:$0xff] %vm399, %v2122
      %2143 = vst.msk [vmem:[%s224 + $0x18] sm:$0xff] %vm399, %v2123
      %2144 = vst.msk [vmem:[%s224 + $0x20] sm:$0xff] %vm399, %v2124
      %2145 = vst.msk [vmem:[%s224 + $0x28] sm:$0xff] %vm399, %v2125
      %2146 = vst.msk [vmem:[%s224 + $0x30] sm:$0xff] %vm399, %v2126
      %2147 = vst.msk [vmem:[%s224 + $0x38] sm:$0xff] %vm399, %v2127
      %2148 = vst.msk [vmem:[%s224 + $0x40] sm:$0xff] %vm399, %v2128
      %2149 = vst.msk [vmem:[%s224 + $0x48] sm:$0xff] %vm399, %v2129
      %2150 = vst.msk [vmem:[%s224 + $0x50] sm:$0xff] %vm399, %v2130
      %2151 = vst.msk [vmem:[%s224 + $0x58] sm:$0xff] %vm399, %v2131
      %2152 = vst.msk [vmem:[%s224 + $0x60] sm:$0xff] %vm399, %v2132
      %2153 = vst.msk [vmem:[%s224 + $0x68] sm:$0xff] %vm399, %v2133
      %2154 = vst.msk [vmem:[%s224 + $0x70] sm:$0xff] %vm399, %v2134
      %2155 = vst.msk [vmem:[%s224 + $0x78] sm:$0xff] %vm399, %v2135
      %2156 = vst.msk [vmem:[%s224 + $0x80] sm:$0xff] %vm399, %v2136
      %2157 = vst.msk [vmem:[%s224 + $0x88] sm:$0xff] %vm399, %v2137
      %2158 = vst.msk [vmem:[%s224 + $0x90] sm:$0xff] %vm399, %v2138
      %2159 = vst.msk [vmem:[%s224 + $0x98] sm:$0xff] %vm399, %v2139
      %s2160 = scalar_lea.vmem %s3, 2
      %v2161 = vld [vmem:[%s2160] sm:$0x3]
      %v2163 = vsel %vm403, %v2161, 0
      %2165 = vmatprep.subr.bf16.mxu0 0
      %2166 = vmatpush1.bf16.msra.mxu0 %v2163
      %2167 = vmatprep.subr.bf16.mxu0 0
      %2168 = vmatpush1.bf16.msra.mxu0 0
      %2169 = vmatprep.subr.bf16.mxu0 0
      %2170 = vmatpush1.bf16.msra.mxu0 0
      %2171 = vmatprep.subr.bf16.mxu0 0
      %2172 = vmatpush1.bf16.msra.mxu0 0
      %2173 = vmatprep.subr.bf16.mxu0 0
      %2174 = vmatpush1.bf16.msra.mxu0 0
      %2175 = vmatprep.subr.bf16.mxu0 0
      %2176 = vmatpush1.bf16.msra.mxu0 0
      %2177 = vmatprep.subr.bf16.mxu0 0
      %2178 = vmatpush1.bf16.msra.mxu0 0
      %2179 = vmatprep.subr.bf16.mxu0 0
      %2180 = vmatpush1.bf16.msra.mxu0 0
      %2181 = vmatprep.subr.bf16.mxu0 0
      %2182 = vmatpush1.bf16.msra.mxu0 0
      %2183 = vmatprep.subr.bf16.mxu0 0
      %2184 = vmatpush1.bf16.msra.mxu0 0
      %2185 = vmatprep.subr.bf16.mxu0 0
      %2186 = vmatpush1.bf16.msra.mxu0 0
      %2187 = vmatprep.subr.bf16.mxu0 0
      %2188 = vmatpush1.bf16.msra.mxu0 0
      %2189 = vmatprep.subr.bf16.mxu0 0
      %2190 = vmatpush1.bf16.msra.mxu0 0
      %2191 = vmatprep.subr.bf16.mxu0 0
      %2192 = vmatpush1.bf16.msra.mxu0 0
      %2193 = vmatprep.subr.bf16.mxu0 0
      %2194 = vmatpush1.bf16.msra.mxu0 0
      %2195 = vmatprep.subr.bf16.mxu0 0
      %2196 = vmatpush1.bf16.msra.mxu0 0
      %2197 = vmatprep.mubr.bf16.mxu0 0
      %2198 = vmatmul.mubr.bf16.gmra.mrb[0].mxu0 %v453
      %v2199 = vpop.f32.mrb[0].mxu0
      %v2200 = vadd.f32 0.0, %v2199
      %v2201 = vpop.f32.mrb[0].mxu0
      %v2202 = vpop.f32.mrb[0].mxu0
      %v2203 = vadd.f32 0.0, %v2202
      %v2204 = vpop.f32.mrb[0].mxu0
      %2205 = vmatprep.mubr.bf16.mxu0 0
      %2206 = vmatmul.mubr.bf16.gmra.mrb[0].mxu0 %v456
      %v2207 = vpop.f32.mrb[0].mxu0
      %v2208 = vadd.f32 0.0, %v2207
      %v2209 = vpop.f32.mrb[0].mxu0
      %v2210 = vpop.f32.mrb[0].mxu0
      %v2211 = vadd.f32 0.0, %v2210
      %v2212 = vpop.f32.mrb[0].mxu0
      %2213 = vmatprep.mubr.bf16.mxu0 0
      %2214 = vmatmul.mubr.bf16.gmra.mrb[0].mxu0 %v459
      %v2215 = vpop.f32.mrb[0].mxu0
      %v2216 = vadd.f32 0.0, %v2215
      %v2217 = vpop.f32.mrb[0].mxu0
      %v2218 = vpop.f32.mrb[0].mxu0
      %v2219 = vadd.f32 0.0, %v2218
      %v2220 = vpop.f32.mrb[0].mxu0
      %2221 = vmatprep.mubr.bf16.mxu0 0
      %2222 = vmatmul.mubr.bf16.gmra.mrb[0].mxu0 %v462
      %v2223 = vpop.f32.mrb[0].mxu0
      %v2224 = vadd.f32 0.0, %v2223
      %v2225 = vpop.f32.mrb[0].mxu0
      %v2226 = vpop.f32.mrb[0].mxu0
      %v2227 = vadd.f32 0.0, %v2226
      %v2228 = vpop.f32.mrb[0].mxu0
      %2229 = vmatprep.mubr.bf16.mxu0 0
      %2230 = vmatmul.mubr.bf16.gmra.mrb[0].mxu0 %v465
      %v2231 = vpop.f32.mrb[0].mxu0
      %v2232 = vadd.f32 0.0, %v2231
      %v2233 = vpop.f32.mrb[0].mxu0
      %v2234 = vpop.f32.mrb[0].mxu0
      %v2235 = vadd.f32 0.0, %v2234
      %v2236 = vpop.f32.mrb[0].mxu0
      %2237 = vmatprep.mubr.bf16.mxu0 0
      %2238 = vmatmul.mubr.bf16.gmra.mrb[0].mxu0 %v468
      %v2239 = vpop.f32.mrb[0].mxu0
      %v2240 = vadd.f32 0.0, %v2239
      %v2241 = vpop.f32.mrb[0].mxu0
      %v2242 = vpop.f32.mrb[0].mxu0
      %v2243 = vadd.f32 0.0, %v2242
      %v2244 = vpop.f32.mrb[0].mxu0
      %2245 = vmatprep.mubr.bf16.mxu0 0
      %2246 = vmatmul.mubr.bf16.gmra.mrb[0].mxu0 %v471
      %v2247 = vpop.f32.mrb[0].mxu0
      %v2248 = vadd.f32 0.0, %v2247
      %v2249 = vpop.f32.mrb[0].mxu0
      %v2250 = vpop.f32.mrb[0].mxu0
      %v2251 = vadd.f32 0.0, %v2250
      %v2252 = vpop.f32.mrb[0].mxu0
      %2253 = vmatprep.mubr.bf16.mxu0 0
      %2254 = vmatmul.mubr.bf16.gmra.mrb[0].mxu0 %v474
      %v2255 = vpop.f32.mrb[0].mxu0
      %v2256 = vadd.f32 0.0, %v2255
      %v2257 = vpop.f32.mrb[0].mxu0
      %v2258 = vpop.f32.mrb[0].mxu0
      %v2259 = vadd.f32 0.0, %v2258
      %v2260 = vpop.f32.mrb[0].mxu0
      %2261 = vmatprep.mubr.bf16.mxu0 0
      %2262 = vmatmul.mubr.bf16.gmra.mrb[0].mxu0 %v477
      %v2263 = vpop.f32.mrb[0].mxu0
      %v2264 = vadd.f32 0.0, %v2263
      %v2265 = vpop.f32.mrb[0].mxu0
      %v2266 = vpop.f32.mrb[0].mxu0
      %v2267 = vadd.f32 0.0, %v2266
      %v2268 = vpop.f32.mrb[0].mxu0
      %2269 = vmatprep.mubr.bf16.mxu0 0
      %2270 = vmatmul.mubr.bf16.gmra.mrb[0].mxu0 %v480
      %v2271 = vpop.f32.mrb[0].mxu0
      %v2272 = vadd.f32 0.0, %v2271
      %v2273 = vpop.f32.mrb[0].mxu0
      %v2274 = vpop.f32.mrb[0].mxu0
      %v2275 = vadd.f32 0.0, %v2274
      %v2276 = vpop.f32.mrb[0].mxu0
      %2277 = vmatprep.mubr.bf16.mxu0 0
      %2278 = vmatmul.mubr.bf16.gmra.mrb[0].mxu0 %v483
      %v2279 = vpop.f32.mrb[0].mxu0
      %v2280 = vpop.f32.mrb[0].mxu0
      %v2281 = vpop.f32.mrb[0].mxu0
      %v2282 = vpop.f32.mrb[0].mxu0
      %2283 = vmatprep.mubr.bf16.mxu0 0
      %2284 = vmatmul.mubr.bf16.gmra.mrb[0].mxu0 %v486
      %v2285 = vpop.f32.mrb[0].mxu0
      %v2286 = vpop.f32.mrb[0].mxu0
      %v2287 = vpop.f32.mrb[0].mxu0
      %v2288 = vpop.f32.mrb[0].mxu0
      %2289 = vmatprep.mubr.bf16.mxu0 0
      %2290 = vmatmul.mubr.bf16.gmra.mrb[0].mxu0 %v489
      %v2291 = vpop.f32.mrb[0].mxu0
      %v2292 = vpop.f32.mrb[0].mxu0
      %v2293 = vpop.f32.mrb[0].mxu0
      %v2294 = vpop.f32.mrb[0].mxu0
      %2295 = vmatprep.mubr.bf16.mxu0 0
      %2296 = vmatmul.mubr.bf16.gmra.mrb[0].mxu0 %v492
      %v2297 = vpop.f32.mrb[0].mxu0
      %v2298 = vpop.f32.mrb[0].mxu0
      %v2299 = vpop.f32.mrb[0].mxu0
      %v2300 = vpop.f32.mrb[0].mxu0
      %2301 = vmatprep.mubr.bf16.mxu0 0
      %2302 = vmatmul.mubr.bf16.gmra.mrb[0].mxu0 %v495
      %v2303 = vpop.f32.mrb[0].mxu0
      %v2304 = vpop.f32.mrb[0].mxu0
      %v2305 = vpop.f32.mrb[0].mxu0
      %v2306 = vpop.f32.mrb[0].mxu0
      %2307 = vmatprep.mubr.bf16.mxu0 0
      %2308 = vmatmul.mubr.bf16.gmra.mrb[0].mxu0 %v498
      %v2309 = vpop.f32.mrb[0].mxu0
      %v2310 = vpop.f32.mrb[0].mxu0
      %v2311 = vpop.f32.mrb[0].mxu0
      %v2312 = vpop.f32.mrb[0].mxu0
      %2313 = vdwg.mxu0
      %v2314 = vld [vmem:[%s1623] sm:$0xff]
      %v2315 = vld [vmem:[%s1623 + $0x8] sm:$0xff]
      %v2316 = vld [vmem:[%s1623 + $0x10] sm:$0xff]
      %v2317 = vld [vmem:[%s1623 + $0x18] sm:$0xff]
      %v2318 = vld [vmem:[%s1623 + $0x20] sm:$0xff]
      %v2319 = vld [vmem:[%s1623 + $0x28] sm:$0xff]
      %v2320 = vld [vmem:[%s1623 + $0x30] sm:$0xff]
      %v2321 = vld [vmem:[%s1623 + $0x38] sm:$0xff]
      %v2322 = vld [vmem:[%s1623 + $0x40] sm:$0xff]
      %v2323 = vld [vmem:[%s1623 + $0x48] sm:$0xff]
      %v2324 = vld [vmem:[%s1623 + $0x50] sm:$0xff]
      %v2325 = vld [vmem:[%s1623 + $0x58] sm:$0xff]
      %v2326 = vld [vmem:[%s1623 + $0x60] sm:$0xff]
      %v2327 = vld [vmem:[%s1623 + $0x68] sm:$0xff]
      %v2328 = vld [vmem:[%s1623 + $0x70] sm:$0xff]
      %v2329 = vld [vmem:[%s1623 + $0x78] sm:$0xff]
      %v2330 = vld [vmem:[%s1623 + $0x80] sm:$0xff]
      %v2331 = vld [vmem:[%s1623 + $0x88] sm:$0xff]
      %v2332 = vld [vmem:[%s1623 + $0x90] sm:$0xff]
      %v2333 = vld [vmem:[%s1623 + $0x98] sm:$0xff]
      %v2334 = vadd.f32 %v2314, %v2200
      %v2335 = vadd.f32 %v2315, %v2203
      %v2336 = vadd.f32 %v2316, %v2208
      %v2337 = vadd.f32 %v2317, %v2211
      %v2338 = vadd.f32 %v2318, %v2216
      %v2339 = vadd.f32 %v2319, %v2219
      %v2340 = vadd.f32 %v2320, %v2224
      %v2341 = vadd.f32 %v2321, %v2227
      %v2342 = vadd.f32 %v2322, %v2232
      %v2343 = vadd.f32 %v2323, %v2235
      %v2344 = vadd.f32 %v2324, %v2240
      %v2345 = vadd.f32 %v2325, %v2243
      %v2346 = vadd.f32 %v2326, %v2248
      %v2347 = vadd.f32 %v2327, %v2251
      %v2348 = vadd.f32 %v2328, %v2256
      %v2349 = vadd.f32 %v2329, %v2259
      %v2350 = vadd.f32 %v2330, %v2264
      %v2351 = vadd.f32 %v2331, %v2267
      %v2352 = vadd.f32 %v2332, %v2272
      %v2353 = vadd.f32 %v2333, %v2275
      %2354 = vst.msk [vmem:[%s1623] sm:$0xff] %vm399, %v2334
      %2355 = vst.msk [vmem:[%s1623 + $0x8] sm:$0xff] %vm399, %v2335
      %2356 = vst.msk [vmem:[%s1623 + $0x10] sm:$0xff] %vm399, %v2336
      %2357 = vst.msk [vmem:[%s1623 + $0x18] sm:$0xff] %vm399, %v2337
      %2358 = vst.msk [vmem:[%s1623 + $0x20] sm:$0xff] %vm399, %v2338
      %2359 = vst.msk [vmem:[%s1623 + $0x28] sm:$0xff] %vm399, %v2339
      %2360 = vst.msk [vmem:[%s1623 + $0x30] sm:$0xff] %vm399, %v2340
      %2361 = vst.msk [vmem:[%s1623 + $0x38] sm:$0xff] %vm399, %v2341
      %2362 = vst.msk [vmem:[%s1623 + $0x40] sm:$0xff] %vm399, %v2342
      %2363 = vst.msk [vmem:[%s1623 + $0x48] sm:$0xff] %vm399, %v2343
      %2364 = vst.msk [vmem:[%s1623 + $0x50] sm:$0xff] %vm399, %v2344
      %2365 = vst.msk [vmem:[%s1623 + $0x58] sm:$0xff] %vm399, %v2345
      %2366 = vst.msk [vmem:[%s1623 + $0x60] sm:$0xff] %vm399, %v2346
      %2367 = vst.msk [vmem:[%s1623 + $0x68] sm:$0xff] %vm399, %v2347
      %2368 = vst.msk [vmem:[%s1623 + $0x70] sm:$0xff] %vm399, %v2348
      %2369 = vst.msk [vmem:[%s1623 + $0x78] sm:$0xff] %vm399, %v2349
      %2370 = vst.msk [vmem:[%s1623 + $0x80] sm:$0xff] %vm399, %v2350
      %2371 = vst.msk [vmem:[%s1623 + $0x88] sm:$0xff] %vm399, %v2351
      %2372 = vst.msk [vmem:[%s1623 + $0x90] sm:$0xff] %vm399, %v2352
      %2373 = vst.msk [vmem:[%s1623 + $0x98] sm:$0xff] %vm399, %v2353
      %s2374 = scalar_lea.vmem %s3, 12
      %v2375 = vld [vmem:[%s2374] sm:$0x3]
      %v2377 = vsel %vm403, %v2375, 0
      %2379 = vmatprep.subr.bf16.mxu0 0
      %2380 = vmatpush1.bf16.msra.mxu0 %v2377
      %2381 = vmatprep.subr.bf16.mxu0 0
      %2382 = vmatpush1.bf16.msra.mxu0 0
      %2383 = vmatprep.subr.bf16.mxu0 0
      %2384 = vmatpush1.bf16.msra.mxu0 0
      %2385 = vmatprep.subr.bf16.mxu0 0
      %2386 = vmatpush1.bf16.msra.mxu0 0
      %2387 = vmatprep.subr.bf16.mxu0 0
      %2388 = vmatpush1.bf16.msra.mxu0 0
      %2389 = vmatprep.subr.bf16.mxu0 0
      %2390 = vmatpush1.bf16.msra.mxu0 0
      %2391 = vmatprep.subr.bf16.mxu0 0
      %2392 = vmatpush1.bf16.msra.mxu0 0
      %2393 = vmatprep.subr.bf16.mxu0 0
      %2394 = vmatpush1.bf16.msra.mxu0 0
      %2395 = vmatprep.subr.bf16.mxu0 0
      %2396 = vmatpush1.bf16.msra.mxu0 0
      %2397 = vmatprep.subr.bf16.mxu0 0
      %2398 = vmatpush1.bf16.msra.mxu0 0
      %2399 = vmatprep.subr.bf16.mxu0 0
      %2400 = vmatpush1.bf16.msra.mxu0 0
      %2401 = vmatprep.subr.bf16.mxu0 0
      %2402 = vmatpush1.bf16.msra.mxu0 0
      %2403 = vmatprep.subr.bf16.mxu0 0
      %2404 = vmatpush1.bf16.msra.mxu0 0
      %2405 = vmatprep.subr.bf16.mxu0 0
      %2406 = vmatpush1.bf16.msra.mxu0 0
      %2407 = vmatprep.subr.bf16.mxu0 0
      %2408 = vmatpush1.bf16.msra.mxu0 0
      %2409 = vmatprep.subr.bf16.mxu0 0
      %2410 = vmatpush1.bf16.msra.mxu0 0
      %2411 = vmatprep.mubr.bf16.mxu0 0
      %2412 = vmatmul.mubr.bf16.gmra.mrb[0].mxu0 %v453
      %v2413 = vpop.f32.mrb[0].mxu0
      %v2414 = vpop.f32.mrb[0].mxu0
      %v2415 = vpop.f32.mrb[0].mxu0
      %v2416 = vpop.f32.mrb[0].mxu0
      %2417 = vmatprep.mubr.bf16.mxu0 0
      %2418 = vmatmul.mubr.bf16.gmra.mrb[0].mxu0 %v456
      %v2419 = vpop.f32.mrb[0].mxu0
      %v2420 = vpop.f32.mrb[0].mxu0
      %v2421 = vpop.f32.mrb[0].mxu0
      %v2422 = vpop.f32.mrb[0].mxu0
      %2423 = vmatprep.mubr.bf16.mxu0 0
      %2424 = vmatmul.mubr.bf16.gmra.mrb[0].mxu0 %v459
      %v2425 = vpop.f32.mrb[0].mxu0
      %v2426 = vpop.f32.mrb[0].mxu0
      %v2427 = vpop.f32.mrb[0].mxu0
      %v2428 = vpop.f32.mrb[0].mxu0
      %2429 = vmatprep.mubr.bf16.mxu0 0
      %2430 = vmatmul.mubr.bf16.gmra.mrb[0].mxu0 %v462
      %v2431 = vpop.f32.mrb[0].mxu0
      %v2432 = vpop.f32.mrb[0].mxu0
      %v2433 = vpop.f32.mrb[0].mxu0
      %v2434 = vpop.f32.mrb[0].mxu0
      %2435 = vmatprep.mubr.bf16.mxu0 0
      %2436 = vmatmul.mubr.bf16.gmra.mrb[0].mxu0 %v465
      %v2437 = vpop.f32.mrb[0].mxu0
      %v2438 = vpop.f32.mrb[0].mxu0
      %v2439 = vpop.f32.mrb[0].mxu0
      %v2440 = vpop.f32.mrb[0].mxu0
      %2441 = vmatprep.mubr.bf16.mxu0 0
      %2442 = vmatmul.mubr.bf16.gmra.mrb[0].mxu0 %v468
      %v2443 = vpop.f32.mrb[0].mxu0
      %v2444 = vpop.f32.mrb[0].mxu0
      %v2445 = vpop.f32.mrb[0].mxu0
      %v2446 = vpop.f32.mrb[0].mxu0
      %2447 = vmatprep.mubr.bf16.mxu0 0
      %2448 = vmatmul.mubr.bf16.gmra.mrb[0].mxu0 %v471
      %v2449 = vpop.f32.mrb[0].mxu0
      %v2450 = vadd.f32 0.0, %v2449
      %v2451 = vpop.f32.mrb[0].mxu0
      %v2452 = vpop.f32.mrb[0].mxu0
      %v2453 = vadd.f32 0.0, %v2452
      %v2454 = vpop.f32.mrb[0].mxu0
      %2455 = vmatprep.mubr.bf16.mxu0 0
      %2456 = vmatmul.mubr.bf16.gmra.mrb[0].mxu0 %v474
      %v2457 = vpop.f32.mrb[0].mxu0
      %v2458 = vadd.f32 0.0, %v2457
      %v2459 = vpop.f32.mrb[0].mxu0
      %v2460 = vpop.f32.mrb[0].mxu0
      %v2461 = vadd.f32 0.0, %v2460
      %v2462 = vpop.f32.mrb[0].mxu0
      %2463 = vmatprep.mubr.bf16.mxu0 0
      %2464 = vmatmul.mubr.bf16.gmra.mrb[0].mxu0 %v477
      %v2465 = vpop.f32.mrb[0].mxu0
      %v2466 = vadd.f32 0.0, %v2465
      %v2467 = vpop.f32.mrb[0].mxu0
      %v2468 = vpop.f32.mrb[0].mxu0
      %v2469 = vadd.f32 0.0, %v2468
      %v2470 = vpop.f32.mrb[0].mxu0
      %2471 = vmatprep.mubr.bf16.mxu0 0
      %2472 = vmatmul.mubr.bf16.gmra.mrb[0].mxu0 %v480
      %v2473 = vpop.f32.mrb[0].mxu0
      %v2474 = vadd.f32 0.0, %v2473
      %v2475 = vpop.f32.mrb[0].mxu0
      %v2476 = vpop.f32.mrb[0].mxu0
      %v2477 = vadd.f32 0.0, %v2476
      %v2478 = vpop.f32.mrb[0].mxu0
      %2479 = vmatprep.mubr.bf16.mxu0 0
      %2480 = vmatmul.mubr.bf16.gmra.mrb[0].mxu0 %v483
      %v2481 = vpop.f32.mrb[0].mxu0
      %v2482 = vadd.f32 0.0, %v2481
      %v2483 = vpop.f32.mrb[0].mxu0
      %v2484 = vpop.f32.mrb[0].mxu0
      %v2485 = vadd.f32 0.0, %v2484
      %v2486 = vpop.f32.mrb[0].mxu0
      %2487 = vmatprep.mubr.bf16.mxu0 0
      %2488 = vmatmul.mubr.bf16.gmra.mrb[0].mxu0 %v486
      %v2489 = vpop.f32.mrb[0].mxu0
      %v2490 = vadd.f32 0.0, %v2489
      %v2491 = vpop.f32.mrb[0].mxu0
      %v2492 = vpop.f32.mrb[0].mxu0
      %v2493 = vadd.f32 0.0, %v2492
      %v2494 = vpop.f32.mrb[0].mxu0
      %2495 = vmatprep.mubr.bf16.mxu0 0
      %2496 = vmatmul.mubr.bf16.gmra.mrb[0].mxu0 %v489
      %v2497 = vpop.f32.mrb[0].mxu0
      %v2498 = vadd.f32 0.0, %v2497
      %v2499 = vpop.f32.mrb[0].mxu0
      %v2500 = vpop.f32.mrb[0].mxu0
      %v2501 = vadd.f32 0.0, %v2500
      %v2502 = vpop.f32.mrb[0].mxu0
      %2503 = vmatprep.mubr.bf16.mxu0 0
      %2504 = vmatmul.mubr.bf16.gmra.mrb[0].mxu0 %v492
      %v2505 = vpop.f32.mrb[0].mxu0
      %v2506 = vadd.f32 0.0, %v2505
      %v2507 = vpop.f32.mrb[0].mxu0
      %v2508 = vpop.f32.mrb[0].mxu0
      %v2509 = vadd.f32 0.0, %v2508
      %v2510 = vpop.f32.mrb[0].mxu0
      %2511 = vmatprep.mubr.bf16.mxu0 0
      %2512 = vmatmul.mubr.bf16.gmra.mrb[0].mxu0 %v495
      %v2513 = vpop.f32.mrb[0].mxu0
      %v2514 = vadd.f32 0.0, %v2513
      %v2515 = vpop.f32.mrb[0].mxu0
      %v2516 = vpop.f32.mrb[0].mxu0
      %v2517 = vadd.f32 0.0, %v2516
      %v2518 = vpop.f32.mrb[0].mxu0
      %2519 = vmatprep.mubr.bf16.mxu0 0
      %2520 = vmatmul.mubr.bf16.gmra.mrb[0].mxu0 %v498
      %v2521 = vpop.f32.mrb[0].mxu0
      %v2522 = vadd.f32 0.0, %v2521
      %v2523 = vpop.f32.mrb[0].mxu0
      %v2524 = vpop.f32.mrb[0].mxu0
      %v2525 = vadd.f32 0.0, %v2524
      %v2526 = vpop.f32.mrb[0].mxu0
      %2527 = vdwg.mxu0
      %v2528 = vld [vmem:[%s224] sm:$0xff]
      %v2529 = vld [vmem:[%s224 + $0x8] sm:$0xff]
      %v2530 = vld [vmem:[%s224 + $0x10] sm:$0xff]
      %v2531 = vld [vmem:[%s224 + $0x18] sm:$0xff]
      %v2532 = vld [vmem:[%s224 + $0x20] sm:$0xff]
      %v2533 = vld [vmem:[%s224 + $0x28] sm:$0xff]
      %v2534 = vld [vmem:[%s224 + $0x30] sm:$0xff]
      %v2535 = vld [vmem:[%s224 + $0x38] sm:$0xff]
      %v2536 = vld [vmem:[%s224 + $0x40] sm:$0xff]
      %v2537 = vld [vmem:[%s224 + $0x48] sm:$0xff]
      %v2538 = vld [vmem:[%s224 + $0x50] sm:$0xff]
      %v2539 = vld [vmem:[%s224 + $0x58] sm:$0xff]
      %v2540 = vld [vmem:[%s224 + $0x60] sm:$0xff]
      %v2541 = vld [vmem:[%s224 + $0x68] sm:$0xff]
      %v2542 = vld [vmem:[%s224 + $0x70] sm:$0xff]
      %v2543 = vld [vmem:[%s224 + $0x78] sm:$0xff]
      %v2544 = vld [vmem:[%s224 + $0x80] sm:$0xff]
      %v2545 = vld [vmem:[%s224 + $0x88] sm:$0xff]
      %v2546 = vld [vmem:[%s224 + $0x90] sm:$0xff]
      %v2547 = vld [vmem:[%s224 + $0x98] sm:$0xff]
      %v2548 = vadd.f32 %v2528, %v2450
      %v2549 = vadd.f32 %v2529, %v2453
      %v2550 = vadd.f32 %v2530, %v2458
      %v2551 = vadd.f32 %v2531, %v2461
      %v2552 = vadd.f32 %v2532, %v2466
      %v2553 = vadd.f32 %v2533, %v2469
      %v2554 = vadd.f32 %v2534, %v2474
      %v2555 = vadd.f32 %v2535, %v2477
      %v2556 = vadd.f32 %v2536, %v2482
      %v2557 = vadd.f32 %v2537, %v2485
      %v2558 = vadd.f32 %v2538, %v2490
      %v2559 = vadd.f32 %v2539, %v2493
      %v2560 = vadd.f32 %v2540, %v2498
      %v2561 = vadd.f32 %v2541, %v2501
      %v2562 = vadd.f32 %v2542, %v2506
      %v2563 = vadd.f32 %v2543, %v2509
      %v2564 = vadd.f32 %v2544, %v2514
      %v2565 = vadd.f32 %v2545, %v2517
      %v2566 = vadd.f32 %v2546, %v2522
      %v2567 = vadd.f32 %v2547, %v2525
      %2568 = vst.msk [vmem:[%s224] sm:$0xff] %vm399, %v2548
      %2569 = vst.msk [vmem:[%s224 + $0x8] sm:$0xff] %vm399, %v2549
      %2570 = vst.msk [vmem:[%s224 + $0x10] sm:$0xff] %vm399, %v2550
      %2571 = vst.msk [vmem:[%s224 + $0x18] sm:$0xff] %vm399, %v2551
      %2572 = vst.msk [vmem:[%s224 + $0x20] sm:$0xff] %vm399, %v2552
      %2573 = vst.msk [vmem:[%s224 + $0x28] sm:$0xff] %vm399, %v2553
      %2574 = vst.msk [vmem:[%s224 + $0x30] sm:$0xff] %vm399, %v2554
      %2575 = vst.msk [vmem:[%s224 + $0x38] sm:$0xff] %vm399, %v2555
      %2576 = vst.msk [vmem:[%s224 + $0x40] sm:$0xff] %vm399, %v2556
      %2577 = vst.msk [vmem:[%s224 + $0x48] sm:$0xff] %vm399, %v2557
      %2578 = vst.msk [vmem:[%s224 + $0x50] sm:$0xff] %vm399, %v2558
      %2579 = vst.msk [vmem:[%s224 + $0x58] sm:$0xff] %vm399, %v2559
      %2580 = vst.msk [vmem:[%s224 + $0x60] sm:$0xff] %vm399, %v2560
      %2581 = vst.msk [vmem:[%s224 + $0x68] sm:$0xff] %vm399, %v2561
      %2582 = vst.msk [vmem:[%s224 + $0x70] sm:$0xff] %vm399, %v2562
      %2583 = vst.msk [vmem:[%s224 + $0x78] sm:$0xff] %vm399, %v2563
      %2584 = vst.msk [vmem:[%s224 + $0x80] sm:$0xff] %vm399, %v2564
      %2585 = vst.msk [vmem:[%s224 + $0x88] sm:$0xff] %vm399, %v2565
      %2586 = vst.msk [vmem:[%s224 + $0x90] sm:$0xff] %vm399, %v2566
      %2587 = vst.msk [vmem:[%s224 + $0x98] sm:$0xff] %vm399, %v2567
      %s2588 = scalar_lea.vmem %s3, 18
      %v2589 = vld [vmem:[%s2588] sm:$0x3]
      %v2591 = vsel %vm403, %v2589, 0
      %2593 = vmatprep.subr.bf16.mxu0 0
      %2594 = vmatpush1.bf16.msra.mxu0 %v2591
      %2595 = vmatprep.subr.bf16.mxu0 0
      %2596 = vmatpush1.bf16.msra.mxu0 0
      %2597 = vmatprep.subr.bf16.mxu0 0
      %2598 = vmatpush1.bf16.msra.mxu0 0
      %2599 = vmatprep.subr.bf16.mxu0 0
      %2600 = vmatpush1.bf16.msra.mxu0 0
      %2601 = vmatprep.subr.bf16.mxu0 0
      %2602 = vmatpush1.bf16.msra.mxu0 0
      %2603 = vmatprep.subr.bf16.mxu0 0
      %2604 = vmatpush1.bf16.msra.mxu0 0
      %2605 = vmatprep.subr.bf16.mxu0 0
      %2606 = vmatpush1.bf16.msra.mxu0 0
      %2607 = vmatprep.subr.bf16.mxu0 0
      %2608 = vmatpush1.bf16.msra.mxu0 0
      %2609 = vmatprep.subr.bf16.mxu0 0
      %2610 = vmatpush1.bf16.msra.mxu0 0
      %2611 = vmatprep.subr.bf16.mxu0 0
      %2612 = vmatpush1.bf16.msra.mxu0 0
      %2613 = vmatprep.subr.bf16.mxu0 0
      %2614 = vmatpush1.bf16.msra.mxu0 0
      %2615 = vmatprep.subr.bf16.mxu0 0
      %2616 = vmatpush1.bf16.msra.mxu0 0
      %2617 = vmatprep.subr.bf16.mxu0 0
      %2618 = vmatpush1.bf16.msra.mxu0 0
      %2619 = vmatprep.subr.bf16.mxu0 0
      %2620 = vmatpush1.bf16.msra.mxu0 0
      %2621 = vmatprep.subr.bf16.mxu0 0
      %2622 = vmatpush1.bf16.msra.mxu0 0
      %2623 = vmatprep.subr.bf16.mxu0 0
      %2624 = vmatpush1.bf16.msra.mxu0 0
      %2625 = vmatprep.mubr.bf16.mxu0 0
      %2626 = vmatmul.mubr.bf16.gmra.mrb[0].mxu0 %v453
      %v2627 = vpop.f32.mrb[0].mxu0
      %v2628 = vadd.f32 0.0, %v2627
      %v2629 = vpop.f32.mrb[0].mxu0
      %v2630 = vpop.f32.mrb[0].mxu0
      %v2631 = vadd.f32 0.0, %v2630
      %v2632 = vpop.f32.mrb[0].mxu0
      %2633 = vmatprep.mubr.bf16.mxu0 0
      %2634 = vmatmul.mubr.bf16.gmra.mrb[0].mxu0 %v456
      %v2635 = vpop.f32.mrb[0].mxu0
      %v2636 = vadd.f32 0.0, %v2635
      %v2637 = vpop.f32.mrb[0].mxu0
      %v2638 = vpop.f32.mrb[0].mxu0
      %v2639 = vadd.f32 0.0, %v2638
      %v2640 = vpop.f32.mrb[0].mxu0
      %2641 = vmatprep.mubr.bf16.mxu0 0
      %2642 = vmatmul.mubr.bf16.gmra.mrb[0].mxu0 %v459
      %v2643 = vpop.f32.mrb[0].mxu0
      %v2644 = vadd.f32 0.0, %v2643
      %v2645 = vpop.f32.mrb[0].mxu0
      %v2646 = vpop.f32.mrb[0].mxu0
      %v2647 = vadd.f32 0.0, %v2646
      %v2648 = vpop.f32.mrb[0].mxu0
      %2649 = vmatprep.mubr.bf16.mxu0 0
      %2650 = vmatmul.mubr.bf16.gmra.mrb[0].mxu0 %v462
      %v2651 = vpop.f32.mrb[0].mxu0
      %v2652 = vadd.f32 0.0, %v2651
      %v2653 = vpop.f32.mrb[0].mxu0
      %v2654 = vpop.f32.mrb[0].mxu0
      %v2655 = vadd.f32 0.0, %v2654
      %v2656 = vpop.f32.mrb[0].mxu0
      %2657 = vmatprep.mubr.bf16.mxu0 0
      %2658 = vmatmul.mubr.bf16.gmra.mrb[0].mxu0 %v465
      %v2659 = vpop.f32.mrb[0].mxu0
      %v2660 = vpop.f32.mrb[0].mxu0
      %v2661 = vpop.f32.mrb[0].mxu0
      %v2662 = vpop.f32.mrb[0].mxu0
      %2663 = vmatprep.mubr.bf16.mxu0 0
      %2664 = vmatmul.mubr.bf16.gmra.mrb[0].mxu0 %v468
      %v2665 = vpop.f32.mrb[0].mxu0
      %v2666 = vpop.f32.mrb[0].mxu0
      %v2667 = vpop.f32.mrb[0].mxu0
      %v2668 = vpop.f32.mrb[0].mxu0
      %2669 = vmatprep.mubr.bf16.mxu0 0
      %2670 = vmatmul.mubr.bf16.gmra.mrb[0].mxu0 %v471
      %v2671 = vpop.f32.mrb[0].mxu0
      %v2672 = vpop.f32.mrb[0].mxu0
      %v2673 = vpop.f32.mrb[0].mxu0
      %v2674 = vpop.f32.mrb[0].mxu0
      %2675 = vmatprep.mubr.bf16.mxu0 0
      %2676 = vmatmul.mubr.bf16.gmra.mrb[0].mxu0 %v474
      %v2677 = vpop.f32.mrb[0].mxu0
      %v2678 = vpop.f32.mrb[0].mxu0
      %v2679 = vpop.f32.mrb[0].mxu0
      %v2680 = vpop.f32.mrb[0].mxu0
      %2681 = vmatprep.mubr.bf16.mxu0 0
      %2682 = vmatmul.mubr.bf16.gmra.mrb[0].mxu0 %v477
      %v2683 = vpop.f32.mrb[0].mxu0
      %v2684 = vpop.f32.mrb[0].mxu0
      %v2685 = vpop.f32.mrb[0].mxu0
      %v2686 = vpop.f32.mrb[0].mxu0
      %2687 = vmatprep.mubr.bf16.mxu0 0
      %2688 = vmatmul.mubr.bf16.gmra.mrb[0].mxu0 %v480
      %v2689 = vpop.f32.mrb[0].mxu0
      %v2690 = vpop.f32.mrb[0].mxu0
      %v2691 = vpop.f32.mrb[0].mxu0
      %v2692 = vpop.f32.mrb[0].mxu0
      %2693 = vmatprep.mubr.bf16.mxu0 0
      %2694 = vmatmul.mubr.bf16.gmra.mrb[0].mxu0 %v483
      %v2695 = vpop.f32.mrb[0].mxu0
      %v2696 = vpop.f32.mrb[0].mxu0
      %v2697 = vpop.f32.mrb[0].mxu0
      %v2698 = vpop.f32.mrb[0].mxu0
      %2699 = vmatprep.mubr.bf16.mxu0 0
      %2700 = vmatmul.mubr.bf16.gmra.mrb[0].mxu0 %v486
      %v2701 = vpop.f32.mrb[0].mxu0
      %v2702 = vpop.f32.mrb[0].mxu0
      %v2703 = vpop.f32.mrb[0].mxu0
      %v2704 = vpop.f32.mrb[0].mxu0
      %2705 = vmatprep.mubr.bf16.mxu0 0
      %2706 = vmatmul.mubr.bf16.gmra.mrb[0].mxu0 %v489
      %v2707 = vpop.f32.mrb[0].mxu0
      %v2708 = vpop.f32.mrb[0].mxu0
      %v2709 = vpop.f32.mrb[0].mxu0
      %v2710 = vpop.f32.mrb[0].mxu0
      %2711 = vmatprep.mubr.bf16.mxu0 0
      %2712 = vmatmul.mubr.bf16.gmra.mrb[0].mxu0 %v492
      %v2713 = vpop.f32.mrb[0].mxu0
      %v2714 = vpop.f32.mrb[0].mxu0
      %v2715 = vpop.f32.mrb[0].mxu0
      %v2716 = vpop.f32.mrb[0].mxu0
      %2717 = vmatprep.mubr.bf16.mxu0 0
      %2718 = vmatmul.mubr.bf16.gmra.mrb[0].mxu0 %v495
      %v2719 = vpop.f32.mrb[0].mxu0
      %v2720 = vpop.f32.mrb[0].mxu0
      %v2721 = vpop.f32.mrb[0].mxu0
      %v2722 = vpop.f32.mrb[0].mxu0
      %2723 = vmatprep.mubr.bf16.mxu0 0
      %2724 = vmatmul.mubr.bf16.gmra.mrb[0].mxu0 %v498
      %v2725 = vpop.f32.mrb[0].mxu0
      %v2726 = vpop.f32.mrb[0].mxu0
      %v2727 = vpop.f32.mrb[0].mxu0
      %v2728 = vpop.f32.mrb[0].mxu0
      %2729 = vdwg.mxu0
      %v2730 = vld [vmem:[%s936] sm:$0xff]
      %v2731 = vld [vmem:[%s936 + $0x8] sm:$0xff]
      %v2732 = vld [vmem:[%s936 + $0x10] sm:$0xff]
      %v2733 = vld [vmem:[%s936 + $0x18] sm:$0xff]
      %v2734 = vld [vmem:[%s936 + $0x20] sm:$0xff]
      %v2735 = vld [vmem:[%s936 + $0x28] sm:$0xff]
      %v2736 = vld [vmem:[%s936 + $0x30] sm:$0xff]
      %v2737 = vld [vmem:[%s936 + $0x38] sm:$0xff]
      %v2738 = vadd.f32 %v2730, %v2628
      %v2739 = vadd.f32 %v2731, %v2631
      %v2740 = vadd.f32 %v2732, %v2636
      %v2741 = vadd.f32 %v2733, %v2639
      %v2742 = vadd.f32 %v2734, %v2644
      %v2743 = vadd.f32 %v2735, %v2647
      %v2744 = vadd.f32 %v2736, %v2652
      %v2745 = vadd.f32 %v2737, %v2655
      %2746 = vst.msk [vmem:[%s936] sm:$0xff] %vm399, %v2738
      %2747 = vst.msk [vmem:[%s936 + $0x8] sm:$0xff] %vm399, %v2739
      %2748 = vst.msk [vmem:[%s936 + $0x10] sm:$0xff] %vm399, %v2740
      %2749 = vst.msk [vmem:[%s936 + $0x18] sm:$0xff] %vm399, %v2741
      %2750 = vst.msk [vmem:[%s936 + $0x20] sm:$0xff] %vm399, %v2742
      %2751 = vst.msk [vmem:[%s936 + $0x28] sm:$0xff] %vm399, %v2743
      %2752 = vst.msk [vmem:[%s936 + $0x30] sm:$0xff] %vm399, %v2744
      %2753 = vst.msk [vmem:[%s936 + $0x38] sm:$0xff] %vm399, %v2745
      %s2754 = scalar_lea.vmem %s3, 28
      %v2755 = vld [vmem:[%s2754] sm:$0x3]
      %v2757 = vsel %vm403, %v2755, 0
      %2759 = vmatprep.subr.bf16.mxu0 0
      %2760 = vmatpush1.bf16.msra.mxu0 %v2757
      %2761 = vmatprep.subr.bf16.mxu0 0
      %2762 = vmatpush1.bf16.msra.mxu0 0
      %2763 = vmatprep.subr.bf16.mxu0 0
      %2764 = vmatpush1.bf16.msra.mxu0 0
      %2765 = vmatprep.subr.bf16.mxu0 0
      %2766 = vmatpush1.bf16.msra.mxu0 0
      %2767 = vmatprep.subr.bf16.mxu0 0
      %2768 = vmatpush1.bf16.msra.mxu0 0
      %2769 = vmatprep.subr.bf16.mxu0 0
      %2770 = vmatpush1.bf16.msra.mxu0 0
      %2771 = vmatprep.subr.bf16.mxu0 0
      %2772 = vmatpush1.bf16.msra.mxu0 0
      %2773 = vmatprep.subr.bf16.mxu0 0
      %2774 = vmatpush1.bf16.msra.mxu0 0
      %2775 = vmatprep.subr.bf16.mxu0 0
      %2776 = vmatpush1.bf16.msra.mxu0 0
      %2777 = vmatprep.subr.bf16.mxu0 0
      %2778 = vmatpush1.bf16.msra.mxu0 0
      %2779 = vmatprep.subr.bf16.mxu0 0
      %2780 = vmatpush1.bf16.msra.mxu0 0
      %2781 = vmatprep.subr.bf16.mxu0 0
      %2782 = vmatpush1.bf16.msra.mxu0 0
      %2783 = vmatprep.subr.bf16.mxu0 0
      %2784 = vmatpush1.bf16.msra.mxu0 0
      %2785 = vmatprep.subr.bf16.mxu0 0
      %2786 = vmatpush1.bf16.msra.mxu0 0
      %2787 = vmatprep.subr.bf16.mxu0 0
      %2788 = vmatpush1.bf16.msra.mxu0 0
      %2789 = vmatprep.subr.bf16.mxu0 0
      %2790 = vmatpush1.bf16.msra.mxu0 0
      %2791 = vmatprep.mubr.bf16.mxu0 0
      %2792 = vmatmul.mubr.bf16.gmra.mrb[0].mxu0 %v453
      %v2793 = vpop.f32.mrb[0].mxu0
      %v2794 = vpop.f32.mrb[0].mxu0
      %v2795 = vpop.f32.mrb[0].mxu0
      %v2796 = vpop.f32.mrb[0].mxu0
      %2797 = vmatprep.mubr.bf16.mxu0 0
      %2798 = vmatmul.mubr.bf16.gmra.mrb[0].mxu0 %v456
      %v2799 = vpop.f32.mrb[0].mxu0
      %v2800 = vpop.f32.mrb[0].mxu0
      %v2801 = vpop.f32.mrb[0].mxu0
      %v2802 = vpop.f32.mrb[0].mxu0
      %2803 = vmatprep.mubr.bf16.mxu0 0
      %2804 = vmatmul.mubr.bf16.gmra.mrb[0].mxu0 %v459
      %v2805 = vpop.f32.mrb[0].mxu0
      %v2806 = vpop.f32.mrb[0].mxu0
      %v2807 = vpop.f32.mrb[0].mxu0
      %v2808 = vpop.f32.mrb[0].mxu0
      %2809 = vmatprep.mubr.bf16.mxu0 0
      %2810 = vmatmul.mubr.bf16.gmra.mrb[0].mxu0 %v462
      %v2811 = vpop.f32.mrb[0].mxu0
      %v2812 = vpop.f32.mrb[0].mxu0
      %v2813 = vpop.f32.mrb[0].mxu0
      %v2814 = vpop.f32.mrb[0].mxu0
      %2815 = vmatprep.mubr.bf16.mxu0 0
      %2816 = vmatmul.mubr.bf16.gmra.mrb[0].mxu0 %v465
      %v2817 = vpop.f32.mrb[0].mxu0
      %v2818 = vpop.f32.mrb[0].mxu0
      %v2819 = vpop.f32.mrb[0].mxu0
      %v2820 = vpop.f32.mrb[0].mxu0
      %2821 = vmatprep.mubr.bf16.mxu0 0
      %2822 = vmatmul.mubr.bf16.gmra.mrb[0].mxu0 %v468
      %v2823 = vpop.f32.mrb[0].mxu0
      %v2824 = vpop.f32.mrb[0].mxu0
      %v2825 = vpop.f32.mrb[0].mxu0
      %v2826 = vpop.f32.mrb[0].mxu0
      %2827 = vmatprep.mubr.bf16.mxu0 0
      %2828 = vmatmul.mubr.bf16.gmra.mrb[0].mxu0 %v471
      %v2829 = vpop.f32.mrb[0].mxu0
      %v2830 = vpop.f32.mrb[0].mxu0
      %v2831 = vpop.f32.mrb[0].mxu0
      %v2832 = vpop.f32.mrb[0].mxu0
      %2833 = vmatprep.mubr.bf16.mxu0 0
      %2834 = vmatmul.mubr.bf16.gmra.mrb[0].mxu0 %v474
      %v2835 = vpop.f32.mrb[0].mxu0
      %v2836 = vpop.f32.mrb[0].mxu0
      %v2837 = vpop.f32.mrb[0].mxu0
      %v2838 = vpop.f32.mrb[0].mxu0
      %2839 = vmatprep.mubr.bf16.mxu0 0
      %2840 = vmatmul.mubr.bf16.gmra.mrb[0].mxu0 %v477
      %v2841 = vpop.f32.mrb[0].mxu0
      %v2842 = vpop.f32.mrb[0].mxu0
      %v2843 = vpop.f32.mrb[0].mxu0
      %v2844 = vpop.f32.mrb[0].mxu0
      %2845 = vmatprep.mubr.bf16.mxu0 0
      %2846 = vmatmul.mubr.bf16.gmra.mrb[0].mxu0 %v480
      %v2847 = vpop.f32.mrb[0].mxu0
      %v2848 = vpop.f32.mrb[0].mxu0
      %v2849 = vpop.f32.mrb[0].mxu0
      %v2850 = vpop.f32.mrb[0].mxu0
      %2851 = vmatprep.mubr.bf16.mxu0 0
      %2852 = vmatmul.mubr.bf16.gmra.mrb[0].mxu0 %v483
      %v2853 = vpop.f32.mrb[0].mxu0
      %v2854 = vpop.f32.mrb[0].mxu0
      %v2855 = vpop.f32.mrb[0].mxu0
      %v2856 = vpop.f32.mrb[0].mxu0
      %2857 = vmatprep.mubr.bf16.mxu0 0
      %2858 = vmatmul.mubr.bf16.gmra.mrb[0].mxu0 %v486
      %v2859 = vpop.f32.mrb[0].mxu0
      %v2860 = vpop.f32.mrb[0].mxu0
      %v2861 = vpop.f32.mrb[0].mxu0
      %v2862 = vpop.f32.mrb[0].mxu0
      %2863 = vmatprep.mubr.bf16.mxu0 0
      %2864 = vmatmul.mubr.bf16.gmra.mrb[0].mxu0 %v489
      %v2865 = vpop.f32.mrb[0].mxu0
      %v2866 = vadd.f32 0.0, %v2865
      %v2867 = vpop.f32.mrb[0].mxu0
      %v2868 = vpop.f32.mrb[0].mxu0
      %v2869 = vadd.f32 0.0, %v2868
      %v2870 = vpop.f32.mrb[0].mxu0
      %2871 = vmatprep.mubr.bf16.mxu0 0
      %2872 = vmatmul.mubr.bf16.gmra.mrb[0].mxu0 %v492
      %v2873 = vpop.f32.mrb[0].mxu0
      %v2874 = vadd.f32 0.0, %v2873
      %v2875 = vpop.f32.mrb[0].mxu0
      %v2876 = vpop.f32.mrb[0].mxu0
      %v2877 = vadd.f32 0.0, %v2876
      %v2878 = vpop.f32.mrb[0].mxu0
      %2879 = vmatprep.mubr.bf16.mxu0 0
      %2880 = vmatmul.mubr.bf16.gmra.mrb[0].mxu0 %v495
      %v2881 = vpop.f32.mrb[0].mxu0
      %v2882 = vadd.f32 0.0, %v2881
      %v2883 = vpop.f32.mrb[0].mxu0
      %v2884 = vpop.f32.mrb[0].mxu0
      %v2885 = vadd.f32 0.0, %v2884
      %v2886 = vpop.f32.mrb[0].mxu0
      %2887 = vmatprep.mubr.bf16.mxu0 0
      %2888 = vmatmul.mubr.bf16.gmra.mrb[0].mxu0 %v498
      %v2889 = vpop.f32.mrb[0].mxu0
      %v2890 = vadd.f32 0.0, %v2889
      %v2891 = vpop.f32.mrb[0].mxu0
      %v2892 = vpop.f32.mrb[0].mxu0
      %v2893 = vadd.f32 0.0, %v2892
      %v2894 = vpop.f32.mrb[0].mxu0
      %2895 = vdwg.mxu0
      %v2896 = vld [vmem:[%s224] sm:$0xff]
      %v2897 = vld [vmem:[%s224 + $0x8] sm:$0xff]
      %v2898 = vld [vmem:[%s224 + $0x10] sm:$0xff]
      %v2899 = vld [vmem:[%s224 + $0x18] sm:$0xff]
      %v2900 = vld [vmem:[%s224 + $0x20] sm:$0xff]
      %v2901 = vld [vmem:[%s224 + $0x28] sm:$0xff]
      %v2902 = vld [vmem:[%s224 + $0x30] sm:$0xff]
      %v2903 = vld [vmem:[%s224 + $0x38] sm:$0xff]
      %v2904 = vadd.f32 %v2896, %v2866
      %v2905 = vadd.f32 %v2897, %v2869
      %v2906 = vadd.f32 %v2898, %v2874
      %v2907 = vadd.f32 %v2899, %v2877
      %v2908 = vadd.f32 %v2900, %v2882
      %v2909 = vadd.f32 %v2901, %v2885
      %v2910 = vadd.f32 %v2902, %v2890
      %v2911 = vadd.f32 %v2903, %v2893
      %2912 = vst.msk [vmem:[%s224] sm:$0xff] %vm399, %v2904
      %2913 = vst.msk [vmem:[%s224 + $0x8] sm:$0xff] %vm399, %v2905
      %2914 = vst.msk [vmem:[%s224 + $0x10] sm:$0xff] %vm399, %v2906
      %2915 = vst.msk [vmem:[%s224 + $0x18] sm:$0xff] %vm399, %v2907
      %2916 = vst.msk [vmem:[%s224 + $0x20] sm:$0xff] %vm399, %v2908
      %2917 = vst.msk [vmem:[%s224 + $0x28] sm:$0xff] %vm399, %v2909
      %2918 = vst.msk [vmem:[%s224 + $0x30] sm:$0xff] %vm399, %v2910
      %2919 = vst.msk [vmem:[%s224 + $0x38] sm:$0xff] %vm399, %v2911
      %v2920 = vrot.slane %v323, 3
      %v2921 = vrot.slane %v324, 3
      %v2922 = vrot.slane %v325, 3
      %v2923 = vrot.slane %v326, 3
      %v2924 = vrot.slane %v327, 3
      %v2925 = vrot.slane %v328, 3
      %v2926 = vrot.slane %v329, 3
      %v2927 = vrot.slane %v330, 3
      %v2928 = vrot.slane %v331, 3
      %v2929 = vrot.slane %v332, 3
      %v2930 = vrot.slane %v333, 3
      %v2931 = vrot.slane %v334, 3
      %v2932 = vrot.slane %v335, 3
      %v2933 = vrot.slane %v336, 3
      %v2934 = vrot.slane %v337, 3
      %v2935 = vrot.slane %v338, 3
      %vm2936 = vcmask 1044480
      %v2938 = vsel %vm2936, %v2920, 0
      %v2940 = vsel %vm2936, %v2921, 0
      %v2942 = vsel %vm2936, %v2922, 0
      %v2944 = vsel %vm2936, %v2923, 0
      %v2946 = vsel %vm2936, %v2924, 0
      %v2948 = vsel %vm2936, %v2925, 0
      %v2950 = vsel %vm2936, %v2926, 0
      %v2952 = vsel %vm2936, %v2927, 0
      %v2954 = vsel %vm2936, %v2928, 0
      %v2956 = vsel %vm2936, %v2929, 0
      %v2958 = vsel %vm2936, %v2930, 0
      %v2960 = vsel %vm2936, %v2931, 0
      %v2962 = vsel %vm2936, %v2932, 0
      %v2964 = vsel %vm2936, %v2933, 0
      %v2966 = vsel %vm2936, %v2934, 0
      %v2968 = vsel %vm2936, %v2935, 0
      %s2969 = scalar_lea.vmem %s3, 4
      %v2970 = vld [vmem:[%s2969] sm:$0x3]
      %v2971 = vsel %vm399, %v2938, 0
      %v2973 = vsel %vm399, %v2940, 0
      %v2975 = vsel %vm399, %v2942, 0
      %v2977 = vsel %vm399, %v2944, 0
      %v2979 = vsel %vm399, %v2946, 0
      %v2981 = vsel %vm399, %v2948, 0
      %v2983 = vsel %vm399, %v2950, 0
      %v2985 = vsel %vm399, %v2952, 0
      %v2987 = vsel %vm399, %v2954, 0
      %v2989 = vsel %vm399, %v2956, 0
      %v2991 = vsel %vm399, %v2958, 0
      %v2993 = vsel %vm399, %v2960, 0
      %v2995 = vsel %vm399, %v2962, 0
      %v2997 = vsel %vm399, %v2964, 0
      %v2999 = vsel %vm399, %v2966, 0
      %v3001 = vsel %vm399, %v2968, 0
      %v3004 = vsel %vm403, %v2970, 0
      %3006 = vmatprep.subr.bf16.mxu0 0
      %3007 = vmatpush1.bf16.msra.mxu0 %v3004
      %3008 = vmatprep.subr.bf16.mxu0 0
      %3009 = vmatpush1.bf16.msra.mxu0 0
      %3010 = vmatprep.subr.bf16.mxu0 0
      %3011 = vmatpush1.bf16.msra.mxu0 0
      %3012 = vmatprep.subr.bf16.mxu0 0
      %3013 = vmatpush1.bf16.msra.mxu0 0
      %3014 = vmatprep.subr.bf16.mxu0 0
      %3015 = vmatpush1.bf16.msra.mxu0 0
      %3016 = vmatprep.subr.bf16.mxu0 0
      %3017 = vmatpush1.bf16.msra.mxu0 0
      %3018 = vmatprep.subr.bf16.mxu0 0
      %3019 = vmatpush1.bf16.msra.mxu0 0
      %3020 = vmatprep.subr.bf16.mxu0 0
      %3021 = vmatpush1.bf16.msra.mxu0 0
      %3022 = vmatprep.subr.bf16.mxu0 0
      %3023 = vmatpush1.bf16.msra.mxu0 0
      %3024 = vmatprep.subr.bf16.mxu0 0
      %3025 = vmatpush1.bf16.msra.mxu0 0
      %3026 = vmatprep.subr.bf16.mxu0 0
      %3027 = vmatpush1.bf16.msra.mxu0 0
      %3028 = vmatprep.subr.bf16.mxu0 0
      %3029 = vmatpush1.bf16.msra.mxu0 0
      %3030 = vmatprep.subr.bf16.mxu0 0
      %3031 = vmatpush1.bf16.msra.mxu0 0
      %3032 = vmatprep.subr.bf16.mxu0 0
      %3033 = vmatpush1.bf16.msra.mxu0 0
      %3034 = vmatprep.subr.bf16.mxu0 0
      %3035 = vmatpush1.bf16.msra.mxu0 0
      %3036 = vmatprep.subr.bf16.mxu0 0
      %3037 = vmatpush1.bf16.msra.mxu0 0
      %3038 = vmatprep.mubr.bf16.mxu0 0
      %3039 = vmatmul.mubr.bf16.gmra.mrb[0].mxu0 %v2971
      %v3040 = vpop.f32.mrb[0].mxu0
      %v3041 = vadd.f32 0.0, %v3040
      %v3042 = vpop.f32.mrb[0].mxu0
      %v3043 = vpop.f32.mrb[0].mxu0
      %v3044 = vadd.f32 0.0, %v3043
      %v3045 = vpop.f32.mrb[0].mxu0
      %3046 = vmatprep.mubr.bf16.mxu0 0
      %3047 = vmatmul.mubr.bf16.gmra.mrb[0].mxu0 %v2973
      %v3048 = vpop.f32.mrb[0].mxu0
      %v3049 = vadd.f32 0.0, %v3048
      %v3050 = vpop.f32.mrb[0].mxu0
      %v3051 = vpop.f32.mrb[0].mxu0
      %v3052 = vadd.f32 0.0, %v3051
      %v3053 = vpop.f32.mrb[0].mxu0
      %3054 = vmatprep.mubr.bf16.mxu0 0
      %3055 = vmatmul.mubr.bf16.gmra.mrb[0].mxu0 %v2975
      %v3056 = vpop.f32.mrb[0].mxu0
      %v3057 = vadd.f32 0.0, %v3056
      %v3058 = vpop.f32.mrb[0].mxu0
      %v3059 = vpop.f32.mrb[0].mxu0
      %v3060 = vadd.f32 0.0, %v3059
      %v3061 = vpop.f32.mrb[0].mxu0
      %3062 = vmatprep.mubr.bf16.mxu0 0
      %3063 = vmatmul.mubr.bf16.gmra.mrb[0].mxu0 %v2977
      %v3064 = vpop.f32.mrb[0].mxu0
      %v3065 = vadd.f32 0.0, %v3064
      %v3066 = vpop.f32.mrb[0].mxu0
      %v3067 = vpop.f32.mrb[0].mxu0
      %v3068 = vadd.f32 0.0, %v3067
      %v3069 = vpop.f32.mrb[0].mxu0
      %3070 = vmatprep.mubr.bf16.mxu0 0
      %3071 = vmatmul.mubr.bf16.gmra.mrb[0].mxu0 %v2979
      %v3072 = vpop.f32.mrb[0].mxu0
      %v3073 = vadd.f32 0.0, %v3072
      %v3074 = vpop.f32.mrb[0].mxu0
      %v3075 = vpop.f32.mrb[0].mxu0
      %v3076 = vadd.f32 0.0, %v3075
      %v3077 = vpop.f32.mrb[0].mxu0
      %3078 = vmatprep.mubr.bf16.mxu0 0
      %3079 = vmatmul.mubr.bf16.gmra.mrb[0].mxu0 %v2981
      %v3080 = vpop.f32.mrb[0].mxu0
      %v3081 = vadd.f32 0.0, %v3080
      %v3082 = vpop.f32.mrb[0].mxu0
      %v3083 = vpop.f32.mrb[0].mxu0
      %v3084 = vadd.f32 0.0, %v3083
      %v3085 = vpop.f32.mrb[0].mxu0
      %3086 = vmatprep.mubr.bf16.mxu0 0
      %3087 = vmatmul.mubr.bf16.gmra.mrb[0].mxu0 %v2983
      %v3088 = vpop.f32.mrb[0].mxu0
      %v3089 = vadd.f32 0.0, %v3088
      %v3090 = vpop.f32.mrb[0].mxu0
      %v3091 = vpop.f32.mrb[0].mxu0
      %v3092 = vadd.f32 0.0, %v3091
      %v3093 = vpop.f32.mrb[0].mxu0
      %3094 = vmatprep.mubr.bf16.mxu0 0
      %3095 = vmatmul.mubr.bf16.gmra.mrb[0].mxu0 %v2985
      %v3096 = vpop.f32.mrb[0].mxu0
      %v3097 = vadd.f32 0.0, %v3096
      %v3098 = vpop.f32.mrb[0].mxu0
      %v3099 = vpop.f32.mrb[0].mxu0
      %v3100 = vadd.f32 0.0, %v3099
      %v3101 = vpop.f32.mrb[0].mxu0
      %3102 = vmatprep.mubr.bf16.mxu0 0
      %3103 = vmatmul.mubr.bf16.gmra.mrb[0].mxu0 %v2987
      %v3104 = vpop.f32.mrb[0].mxu0
      %v3105 = vadd.f32 0.0, %v3104
      %v3106 = vpop.f32.mrb[0].mxu0
      %v3107 = vpop.f32.mrb[0].mxu0
      %v3108 = vadd.f32 0.0, %v3107
      %v3109 = vpop.f32.mrb[0].mxu0
      %3110 = vmatprep.mubr.bf16.mxu0 0
      %3111 = vmatmul.mubr.bf16.gmra.mrb[0].mxu0 %v2989
      %v3112 = vpop.f32.mrb[0].mxu0
      %v3113 = vadd.f32 0.0, %v3112
      %v3114 = vpop.f32.mrb[0].mxu0
      %v3115 = vpop.f32.mrb[0].mxu0
      %v3116 = vadd.f32 0.0, %v3115
      %v3117 = vpop.f32.mrb[0].mxu0
      %3118 = vmatprep.mubr.bf16.mxu0 0
      %3119 = vmatmul.mubr.bf16.gmra.mrb[0].mxu0 %v2991
      %v3120 = vpop.f32.mrb[0].mxu0
      %v3121 = vpop.f32.mrb[0].mxu0
      %v3122 = vpop.f32.mrb[0].mxu0
      %v3123 = vpop.f32.mrb[0].mxu0
      %3124 = vmatprep.mubr.bf16.mxu0 0
      %3125 = vmatmul.mubr.bf16.gmra.mrb[0].mxu0 %v2993
      %v3126 = vpop.f32.mrb[0].mxu0
      %v3127 = vpop.f32.mrb[0].mxu0
      %v3128 = vpop.f32.mrb[0].mxu0
      %v3129 = vpop.f32.mrb[0].mxu0
      %3130 = vmatprep.mubr.bf16.mxu0 0
      %3131 = vmatmul.mubr.bf16.gmra.mrb[0].mxu0 %v2995
      %v3132 = vpop.f32.mrb[0].mxu0
      %v3133 = vpop.f32.mrb[0].mxu0
      %v3134 = vpop.f32.mrb[0].mxu0
      %v3135 = vpop.f32.mrb[0].mxu0
      %3136 = vmatprep.mubr.bf16.mxu0 0
      %3137 = vmatmul.mubr.bf16.gmra.mrb[0].mxu0 %v2997
      %v3138 = vpop.f32.mrb[0].mxu0
      %v3139 = vpop.f32.mrb[0].mxu0
      %v3140 = vpop.f32.mrb[0].mxu0
      %v3141 = vpop.f32.mrb[0].mxu0
      %3142 = vmatprep.mubr.bf16.mxu0 0
      %3143 = vmatmul.mubr.bf16.gmra.mrb[0].mxu0 %v2999
      %v3144 = vpop.f32.mrb[0].mxu0
      %v3145 = vpop.f32.mrb[0].mxu0
      %v3146 = vpop.f32.mrb[0].mxu0
      %v3147 = vpop.f32.mrb[0].mxu0
      %3148 = vmatprep.mubr.bf16.mxu0 0
      %3149 = vmatmul.mubr.bf16.gmra.mrb[0].mxu0 %v3001
      %v3150 = vpop.f32.mrb[0].mxu0
      %v3151 = vpop.f32.mrb[0].mxu0
      %v3152 = vpop.f32.mrb[0].mxu0
      %v3153 = vpop.f32.mrb[0].mxu0
      %3154 = vdwg.mxu0
      %v3155 = vld [vmem:[%s1623] sm:$0xff]
      %v3156 = vld [vmem:[%s1623 + $0x8] sm:$0xff]
      %v3157 = vld [vmem:[%s1623 + $0x10] sm:$0xff]
      %v3158 = vld [vmem:[%s1623 + $0x18] sm:$0xff]
      %v3159 = vld [vmem:[%s1623 + $0x20] sm:$0xff]
      %v3160 = vld [vmem:[%s1623 + $0x28] sm:$0xff]
      %v3161 = vld [vmem:[%s1623 + $0x30] sm:$0xff]
      %v3162 = vld [vmem:[%s1623 + $0x38] sm:$0xff]
      %v3163 = vld [vmem:[%s1623 + $0x40] sm:$0xff]
      %v3164 = vld [vmem:[%s1623 + $0x48] sm:$0xff]
      %v3165 = vld [vmem:[%s1623 + $0x50] sm:$0xff]
      %v3166 = vld [vmem:[%s1623 + $0x58] sm:$0xff]
      %v3167 = vld [vmem:[%s1623 + $0x60] sm:$0xff]
      %v3168 = vld [vmem:[%s1623 + $0x68] sm:$0xff]
      %v3169 = vld [vmem:[%s1623 + $0x70] sm:$0xff]
      %v3170 = vld [vmem:[%s1623 + $0x78] sm:$0xff]
      %v3171 = vld [vmem:[%s1623 + $0x80] sm:$0xff]
      %v3172 = vld [vmem:[%s1623 + $0x88] sm:$0xff]
      %v3173 = vld [vmem:[%s1623 + $0x90] sm:$0xff]
      %v3174 = vld [vmem:[%s1623 + $0x98] sm:$0xff]
      %v3175 = vadd.f32 %v3155, %v3041
      %v3176 = vadd.f32 %v3156, %v3044
      %v3177 = vadd.f32 %v3157, %v3049
      %v3178 = vadd.f32 %v3158, %v3052
      %v3179 = vadd.f32 %v3159, %v3057
      %v3180 = vadd.f32 %v3160, %v3060
      %v3181 = vadd.f32 %v3161, %v3065
      %v3182 = vadd.f32 %v3162, %v3068
      %v3183 = vadd.f32 %v3163, %v3073
      %v3184 = vadd.f32 %v3164, %v3076
      %v3185 = vadd.f32 %v3165, %v3081
      %v3186 = vadd.f32 %v3166, %v3084
      %v3187 = vadd.f32 %v3167, %v3089
      %v3188 = vadd.f32 %v3168, %v3092
      %v3189 = vadd.f32 %v3169, %v3097
      %v3190 = vadd.f32 %v3170, %v3100
      %v3191 = vadd.f32 %v3171, %v3105
      %v3192 = vadd.f32 %v3172, %v3108
      %v3193 = vadd.f32 %v3173, %v3113
      %v3194 = vadd.f32 %v3174, %v3116
      %3195 = vst.msk [vmem:[%s1623] sm:$0xff] %vm399, %v3175
      %3196 = vst.msk [vmem:[%s1623 + $0x8] sm:$0xff] %vm399, %v3176
      %3197 = vst.msk [vmem:[%s1623 + $0x10] sm:$0xff] %vm399, %v3177
      %3198 = vst.msk [vmem:[%s1623 + $0x18] sm:$0xff] %vm399, %v3178
      %3199 = vst.msk [vmem:[%s1623 + $0x20] sm:$0xff] %vm399, %v3179
      %3200 = vst.msk [vmem:[%s1623 + $0x28] sm:$0xff] %vm399, %v3180
      %3201 = vst.msk [vmem:[%s1623 + $0x30] sm:$0xff] %vm399, %v3181
      %3202 = vst.msk [vmem:[%s1623 + $0x38] sm:$0xff] %vm399, %v3182
      %3203 = vst.msk [vmem:[%s1623 + $0x40] sm:$0xff] %vm399, %v3183
      %3204 = vst.msk [vmem:[%s1623 + $0x48] sm:$0xff] %vm399, %v3184
      %3205 = vst.msk [vmem:[%s1623 + $0x50] sm:$0xff] %vm399, %v3185
      %3206 = vst.msk [vmem:[%s1623 + $0x58] sm:$0xff] %vm399, %v3186
      %3207 = vst.msk [vmem:[%s1623 + $0x60] sm:$0xff] %vm399, %v3187
      %3208 = vst.msk [vmem:[%s1623 + $0x68] sm:$0xff] %vm399, %v3188
      %3209 = vst.msk [vmem:[%s1623 + $0x70] sm:$0xff] %vm399, %v3189
      %3210 = vst.msk [vmem:[%s1623 + $0x78] sm:$0xff] %vm399, %v3190
      %3211 = vst.msk [vmem:[%s1623 + $0x80] sm:$0xff] %vm399, %v3191
      %3212 = vst.msk [vmem:[%s1623 + $0x88] sm:$0xff] %vm399, %v3192
      %3213 = vst.msk [vmem:[%s1623 + $0x90] sm:$0xff] %vm399, %v3193
      %3214 = vst.msk [vmem:[%s1623 + $0x98] sm:$0xff] %vm399, %v3194
      %s3215 = scalar_lea.vmem %s3, 8
      %v3216 = vld [vmem:[%s3215] sm:$0x3]
      %v3218 = vsel %vm403, %v3216, 0
      %3220 = vmatprep.subr.bf16.mxu0 0
      %3221 = vmatpush1.bf16.msra.mxu0 %v3218
      %3222 = vmatprep.subr.bf16.mxu0 0
      %3223 = vmatpush1.bf16.msra.mxu0 0
      %3224 = vmatprep.subr.bf16.mxu0 0
      %3225 = vmatpush1.bf16.msra.mxu0 0
      %3226 = vmatprep.subr.bf16.mxu0 0
      %3227 = vmatpush1.bf16.msra.mxu0 0
      %3228 = vmatprep.subr.bf16.mxu0 0
      %3229 = vmatpush1.bf16.msra.mxu0 0
      %3230 = vmatprep.subr.bf16.mxu0 0
      %3231 = vmatpush1.bf16.msra.mxu0 0
      %3232 = vmatprep.subr.bf16.mxu0 0
      %3233 = vmatpush1.bf16.msra.mxu0 0
      %3234 = vmatprep.subr.bf16.mxu0 0
      %3235 = vmatpush1.bf16.msra.mxu0 0
      %3236 = vmatprep.subr.bf16.mxu0 0
      %3237 = vmatpush1.bf16.msra.mxu0 0
      %3238 = vmatprep.subr.bf16.mxu0 0
      %3239 = vmatpush1.bf16.msra.mxu0 0
      %3240 = vmatprep.subr.bf16.mxu0 0
      %3241 = vmatpush1.bf16.msra.mxu0 0
      %3242 = vmatprep.subr.bf16.mxu0 0
      %3243 = vmatpush1.bf16.msra.mxu0 0
      %3244 = vmatprep.subr.bf16.mxu0 0
      %3245 = vmatpush1.bf16.msra.mxu0 0
      %3246 = vmatprep.subr.bf16.mxu0 0
      %3247 = vmatpush1.bf16.msra.mxu0 0
      %3248 = vmatprep.subr.bf16.mxu0 0
      %3249 = vmatpush1.bf16.msra.mxu0 0
      %3250 = vmatprep.subr.bf16.mxu0 0
      %3251 = vmatpush1.bf16.msra.mxu0 0
      %3252 = vmatprep.mubr.bf16.mxu0 0
      %3253 = vmatmul.mubr.bf16.gmra.mrb[0].mxu0 %v2971
      %v3254 = vpop.f32.mrb[0].mxu0
      %v3255 = vadd.f32 0.0, %v3254
      %v3256 = vpop.f32.mrb[0].mxu0
      %v3257 = vpop.f32.mrb[0].mxu0
      %v3258 = vadd.f32 0.0, %v3257
      %v3259 = vpop.f32.mrb[0].mxu0
      %3260 = vmatprep.mubr.bf16.mxu0 0
      %3261 = vmatmul.mubr.bf16.gmra.mrb[0].mxu0 %v2973
      %v3262 = vpop.f32.mrb[0].mxu0
      %v3263 = vadd.f32 0.0, %v3262
      %v3264 = vpop.f32.mrb[0].mxu0
      %v3265 = vpop.f32.mrb[0].mxu0
      %v3266 = vadd.f32 0.0, %v3265
      %v3267 = vpop.f32.mrb[0].mxu0
      %3268 = vmatprep.mubr.bf16.mxu0 0
      %3269 = vmatmul.mubr.bf16.gmra.mrb[0].mxu0 %v2975
      %v3270 = vpop.f32.mrb[0].mxu0
      %v3271 = vadd.f32 0.0, %v3270
      %v3272 = vpop.f32.mrb[0].mxu0
      %v3273 = vpop.f32.mrb[0].mxu0
      %v3274 = vadd.f32 0.0, %v3273
      %v3275 = vpop.f32.mrb[0].mxu0
      %3276 = vmatprep.mubr.bf16.mxu0 0
      %3277 = vmatmul.mubr.bf16.gmra.mrb[0].mxu0 %v2977
      %v3278 = vpop.f32.mrb[0].mxu0
      %v3279 = vadd.f32 0.0, %v3278
      %v3280 = vpop.f32.mrb[0].mxu0
      %v3281 = vpop.f32.mrb[0].mxu0
      %v3282 = vadd.f32 0.0, %v3281
      %v3283 = vpop.f32.mrb[0].mxu0
      %3284 = vmatprep.mubr.bf16.mxu0 0
      %3285 = vmatmul.mubr.bf16.gmra.mrb[0].mxu0 %v2979
      %v3286 = vpop.f32.mrb[0].mxu0
      %v3287 = vadd.f32 0.0, %v3286
      %v3288 = vpop.f32.mrb[0].mxu0
      %v3289 = vpop.f32.mrb[0].mxu0
      %v3290 = vadd.f32 0.0, %v3289
      %v3291 = vpop.f32.mrb[0].mxu0
      %3292 = vmatprep.mubr.bf16.mxu0 0
      %3293 = vmatmul.mubr.bf16.gmra.mrb[0].mxu0 %v2981
      %v3294 = vpop.f32.mrb[0].mxu0
      %v3295 = vadd.f32 0.0, %v3294
      %v3296 = vpop.f32.mrb[0].mxu0
      %v3297 = vpop.f32.mrb[0].mxu0
      %v3298 = vadd.f32 0.0, %v3297
      %v3299 = vpop.f32.mrb[0].mxu0
      %3300 = vmatprep.mubr.bf16.mxu0 0
      %3301 = vmatmul.mubr.bf16.gmra.mrb[0].mxu0 %v2983
      %v3302 = vpop.f32.mrb[0].mxu0
      %v3303 = vadd.f32 0.0, %v3302
      %v3304 = vpop.f32.mrb[0].mxu0
      %v3305 = vpop.f32.mrb[0].mxu0
      %v3306 = vadd.f32 0.0, %v3305
      %v3307 = vpop.f32.mrb[0].mxu0
      %3308 = vmatprep.mubr.bf16.mxu0 0
      %3309 = vmatmul.mubr.bf16.gmra.mrb[0].mxu0 %v2985
      %v3310 = vpop.f32.mrb[0].mxu0
      %v3311 = vadd.f32 0.0, %v3310
      %v3312 = vpop.f32.mrb[0].mxu0
      %v3313 = vpop.f32.mrb[0].mxu0
      %v3314 = vadd.f32 0.0, %v3313
      %v3315 = vpop.f32.mrb[0].mxu0
      %3316 = vmatprep.mubr.bf16.mxu0 0
      %3317 = vmatmul.mubr.bf16.gmra.mrb[0].mxu0 %v2987
      %v3318 = vpop.f32.mrb[0].mxu0
      %v3319 = vadd.f32 0.0, %v3318
      %v3320 = vpop.f32.mrb[0].mxu0
      %v3321 = vpop.f32.mrb[0].mxu0
      %v3322 = vadd.f32 0.0, %v3321
      %v3323 = vpop.f32.mrb[0].mxu0
      %3324 = vmatprep.mubr.bf16.mxu0 0
      %3325 = vmatmul.mubr.bf16.gmra.mrb[0].mxu0 %v2989
      %v3326 = vpop.f32.mrb[0].mxu0
      %v3327 = vadd.f32 0.0, %v3326
      %v3328 = vpop.f32.mrb[0].mxu0
      %v3329 = vpop.f32.mrb[0].mxu0
      %v3330 = vadd.f32 0.0, %v3329
      %v3331 = vpop.f32.mrb[0].mxu0
      %3332 = vmatprep.mubr.bf16.mxu0 0
      %3333 = vmatmul.mubr.bf16.gmra.mrb[0].mxu0 %v2991
      %v3334 = vpop.f32.mrb[0].mxu0
      %v3335 = vadd.f32 0.0, %v3334
      %v3336 = vpop.f32.mrb[0].mxu0
      %v3337 = vpop.f32.mrb[0].mxu0
      %v3338 = vadd.f32 0.0, %v3337
      %v3339 = vpop.f32.mrb[0].mxu0
      %3340 = vmatprep.mubr.bf16.mxu0 0
      %3341 = vmatmul.mubr.bf16.gmra.mrb[0].mxu0 %v2993
      %v3342 = vpop.f32.mrb[0].mxu0
      %v3343 = vadd.f32 0.0, %v3342
      %v3344 = vpop.f32.mrb[0].mxu0
      %v3345 = vpop.f32.mrb[0].mxu0
      %v3346 = vadd.f32 0.0, %v3345
      %v3347 = vpop.f32.mrb[0].mxu0
      %3348 = vmatprep.mubr.bf16.mxu0 0
      %3349 = vmatmul.mubr.bf16.gmra.mrb[0].mxu0 %v2995
      %v3350 = vpop.f32.mrb[0].mxu0
      %v3351 = vadd.f32 0.0, %v3350
      %v3352 = vpop.f32.mrb[0].mxu0
      %v3353 = vpop.f32.mrb[0].mxu0
      %v3354 = vadd.f32 0.0, %v3353
      %v3355 = vpop.f32.mrb[0].mxu0
      %3356 = vmatprep.mubr.bf16.mxu0 0
      %3357 = vmatmul.mubr.bf16.gmra.mrb[0].mxu0 %v2997
      %v3358 = vpop.f32.mrb[0].mxu0
      %v3359 = vadd.f32 0.0, %v3358
      %v3360 = vpop.f32.mrb[0].mxu0
      %v3361 = vpop.f32.mrb[0].mxu0
      %v3362 = vadd.f32 0.0, %v3361
      %v3363 = vpop.f32.mrb[0].mxu0
      %3364 = vmatprep.mubr.bf16.mxu0 0
      %3365 = vmatmul.mubr.bf16.gmra.mrb[0].mxu0 %v2999
      %v3366 = vpop.f32.mrb[0].mxu0
      %v3367 = vadd.f32 0.0, %v3366
      %v3368 = vpop.f32.mrb[0].mxu0
      %v3369 = vpop.f32.mrb[0].mxu0
      %v3370 = vadd.f32 0.0, %v3369
      %v3371 = vpop.f32.mrb[0].mxu0
      %3372 = vmatprep.mubr.bf16.mxu0 0
      %3373 = vmatmul.mubr.bf16.gmra.mrb[0].mxu0 %v3001
      %v3374 = vpop.f32.mrb[0].mxu0
      %v3375 = vadd.f32 0.0, %v3374
      %v3376 = vpop.f32.mrb[0].mxu0
      %v3377 = vpop.f32.mrb[0].mxu0
      %v3378 = vadd.f32 0.0, %v3377
      %v3379 = vpop.f32.mrb[0].mxu0
      %3380 = vdwg.mxu0
      %v3381 = vld [vmem:[%s224] sm:$0xff]
      %v3382 = vld [vmem:[%s224 + $0x8] sm:$0xff]
      %v3383 = vld [vmem:[%s224 + $0x10] sm:$0xff]
      %v3384 = vld [vmem:[%s224 + $0x18] sm:$0xff]
      %v3385 = vld [vmem:[%s224 + $0x20] sm:$0xff]
      %v3386 = vld [vmem:[%s224 + $0x28] sm:$0xff]
      %v3387 = vld [vmem:[%s224 + $0x30] sm:$0xff]
      %v3388 = vld [vmem:[%s224 + $0x38] sm:$0xff]
      %v3389 = vld [vmem:[%s224 + $0x40] sm:$0xff]
      %v3390 = vld [vmem:[%s224 + $0x48] sm:$0xff]
      %v3391 = vld [vmem:[%s224 + $0x50] sm:$0xff]
      %v3392 = vld [vmem:[%s224 + $0x58] sm:$0xff]
      %v3393 = vld [vmem:[%s224 + $0x60] sm:$0xff]
      %v3394 = vld [vmem:[%s224 + $0x68] sm:$0xff]
      %v3395 = vld [vmem:[%s224 + $0x70] sm:$0xff]
      %v3396 = vld [vmem:[%s224 + $0x78] sm:$0xff]
      %v3397 = vld [vmem:[%s224 + $0x80] sm:$0xff]
      %v3398 = vld [vmem:[%s224 + $0x88] sm:$0xff]
      %v3399 = vld [vmem:[%s224 + $0x90] sm:$0xff]
      %v3400 = vld [vmem:[%s224 + $0x98] sm:$0xff]
      %v3401 = vld [vmem:[%s224 + $0xa0] sm:$0xff]
      %v3402 = vld [vmem:[%s224 + $0xa8] sm:$0xff]
      %v3403 = vld [vmem:[%s224 + $0xb0] sm:$0xff]
      %v3404 = vld [vmem:[%s224 + $0xb8] sm:$0xff]
      %v3405 = vld [vmem:[%s224 + $0xc0] sm:$0xff]
      %v3406 = vld [vmem:[%s224 + $0xc8] sm:$0xff]
      %v3407 = vld [vmem:[%s224 + $0xd0] sm:$0xff]
      %v3408 = vld [vmem:[%s224 + $0xd8] sm:$0xff]
      %v3409 = vld [vmem:[%s224 + $0xe0] sm:$0xff]
      %v3410 = vld [vmem:[%s224 + $0xe8] sm:$0xff]
      %v3411 = vld [vmem:[%s224 + $0xf0] sm:$0xff]
      %v3412 = vld [vmem:[%s224 + $0xf8] sm:$0xff]
      %v3413 = vadd.f32 %v3381, %v3255
      %v3414 = vadd.f32 %v3382, %v3258
      %v3415 = vadd.f32 %v3383, %v3263
      %v3416 = vadd.f32 %v3384, %v3266
      %v3417 = vadd.f32 %v3385, %v3271
      %v3418 = vadd.f32 %v3386, %v3274
      %v3419 = vadd.f32 %v3387, %v3279
      %v3420 = vadd.f32 %v3388, %v3282
      %v3421 = vadd.f32 %v3389, %v3287
      %v3422 = vadd.f32 %v3390, %v3290
      %v3423 = vadd.f32 %v3391, %v3295
      %v3424 = vadd.f32 %v3392, %v3298
      %v3425 = vadd.f32 %v3393, %v3303
      %v3426 = vadd.f32 %v3394, %v3306
      %v3427 = vadd.f32 %v3395, %v3311
      %v3428 = vadd.f32 %v3396, %v3314
      %v3429 = vadd.f32 %v3397, %v3319
      %v3430 = vadd.f32 %v3398, %v3322
      %v3431 = vadd.f32 %v3399, %v3327
      %v3432 = vadd.f32 %v3400, %v3330
      %v3433 = vadd.f32 %v3401, %v3335
      %v3434 = vadd.f32 %v3402, %v3338
      %v3435 = vadd.f32 %v3403, %v3343
      %v3436 = vadd.f32 %v3404, %v3346
      %v3437 = vadd.f32 %v3405, %v3351
      %v3438 = vadd.f32 %v3406, %v3354
      %v3439 = vadd.f32 %v3407, %v3359
      %v3440 = vadd.f32 %v3408, %v3362
      %v3441 = vadd.f32 %v3409, %v3367
      %v3442 = vadd.f32 %v3410, %v3370
      %v3443 = vadd.f32 %v3411, %v3375
      %v3444 = vadd.f32 %v3412, %v3378
      %3445 = vst.msk [vmem:[%s224] sm:$0xff] %vm399, %v3413
      %3446 = vst.msk [vmem:[%s224 + $0x8] sm:$0xff] %vm399, %v3414
      %3447 = vst.msk [vmem:[%s224 + $0x10] sm:$0xff] %vm399, %v3415
      %3448 = vst.msk [vmem:[%s224 + $0x18] sm:$0xff] %vm399, %v3416
      %3449 = vst.msk [vmem:[%s224 + $0x20] sm:$0xff] %vm399, %v3417
      %3450 = vst.msk [vmem:[%s224 + $0x28] sm:$0xff] %vm399, %v3418
      %3451 = vst.msk [vmem:[%s224 + $0x30] sm:$0xff] %vm399, %v3419
      %3452 = vst.msk [vmem:[%s224 + $0x38] sm:$0xff] %vm399, %v3420
      %3453 = vst.msk [vmem:[%s224 + $0x40] sm:$0xff] %vm399, %v3421
      %3454 = vst.msk [vmem:[%s224 + $0x48] sm:$0xff] %vm399, %v3422
      %3455 = vst.msk [vmem:[%s224 + $0x50] sm:$0xff] %vm399, %v3423
      %3456 = vst.msk [vmem:[%s224 + $0x58] sm:$0xff] %vm399, %v3424
      %3457 = vst.msk [vmem:[%s224 + $0x60] sm:$0xff] %vm399, %v3425
      %3458 = vst.msk [vmem:[%s224 + $0x68] sm:$0xff] %vm399, %v3426
      %3459 = vst.msk [vmem:[%s224 + $0x70] sm:$0xff] %vm399, %v3427
      %3460 = vst.msk [vmem:[%s224 + $0x78] sm:$0xff] %vm399, %v3428
      %3461 = vst.msk [vmem:[%s224 + $0x80] sm:$0xff] %vm399, %v3429
      %3462 = vst.msk [vmem:[%s224 + $0x88] sm:$0xff] %vm399, %v3430
      %3463 = vst.msk [vmem:[%s224 + $0x90] sm:$0xff] %vm399, %v3431
      %3464 = vst.msk [vmem:[%s224 + $0x98] sm:$0xff] %vm399, %v3432
      %3465 = vst.msk [vmem:[%s224 + $0xa0] sm:$0xff] %vm399, %v3433
      %3466 = vst.msk [vmem:[%s224 + $0xa8] sm:$0xff] %vm399, %v3434
      %3467 = vst.msk [vmem:[%s224 + $0xb0] sm:$0xff] %vm399, %v3435
      %3468 = vst.msk [vmem:[%s224 + $0xb8] sm:$0xff] %vm399, %v3436
      %3469 = vst.msk [vmem:[%s224 + $0xc0] sm:$0xff] %vm399, %v3437
      %3470 = vst.msk [vmem:[%s224 + $0xc8] sm:$0xff] %vm399, %v3438
      %3471 = vst.msk [vmem:[%s224 + $0xd0] sm:$0xff] %vm399, %v3439
      %3472 = vst.msk [vmem:[%s224 + $0xd8] sm:$0xff] %vm399, %v3440
      %3473 = vst.msk [vmem:[%s224 + $0xe0] sm:$0xff] %vm399, %v3441
      %3474 = vst.msk [vmem:[%s224 + $0xe8] sm:$0xff] %vm399, %v3442
      %3475 = vst.msk [vmem:[%s224 + $0xf0] sm:$0xff] %vm399, %v3443
      %3476 = vst.msk [vmem:[%s224 + $0xf8] sm:$0xff] %vm399, %v3444
      %s3477 = scalar_lea.vmem %s3, 14
      %v3478 = vld [vmem:[%s3477] sm:$0x3]
      %v3480 = vsel %vm403, %v3478, 0
      %3482 = vmatprep.subr.bf16.mxu0 0
      %3483 = vmatpush1.bf16.msra.mxu0 %v3480
      %3484 = vmatprep.subr.bf16.mxu0 0
      %3485 = vmatpush1.bf16.msra.mxu0 0
      %3486 = vmatprep.subr.bf16.mxu0 0
      %3487 = vmatpush1.bf16.msra.mxu0 0
      %3488 = vmatprep.subr.bf16.mxu0 0
      %3489 = vmatpush1.bf16.msra.mxu0 0
      %3490 = vmatprep.subr.bf16.mxu0 0
      %3491 = vmatpush1.bf16.msra.mxu0 0
      %3492 = vmatprep.subr.bf16.mxu0 0
      %3493 = vmatpush1.bf16.msra.mxu0 0
      %3494 = vmatprep.subr.bf16.mxu0 0
      %3495 = vmatpush1.bf16.msra.mxu0 0
      %3496 = vmatprep.subr.bf16.mxu0 0
      %3497 = vmatpush1.bf16.msra.mxu0 0
      %3498 = vmatprep.subr.bf16.mxu0 0
      %3499 = vmatpush1.bf16.msra.mxu0 0
      %3500 = vmatprep.subr.bf16.mxu0 0
      %3501 = vmatpush1.bf16.msra.mxu0 0
      %3502 = vmatprep.subr.bf16.mxu0 0
      %3503 = vmatpush1.bf16.msra.mxu0 0
      %3504 = vmatprep.subr.bf16.mxu0 0
      %3505 = vmatpush1.bf16.msra.mxu0 0
      %3506 = vmatprep.subr.bf16.mxu0 0
      %3507 = vmatpush1.bf16.msra.mxu0 0
      %3508 = vmatprep.subr.bf16.mxu0 0
      %3509 = vmatpush1.bf16.msra.mxu0 0
      %3510 = vmatprep.subr.bf16.mxu0 0
      %3511 = vmatpush1.bf16.msra.mxu0 0
      %3512 = vmatprep.subr.bf16.mxu0 0
      %3513 = vmatpush1.bf16.msra.mxu0 0
      %3514 = vmatprep.mubr.bf16.mxu0 0
      %3515 = vmatmul.mubr.bf16.gmra.mrb[0].mxu0 %v2971
      %v3516 = vpop.f32.mrb[0].mxu0
      %v3517 = vpop.f32.mrb[0].mxu0
      %v3518 = vpop.f32.mrb[0].mxu0
      %v3519 = vpop.f32.mrb[0].mxu0
      %3520 = vmatprep.mubr.bf16.mxu0 0
      %3521 = vmatmul.mubr.bf16.gmra.mrb[0].mxu0 %v2973
      %v3522 = vpop.f32.mrb[0].mxu0
      %v3523 = vpop.f32.mrb[0].mxu0
      %v3524 = vpop.f32.mrb[0].mxu0
      %v3525 = vpop.f32.mrb[0].mxu0
      %3526 = vmatprep.mubr.bf16.mxu0 0
      %3527 = vmatmul.mubr.bf16.gmra.mrb[0].mxu0 %v2975
      %v3528 = vpop.f32.mrb[0].mxu0
      %v3529 = vpop.f32.mrb[0].mxu0
      %v3530 = vpop.f32.mrb[0].mxu0
      %v3531 = vpop.f32.mrb[0].mxu0
      %3532 = vmatprep.mubr.bf16.mxu0 0
      %3533 = vmatmul.mubr.bf16.gmra.mrb[0].mxu0 %v2977
      %v3534 = vpop.f32.mrb[0].mxu0
      %v3535 = vpop.f32.mrb[0].mxu0
      %v3536 = vpop.f32.mrb[0].mxu0
      %v3537 = vpop.f32.mrb[0].mxu0
      %3538 = vmatprep.mubr.bf16.mxu0 0
      %3539 = vmatmul.mubr.bf16.gmra.mrb[0].mxu0 %v2979
      %v3540 = vpop.f32.mrb[0].mxu0
      %v3541 = vpop.f32.mrb[0].mxu0
      %v3542 = vpop.f32.mrb[0].mxu0
      %v3543 = vpop.f32.mrb[0].mxu0
      %3544 = vmatprep.mubr.bf16.mxu0 0
      %3545 = vmatmul.mubr.bf16.gmra.mrb[0].mxu0 %v2981
      %v3546 = vpop.f32.mrb[0].mxu0
      %v3547 = vpop.f32.mrb[0].mxu0
      %v3548 = vpop.f32.mrb[0].mxu0
      %v3549 = vpop.f32.mrb[0].mxu0
      %3550 = vmatprep.mubr.bf16.mxu0 0
      %3551 = vmatmul.mubr.bf16.gmra.mrb[0].mxu0 %v2983
      %v3552 = vpop.f32.mrb[0].mxu0
      %v3553 = vadd.f32 0.0, %v3552
      %v3554 = vpop.f32.mrb[0].mxu0
      %v3555 = vpop.f32.mrb[0].mxu0
      %v3556 = vadd.f32 0.0, %v3555
      %v3557 = vpop.f32.mrb[0].mxu0
      %3558 = vmatprep.mubr.bf16.mxu0 0
      %3559 = vmatmul.mubr.bf16.gmra.mrb[0].mxu0 %v2985
      %v3560 = vpop.f32.mrb[0].mxu0
      %v3561 = vadd.f32 0.0, %v3560
      %v3562 = vpop.f32.mrb[0].mxu0
      %v3563 = vpop.f32.mrb[0].mxu0
      %v3564 = vadd.f32 0.0, %v3563
      %v3565 = vpop.f32.mrb[0].mxu0
      %3566 = vmatprep.mubr.bf16.mxu0 0
      %3567 = vmatmul.mubr.bf16.gmra.mrb[0].mxu0 %v2987
      %v3568 = vpop.f32.mrb[0].mxu0
      %v3569 = vadd.f32 0.0, %v3568
      %v3570 = vpop.f32.mrb[0].mxu0
      %v3571 = vpop.f32.mrb[0].mxu0
      %v3572 = vadd.f32 0.0, %v3571
      %v3573 = vpop.f32.mrb[0].mxu0
      %3574 = vmatprep.mubr.bf16.mxu0 0
      %3575 = vmatmul.mubr.bf16.gmra.mrb[0].mxu0 %v2989
      %v3576 = vpop.f32.mrb[0].mxu0
      %v3577 = vadd.f32 0.0, %v3576
      %v3578 = vpop.f32.mrb[0].mxu0
      %v3579 = vpop.f32.mrb[0].mxu0
      %v3580 = vadd.f32 0.0, %v3579
      %v3581 = vpop.f32.mrb[0].mxu0
      %3582 = vmatprep.mubr.bf16.mxu0 0
      %3583 = vmatmul.mubr.bf16.gmra.mrb[0].mxu0 %v2991
      %v3584 = vpop.f32.mrb[0].mxu0
      %v3585 = vadd.f32 0.0, %v3584
      %v3586 = vpop.f32.mrb[0].mxu0
      %v3587 = vpop.f32.mrb[0].mxu0
      %v3588 = vadd.f32 0.0, %v3587
      %v3589 = vpop.f32.mrb[0].mxu0
      %3590 = vmatprep.mubr.bf16.mxu0 0
      %3591 = vmatmul.mubr.bf16.gmra.mrb[0].mxu0 %v2993
      %v3592 = vpop.f32.mrb[0].mxu0
      %v3593 = vadd.f32 0.0, %v3592
      %v3594 = vpop.f32.mrb[0].mxu0
      %v3595 = vpop.f32.mrb[0].mxu0
      %v3596 = vadd.f32 0.0, %v3595
      %v3597 = vpop.f32.mrb[0].mxu0
      %3598 = vmatprep.mubr.bf16.mxu0 0
      %3599 = vmatmul.mubr.bf16.gmra.mrb[0].mxu0 %v2995
      %v3600 = vpop.f32.mrb[0].mxu0
      %v3601 = vadd.f32 0.0, %v3600
      %v3602 = vpop.f32.mrb[0].mxu0
      %v3603 = vpop.f32.mrb[0].mxu0
      %v3604 = vadd.f32 0.0, %v3603
      %v3605 = vpop.f32.mrb[0].mxu0
      %3606 = vmatprep.mubr.bf16.mxu0 0
      %3607 = vmatmul.mubr.bf16.gmra.mrb[0].mxu0 %v2997
      %v3608 = vpop.f32.mrb[0].mxu0
      %v3609 = vadd.f32 0.0, %v3608
      %v3610 = vpop.f32.mrb[0].mxu0
      %v3611 = vpop.f32.mrb[0].mxu0
      %v3612 = vadd.f32 0.0, %v3611
      %v3613 = vpop.f32.mrb[0].mxu0
      %3614 = vmatprep.mubr.bf16.mxu0 0
      %3615 = vmatmul.mubr.bf16.gmra.mrb[0].mxu0 %v2999
      %v3616 = vpop.f32.mrb[0].mxu0
      %v3617 = vadd.f32 0.0, %v3616
      %v3618 = vpop.f32.mrb[0].mxu0
      %v3619 = vpop.f32.mrb[0].mxu0
      %v3620 = vadd.f32 0.0, %v3619
      %v3621 = vpop.f32.mrb[0].mxu0
      %3622 = vmatprep.mubr.bf16.mxu0 0
      %3623 = vmatmul.mubr.bf16.gmra.mrb[0].mxu0 %v3001
      %v3624 = vpop.f32.mrb[0].mxu0
      %v3625 = vadd.f32 0.0, %v3624
      %v3626 = vpop.f32.mrb[0].mxu0
      %v3627 = vpop.f32.mrb[0].mxu0
      %v3628 = vadd.f32 0.0, %v3627
      %v3629 = vpop.f32.mrb[0].mxu0
      %3630 = vdwg.mxu0
      %v3631 = vld [vmem:[%s224] sm:$0xff]
      %v3632 = vld [vmem:[%s224 + $0x8] sm:$0xff]
      %v3633 = vld [vmem:[%s224 + $0x10] sm:$0xff]
      %v3634 = vld [vmem:[%s224 + $0x18] sm:$0xff]
      %v3635 = vld [vmem:[%s224 + $0x20] sm:$0xff]
      %v3636 = vld [vmem:[%s224 + $0x28] sm:$0xff]
      %v3637 = vld [vmem:[%s224 + $0x30] sm:$0xff]
      %v3638 = vld [vmem:[%s224 + $0x38] sm:$0xff]
      %v3639 = vld [vmem:[%s224 + $0x40] sm:$0xff]
      %v3640 = vld [vmem:[%s224 + $0x48] sm:$0xff]
      %v3641 = vld [vmem:[%s224 + $0x50] sm:$0xff]
      %v3642 = vld [vmem:[%s224 + $0x58] sm:$0xff]
      %v3643 = vld [vmem:[%s224 + $0x60] sm:$0xff]
      %v3644 = vld [vmem:[%s224 + $0x68] sm:$0xff]
      %v3645 = vld [vmem:[%s224 + $0x70] sm:$0xff]
      %v3646 = vld [vmem:[%s224 + $0x78] sm:$0xff]
      %v3647 = vld [vmem:[%s224 + $0x80] sm:$0xff]
      %v3648 = vld [vmem:[%s224 + $0x88] sm:$0xff]
      %v3649 = vld [vmem:[%s224 + $0x90] sm:$0xff]
      %v3650 = vld [vmem:[%s224 + $0x98] sm:$0xff]
      %v3651 = vadd.f32 %v3631, %v3553
      %v3652 = vadd.f32 %v3632, %v3556
      %v3653 = vadd.f32 %v3633, %v3561
      %v3654 = vadd.f32 %v3634, %v3564
      %v3655 = vadd.f32 %v3635, %v3569
      %v3656 = vadd.f32 %v3636, %v3572
      %v3657 = vadd.f32 %v3637, %v3577
      %v3658 = vadd.f32 %v3638, %v3580
      %v3659 = vadd.f32 %v3639, %v3585
      %v3660 = vadd.f32 %v3640, %v3588
      %v3661 = vadd.f32 %v3641, %v3593
      %v3662 = vadd.f32 %v3642, %v3596
      %v3663 = vadd.f32 %v3643, %v3601
      %v3664 = vadd.f32 %v3644, %v3604
      %v3665 = vadd.f32 %v3645, %v3609
      %v3666 = vadd.f32 %v3646, %v3612
      %v3667 = vadd.f32 %v3647, %v3617
      %v3668 = vadd.f32 %v3648, %v3620
      %v3669 = vadd.f32 %v3649, %v3625
      %v3670 = vadd.f32 %v3650, %v3628
      %3671 = vst.msk [vmem:[%s224] sm:$0xff] %vm399, %v3651
      %3672 = vst.msk [vmem:[%s224 + $0x8] sm:$0xff] %vm399, %v3652
      %3673 = vst.msk [vmem:[%s224 + $0x10] sm:$0xff] %vm399, %v3653
      %3674 = vst.msk [vmem:[%s224 + $0x18] sm:$0xff] %vm399, %v3654
      %3675 = vst.msk [vmem:[%s224 + $0x20] sm:$0xff] %vm399, %v3655
      %3676 = vst.msk [vmem:[%s224 + $0x28] sm:$0xff] %vm399, %v3656
      %3677 = vst.msk [vmem:[%s224 + $0x30] sm:$0xff] %vm399, %v3657
      %3678 = vst.msk [vmem:[%s224 + $0x38] sm:$0xff] %vm399, %v3658
      %3679 = vst.msk [vmem:[%s224 + $0x40] sm:$0xff] %vm399, %v3659
      %3680 = vst.msk [vmem:[%s224 + $0x48] sm:$0xff] %vm399, %v3660
      %3681 = vst.msk [vmem:[%s224 + $0x50] sm:$0xff] %vm399, %v3661
      %3682 = vst.msk [vmem:[%s224 + $0x58] sm:$0xff] %vm399, %v3662
      %3683 = vst.msk [vmem:[%s224 + $0x60] sm:$0xff] %vm399, %v3663
      %3684 = vst.msk [vmem:[%s224 + $0x68] sm:$0xff] %vm399, %v3664
      %3685 = vst.msk [vmem:[%s224 + $0x70] sm:$0xff] %vm399, %v3665
      %3686 = vst.msk [vmem:[%s224 + $0x78] sm:$0xff] %vm399, %v3666
      %3687 = vst.msk [vmem:[%s224 + $0x80] sm:$0xff] %vm399, %v3667
      %3688 = vst.msk [vmem:[%s224 + $0x88] sm:$0xff] %vm399, %v3668
      %3689 = vst.msk [vmem:[%s224 + $0x90] sm:$0xff] %vm399, %v3669
      %3690 = vst.msk [vmem:[%s224 + $0x98] sm:$0xff] %vm399, %v3670
      %v3691 = vpack.c.b16 %v292, %v292
      %v3692 = vpack.c.b16 %v294, %v294
      %v3693 = vpack.c.b16 %v296, %v296
      %v3694 = vpack.c.b16 %v298, %v298
      %v3695 = vpack.c.b16 %v300, %v300
      %v3696 = vpack.c.b16 %v302, %v302
      %v3697 = vpack.c.b16 %v304, %v304
      %v3698 = vpack.c.b16 %v306, %v306
      %v3699 = vpack.c.b16 %v308, %v308
      %v3700 = vpack.c.b16 %v310, %v310
      %v3701 = vpack.c.b16 %v312, %v312
      %v3702 = vpack.c.b16 %v314, %v314
      %v3703 = vpack.c.b16 %v316, %v316
      %v3704 = vpack.c.b16 %v318, %v318
      %v3705 = vpack.c.b16 %v320, %v320
      %v3706 = vpack.c.b16 %v322, %v322
      %v3707 = vrot.slane %v3691, 2
      %v3708 = vrot.slane %v3692, 2
      %v3709 = vrot.slane %v3693, 2
      %v3710 = vrot.slane %v3694, 2
      %v3711 = vrot.slane %v3695, 2
      %v3712 = vrot.slane %v3696, 2
      %v3713 = vrot.slane %v3697, 2
      %v3714 = vrot.slane %v3698, 2
      %v3715 = vrot.slane %v3699, 2
      %v3716 = vrot.slane %v3700, 2
      %v3717 = vrot.slane %v3701, 2
      %v3718 = vrot.slane %v3702, 2
      %v3719 = vrot.slane %v3703, 2
      %v3720 = vrot.slane %v3704, 2
      %v3721 = vrot.slane %v3705, 2
      %v3722 = vrot.slane %v3706, 2
      %v3724 = vsel %vm403, %v3707, 0
      %v3726 = vsel %vm403, %v3708, 0
      %v3728 = vsel %vm403, %v3709, 0
      %v3730 = vsel %vm403, %v3710, 0
      %v3732 = vsel %vm403, %v3711, 0
      %v3734 = vsel %vm403, %v3712, 0
      %v3736 = vsel %vm403, %v3713, 0
      %v3738 = vsel %vm403, %v3714, 0
      %v3740 = vsel %vm403, %v3715, 0
      %v3742 = vsel %vm403, %v3716, 0
      %v3744 = vsel %vm403, %v3717, 0
      %v3746 = vsel %vm403, %v3718, 0
      %v3748 = vsel %vm403, %v3719, 0
      %v3750 = vsel %vm403, %v3720, 0
      %v3752 = vsel %vm403, %v3721, 0
      %v3754 = vsel %vm403, %v3722, 0
      %s3755 = scalar_lea.vmem %s3, 20
      %v3756 = vld [vmem:[%s3755] sm:$0x3]
      %v3757 = vsel %vm399, %v3724, 0
      %v3759 = vsel %vm399, %v3726, 0
      %v3761 = vsel %vm399, %v3728, 0
      %v3763 = vsel %vm399, %v3730, 0
      %v3765 = vsel %vm399, %v3732, 0
      %v3767 = vsel %vm399, %v3734, 0
      %v3769 = vsel %vm399, %v3736, 0
      %v3771 = vsel %vm399, %v3738, 0
      %v3773 = vsel %vm399, %v3740, 0
      %v3775 = vsel %vm399, %v3742, 0
      %v3777 = vsel %vm399, %v3744, 0
      %v3779 = vsel %vm399, %v3746, 0
      %v3781 = vsel %vm399, %v3748, 0
      %v3783 = vsel %vm399, %v3750, 0
      %v3785 = vsel %vm399, %v3752, 0
      %v3787 = vsel %vm399, %v3754, 0
      %v3790 = vsel %vm403, %v3756, 0
      %3792 = vmatprep.subr.bf16.mxu0 0
      %3793 = vmatpush1.bf16.msra.mxu0 %v3790
      %3794 = vmatprep.subr.bf16.mxu0 0
      %3795 = vmatpush1.bf16.msra.mxu0 0
      %3796 = vmatprep.subr.bf16.mxu0 0
      %3797 = vmatpush1.bf16.msra.mxu0 0
      %3798 = vmatprep.subr.bf16.mxu0 0
      %3799 = vmatpush1.bf16.msra.mxu0 0
      %3800 = vmatprep.subr.bf16.mxu0 0
      %3801 = vmatpush1.bf16.msra.mxu0 0
      %3802 = vmatprep.subr.bf16.mxu0 0
      %3803 = vmatpush1.bf16.msra.mxu0 0
      %3804 = vmatprep.subr.bf16.mxu0 0
      %3805 = vmatpush1.bf16.msra.mxu0 0
      %3806 = vmatprep.subr.bf16.mxu0 0
      %3807 = vmatpush1.bf16.msra.mxu0 0
      %3808 = vmatprep.subr.bf16.mxu0 0
      %3809 = vmatpush1.bf16.msra.mxu0 0
      %3810 = vmatprep.subr.bf16.mxu0 0
      %3811 = vmatpush1.bf16.msra.mxu0 0
      %3812 = vmatprep.subr.bf16.mxu0 0
      %3813 = vmatpush1.bf16.msra.mxu0 0
      %3814 = vmatprep.subr.bf16.mxu0 0
      %3815 = vmatpush1.bf16.msra.mxu0 0
      %3816 = vmatprep.subr.bf16.mxu0 0
      %3817 = vmatpush1.bf16.msra.mxu0 0
      %3818 = vmatprep.subr.bf16.mxu0 0
      %3819 = vmatpush1.bf16.msra.mxu0 0
      %3820 = vmatprep.subr.bf16.mxu0 0
      %3821 = vmatpush1.bf16.msra.mxu0 0
      %3822 = vmatprep.subr.bf16.mxu0 0
      %3823 = vmatpush1.bf16.msra.mxu0 0
      %3824 = vmatprep.mubr.bf16.mxu0 0
      %3825 = vmatmul.mubr.bf16.gmra.mrb[0].mxu0 %v3757
      %v3826 = vpop.f32.mrb[0].mxu0
      %v3827 = vadd.f32 0.0, %v3826
      %v3828 = vpop.f32.mrb[0].mxu0
      %v3829 = vpop.f32.mrb[0].mxu0
      %v3830 = vadd.f32 0.0, %v3829
      %v3831 = vpop.f32.mrb[0].mxu0
      %3832 = vmatprep.mubr.bf16.mxu0 0
      %3833 = vmatmul.mubr.bf16.gmra.mrb[0].mxu0 %v3759
      %v3834 = vpop.f32.mrb[0].mxu0
      %v3835 = vadd.f32 0.0, %v3834
      %v3836 = vpop.f32.mrb[0].mxu0
      %v3837 = vpop.f32.mrb[0].mxu0
      %v3838 = vadd.f32 0.0, %v3837
      %v3839 = vpop.f32.mrb[0].mxu0
      %3840 = vmatprep.mubr.bf16.mxu0 0
      %3841 = vmatmul.mubr.bf16.gmra.mrb[0].mxu0 %v3761
      %v3842 = vpop.f32.mrb[0].mxu0
      %v3843 = vadd.f32 0.0, %v3842
      %v3844 = vpop.f32.mrb[0].mxu0
      %v3845 = vpop.f32.mrb[0].mxu0
      %v3846 = vadd.f32 0.0, %v3845
      %v3847 = vpop.f32.mrb[0].mxu0
      %3848 = vmatprep.mubr.bf16.mxu0 0
      %3849 = vmatmul.mubr.bf16.gmra.mrb[0].mxu0 %v3763
      %v3850 = vpop.f32.mrb[0].mxu0
      %v3851 = vadd.f32 0.0, %v3850
      %v3852 = vpop.f32.mrb[0].mxu0
      %v3853 = vpop.f32.mrb[0].mxu0
      %v3854 = vadd.f32 0.0, %v3853
      %v3855 = vpop.f32.mrb[0].mxu0
      %3856 = vmatprep.mubr.bf16.mxu0 0
      %3857 = vmatmul.mubr.bf16.gmra.mrb[0].mxu0 %v3765
      %v3858 = vpop.f32.mrb[0].mxu0
      %v3859 = vpop.f32.mrb[0].mxu0
      %v3860 = vpop.f32.mrb[0].mxu0
      %v3861 = vpop.f32.mrb[0].mxu0
      %3862 = vmatprep.mubr.bf16.mxu0 0
      %3863 = vmatmul.mubr.bf16.gmra.mrb[0].mxu0 %v3767
      %v3864 = vpop.f32.mrb[0].mxu0
      %v3865 = vpop.f32.mrb[0].mxu0
      %v3866 = vpop.f32.mrb[0].mxu0
      %v3867 = vpop.f32.mrb[0].mxu0
      %3868 = vmatprep.mubr.bf16.mxu0 0
      %3869 = vmatmul.mubr.bf16.gmra.mrb[0].mxu0 %v3769
      %v3870 = vpop.f32.mrb[0].mxu0
      %v3871 = vpop.f32.mrb[0].mxu0
      %v3872 = vpop.f32.mrb[0].mxu0
      %v3873 = vpop.f32.mrb[0].mxu0
      %3874 = vmatprep.mubr.bf16.mxu0 0
      %3875 = vmatmul.mubr.bf16.gmra.mrb[0].mxu0 %v3771
      %v3876 = vpop.f32.mrb[0].mxu0
      %v3877 = vpop.f32.mrb[0].mxu0
      %v3878 = vpop.f32.mrb[0].mxu0
      %v3879 = vpop.f32.mrb[0].mxu0
      %3880 = vmatprep.mubr.bf16.mxu0 0
      %3881 = vmatmul.mubr.bf16.gmra.mrb[0].mxu0 %v3773
      %v3882 = vpop.f32.mrb[0].mxu0
      %v3883 = vpop.f32.mrb[0].mxu0
      %v3884 = vpop.f32.mrb[0].mxu0
      %v3885 = vpop.f32.mrb[0].mxu0
      %3886 = vmatprep.mubr.bf16.mxu0 0
      %3887 = vmatmul.mubr.bf16.gmra.mrb[0].mxu0 %v3775
      %v3888 = vpop.f32.mrb[0].mxu0
      %v3889 = vpop.f32.mrb[0].mxu0
      %v3890 = vpop.f32.mrb[0].mxu0
      %v3891 = vpop.f32.mrb[0].mxu0
      %3892 = vmatprep.mubr.bf16.mxu0 0
      %3893 = vmatmul.mubr.bf16.gmra.mrb[0].mxu0 %v3777
      %v3894 = vpop.f32.mrb[0].mxu0
      %v3895 = vpop.f32.mrb[0].mxu0
      %v3896 = vpop.f32.mrb[0].mxu0
      %v3897 = vpop.f32.mrb[0].mxu0
      %3898 = vmatprep.mubr.bf16.mxu0 0
      %3899 = vmatmul.mubr.bf16.gmra.mrb[0].mxu0 %v3779
      %v3900 = vpop.f32.mrb[0].mxu0
      %v3901 = vpop.f32.mrb[0].mxu0
      %v3902 = vpop.f32.mrb[0].mxu0
      %v3903 = vpop.f32.mrb[0].mxu0
      %3904 = vmatprep.mubr.bf16.mxu0 0
      %3905 = vmatmul.mubr.bf16.gmra.mrb[0].mxu0 %v3781
      %v3906 = vpop.f32.mrb[0].mxu0
      %v3907 = vpop.f32.mrb[0].mxu0
      %v3908 = vpop.f32.mrb[0].mxu0
      %v3909 = vpop.f32.mrb[0].mxu0
      %3910 = vmatprep.mubr.bf16.mxu0 0
      %3911 = vmatmul.mubr.bf16.gmra.mrb[0].mxu0 %v3783
      %v3912 = vpop.f32.mrb[0].mxu0
      %v3913 = vpop.f32.mrb[0].mxu0
      %v3914 = vpop.f32.mrb[0].mxu0
      %v3915 = vpop.f32.mrb[0].mxu0
      %3916 = vmatprep.mubr.bf16.mxu0 0
      %3917 = vmatmul.mubr.bf16.gmra.mrb[0].mxu0 %v3785
      %v3918 = vpop.f32.mrb[0].mxu0
      %v3919 = vpop.f32.mrb[0].mxu0
      %v3920 = vpop.f32.mrb[0].mxu0
      %v3921 = vpop.f32.mrb[0].mxu0
      %3922 = vmatprep.mubr.bf16.mxu0 0
      %3923 = vmatmul.mubr.bf16.gmra.mrb[0].mxu0 %v3787
      %v3924 = vpop.f32.mrb[0].mxu0
      %v3925 = vpop.f32.mrb[0].mxu0
      %v3926 = vpop.f32.mrb[0].mxu0
      %v3927 = vpop.f32.mrb[0].mxu0
      %3928 = vdwg.mxu0
      %v3929 = vld [vmem:[%s936] sm:$0xff]
      %v3930 = vld [vmem:[%s936 + $0x8] sm:$0xff]
      %v3931 = vld [vmem:[%s936 + $0x10] sm:$0xff]
      %v3932 = vld [vmem:[%s936 + $0x18] sm:$0xff]
      %v3933 = vld [vmem:[%s936 + $0x20] sm:$0xff]
      %v3934 = vld [vmem:[%s936 + $0x28] sm:$0xff]
      %v3935 = vld [vmem:[%s936 + $0x30] sm:$0xff]
      %v3936 = vld [vmem:[%s936 + $0x38] sm:$0xff]
      %v3937 = vadd.f32 %v3929, %v3827
      %v3938 = vadd.f32 %v3930, %v3830
      %v3939 = vadd.f32 %v3931, %v3835
      %v3940 = vadd.f32 %v3932, %v3838
      %v3941 = vadd.f32 %v3933, %v3843
      %v3942 = vadd.f32 %v3934, %v3846
      %v3943 = vadd.f32 %v3935, %v3851
      %v3944 = vadd.f32 %v3936, %v3854
      %3945 = vst.msk [vmem:[%s936] sm:$0xff] %vm399, %v3937
      %3946 = vst.msk [vmem:[%s936 + $0x8] sm:$0xff] %vm399, %v3938
      %3947 = vst.msk [vmem:[%s936 + $0x10] sm:$0xff] %vm399, %v3939
      %3948 = vst.msk [vmem:[%s936 + $0x18] sm:$0xff] %vm399, %v3940
      %3949 = vst.msk [vmem:[%s936 + $0x20] sm:$0xff] %vm399, %v3941
      %3950 = vst.msk [vmem:[%s936 + $0x28] sm:$0xff] %vm399, %v3942
      %3951 = vst.msk [vmem:[%s936 + $0x30] sm:$0xff] %vm399, %v3943
      %3952 = vst.msk [vmem:[%s936 + $0x38] sm:$0xff] %vm399, %v3944
      %s3953 = scalar_lea.vmem %s3, 24
      %v3954 = vld [vmem:[%s3953] sm:$0x3]
      %v3956 = vsel %vm403, %v3954, 0
      %3958 = vmatprep.subr.bf16.mxu0 0
      %3959 = vmatpush1.bf16.msra.mxu0 %v3956
      %3960 = vmatprep.subr.bf16.mxu0 0
      %3961 = vmatpush1.bf16.msra.mxu0 0
      %3962 = vmatprep.subr.bf16.mxu0 0
      %3963 = vmatpush1.bf16.msra.mxu0 0
      %3964 = vmatprep.subr.bf16.mxu0 0
      %3965 = vmatpush1.bf16.msra.mxu0 0
      %3966 = vmatprep.subr.bf16.mxu0 0
      %3967 = vmatpush1.bf16.msra.mxu0 0
      %3968 = vmatprep.subr.bf16.mxu0 0
      %3969 = vmatpush1.bf16.msra.mxu0 0
      %3970 = vmatprep.subr.bf16.mxu0 0
      %3971 = vmatpush1.bf16.msra.mxu0 0
      %3972 = vmatprep.subr.bf16.mxu0 0
      %3973 = vmatpush1.bf16.msra.mxu0 0
      %3974 = vmatprep.subr.bf16.mxu0 0
      %3975 = vmatpush1.bf16.msra.mxu0 0
      %3976 = vmatprep.subr.bf16.mxu0 0
      %3977 = vmatpush1.bf16.msra.mxu0 0
      %3978 = vmatprep.subr.bf16.mxu0 0
      %3979 = vmatpush1.bf16.msra.mxu0 0
      %3980 = vmatprep.subr.bf16.mxu0 0
      %3981 = vmatpush1.bf16.msra.mxu0 0
      %3982 = vmatprep.subr.bf16.mxu0 0
      %3983 = vmatpush1.bf16.msra.mxu0 0
      %3984 = vmatprep.subr.bf16.mxu0 0
      %3985 = vmatpush1.bf16.msra.mxu0 0
      %3986 = vmatprep.subr.bf16.mxu0 0
      %3987 = vmatpush1.bf16.msra.mxu0 0
      %3988 = vmatprep.subr.bf16.mxu0 0
      %3989 = vmatpush1.bf16.msra.mxu0 0
      %3990 = vmatprep.mubr.bf16.mxu0 0
      %3991 = vmatmul.mubr.bf16.gmra.mrb[0].mxu0 %v3757
      %v3992 = vpop.f32.mrb[0].mxu0
      %v3993 = vadd.f32 0.0, %v3992
      %v3994 = vpop.f32.mrb[0].mxu0
      %v3995 = vpop.f32.mrb[0].mxu0
      %v3996 = vadd.f32 0.0, %v3995
      %v3997 = vpop.f32.mrb[0].mxu0
      %3998 = vmatprep.mubr.bf16.mxu0 0
      %3999 = vmatmul.mubr.bf16.gmra.mrb[0].mxu0 %v3759
      %v4000 = vpop.f32.mrb[0].mxu0
      %v4001 = vadd.f32 0.0, %v4000
      %v4002 = vpop.f32.mrb[0].mxu0
      %v4003 = vpop.f32.mrb[0].mxu0
      %v4004 = vadd.f32 0.0, %v4003
      %v4005 = vpop.f32.mrb[0].mxu0
      %4006 = vmatprep.mubr.bf16.mxu0 0
      %4007 = vmatmul.mubr.bf16.gmra.mrb[0].mxu0 %v3761
      %v4008 = vpop.f32.mrb[0].mxu0
      %v4009 = vadd.f32 0.0, %v4008
      %v4010 = vpop.f32.mrb[0].mxu0
      %v4011 = vpop.f32.mrb[0].mxu0
      %v4012 = vadd.f32 0.0, %v4011
      %v4013 = vpop.f32.mrb[0].mxu0
      %4014 = vmatprep.mubr.bf16.mxu0 0
      %4015 = vmatmul.mubr.bf16.gmra.mrb[0].mxu0 %v3763
      %v4016 = vpop.f32.mrb[0].mxu0
      %v4017 = vadd.f32 0.0, %v4016
      %v4018 = vpop.f32.mrb[0].mxu0
      %v4019 = vpop.f32.mrb[0].mxu0
      %v4020 = vadd.f32 0.0, %v4019
      %v4021 = vpop.f32.mrb[0].mxu0
      %4022 = vmatprep.mubr.bf16.mxu0 0
      %4023 = vmatmul.mubr.bf16.gmra.mrb[0].mxu0 %v3765
      %v4024 = vpop.f32.mrb[0].mxu0
      %v4025 = vadd.f32 0.0, %v4024
      %v4026 = vpop.f32.mrb[0].mxu0
      %v4027 = vpop.f32.mrb[0].mxu0
      %v4028 = vadd.f32 0.0, %v4027
      %v4029 = vpop.f32.mrb[0].mxu0
      %4030 = vmatprep.mubr.bf16.mxu0 0
      %4031 = vmatmul.mubr.bf16.gmra.mrb[0].mxu0 %v3767
      %v4032 = vpop.f32.mrb[0].mxu0
      %v4033 = vadd.f32 0.0, %v4032
      %v4034 = vpop.f32.mrb[0].mxu0
      %v4035 = vpop.f32.mrb[0].mxu0
      %v4036 = vadd.f32 0.0, %v4035
      %v4037 = vpop.f32.mrb[0].mxu0
      %4038 = vmatprep.mubr.bf16.mxu0 0
      %4039 = vmatmul.mubr.bf16.gmra.mrb[0].mxu0 %v3769
      %v4040 = vpop.f32.mrb[0].mxu0
      %v4041 = vadd.f32 0.0, %v4040
      %v4042 = vpop.f32.mrb[0].mxu0
      %v4043 = vpop.f32.mrb[0].mxu0
      %v4044 = vadd.f32 0.0, %v4043
      %v4045 = vpop.f32.mrb[0].mxu0
      %4046 = vmatprep.mubr.bf16.mxu0 0
      %4047 = vmatmul.mubr.bf16.gmra.mrb[0].mxu0 %v3771
      %v4048 = vpop.f32.mrb[0].mxu0
      %v4049 = vadd.f32 0.0, %v4048
      %v4050 = vpop.f32.mrb[0].mxu0
      %v4051 = vpop.f32.mrb[0].mxu0
      %v4052 = vadd.f32 0.0, %v4051
      %v4053 = vpop.f32.mrb[0].mxu0
      %4054 = vmatprep.mubr.bf16.mxu0 0
      %4055 = vmatmul.mubr.bf16.gmra.mrb[0].mxu0 %v3773
      %v4056 = vpop.f32.mrb[0].mxu0
      %v4057 = vadd.f32 0.0, %v4056
      %v4058 = vpop.f32.mrb[0].mxu0
      %v4059 = vpop.f32.mrb[0].mxu0
      %v4060 = vadd.f32 0.0, %v4059
      %v4061 = vpop.f32.mrb[0].mxu0
      %4062 = vmatprep.mubr.bf16.mxu0 0
      %4063 = vmatmul.mubr.bf16.gmra.mrb[0].mxu0 %v3775
      %v4064 = vpop.f32.mrb[0].mxu0
      %v4065 = vadd.f32 0.0, %v4064
      %v4066 = vpop.f32.mrb[0].mxu0
      %v4067 = vpop.f32.mrb[0].mxu0
      %v4068 = vadd.f32 0.0, %v4067
      %v4069 = vpop.f32.mrb[0].mxu0
      %4070 = vmatprep.mubr.bf16.mxu0 0
      %4071 = vmatmul.mubr.bf16.gmra.mrb[0].mxu0 %v3777
      %v4072 = vpop.f32.mrb[0].mxu0
      %v4073 = vadd.f32 0.0, %v4072
      %v4074 = vpop.f32.mrb[0].mxu0
      %v4075 = vpop.f32.mrb[0].mxu0
      %v4076 = vadd.f32 0.0, %v4075
      %v4077 = vpop.f32.mrb[0].mxu0
      %4078 = vmatprep.mubr.bf16.mxu0 0
      %4079 = vmatmul.mubr.bf16.gmra.mrb[0].mxu0 %v3779
      %v4080 = vpop.f32.mrb[0].mxu0
      %v4081 = vadd.f32 0.0, %v4080
      %v4082 = vpop.f32.mrb[0].mxu0
      %v4083 = vpop.f32.mrb[0].mxu0
      %v4084 = vadd.f32 0.0, %v4083
      %v4085 = vpop.f32.mrb[0].mxu0
      %4086 = vmatprep.mubr.bf16.mxu0 0
      %4087 = vmatmul.mubr.bf16.gmra.mrb[0].mxu0 %v3781
      %v4088 = vpop.f32.mrb[0].mxu0
      %v4089 = vadd.f32 0.0, %v4088
      %v4090 = vpop.f32.mrb[0].mxu0
      %v4091 = vpop.f32.mrb[0].mxu0
      %v4092 = vadd.f32 0.0, %v4091
      %v4093 = vpop.f32.mrb[0].mxu0
      %4094 = vmatprep.mubr.bf16.mxu0 0
      %4095 = vmatmul.mubr.bf16.gmra.mrb[0].mxu0 %v3783
      %v4096 = vpop.f32.mrb[0].mxu0
      %v4097 = vadd.f32 0.0, %v4096
      %v4098 = vpop.f32.mrb[0].mxu0
      %v4099 = vpop.f32.mrb[0].mxu0
      %v4100 = vadd.f32 0.0, %v4099
      %v4101 = vpop.f32.mrb[0].mxu0
      %4102 = vmatprep.mubr.bf16.mxu0 0
      %4103 = vmatmul.mubr.bf16.gmra.mrb[0].mxu0 %v3785
      %v4104 = vpop.f32.mrb[0].mxu0
      %v4105 = vadd.f32 0.0, %v4104
      %v4106 = vpop.f32.mrb[0].mxu0
      %v4107 = vpop.f32.mrb[0].mxu0
      %v4108 = vadd.f32 0.0, %v4107
      %v4109 = vpop.f32.mrb[0].mxu0
      %4110 = vmatprep.mubr.bf16.mxu0 0
      %4111 = vmatmul.mubr.bf16.gmra.mrb[0].mxu0 %v3787
      %v4112 = vpop.f32.mrb[0].mxu0
      %v4113 = vadd.f32 0.0, %v4112
      %v4114 = vpop.f32.mrb[0].mxu0
      %v4115 = vpop.f32.mrb[0].mxu0
      %v4116 = vadd.f32 0.0, %v4115
      %v4117 = vpop.f32.mrb[0].mxu0
      %4118 = vdwg.mxu0
      %v4119 = vld [vmem:[%s224] sm:$0xff]
      %v4120 = vld [vmem:[%s224 + $0x8] sm:$0xff]
      %v4121 = vld [vmem:[%s224 + $0x10] sm:$0xff]
      %v4122 = vld [vmem:[%s224 + $0x18] sm:$0xff]
      %v4123 = vld [vmem:[%s224 + $0x20] sm:$0xff]
      %v4124 = vld [vmem:[%s224 + $0x28] sm:$0xff]
      %v4125 = vld [vmem:[%s224 + $0x30] sm:$0xff]
      %v4126 = vld [vmem:[%s224 + $0x38] sm:$0xff]
      %v4127 = vld [vmem:[%s224 + $0x40] sm:$0xff]
      %v4128 = vld [vmem:[%s224 + $0x48] sm:$0xff]
      %v4129 = vld [vmem:[%s224 + $0x50] sm:$0xff]
      %v4130 = vld [vmem:[%s224 + $0x58] sm:$0xff]
      %v4131 = vld [vmem:[%s224 + $0x60] sm:$0xff]
      %v4132 = vld [vmem:[%s224 + $0x68] sm:$0xff]
      %v4133 = vld [vmem:[%s224 + $0x70] sm:$0xff]
      %v4134 = vld [vmem:[%s224 + $0x78] sm:$0xff]
      %v4135 = vld [vmem:[%s224 + $0x80] sm:$0xff]
      %v4136 = vld [vmem:[%s224 + $0x88] sm:$0xff]
      %v4137 = vld [vmem:[%s224 + $0x90] sm:$0xff]
      %v4138 = vld [vmem:[%s224 + $0x98] sm:$0xff]
      %v4139 = vld [vmem:[%s224 + $0xa0] sm:$0xff]
      %v4140 = vld [vmem:[%s224 + $0xa8] sm:$0xff]
      %v4141 = vld [vmem:[%s224 + $0xb0] sm:$0xff]
      %v4142 = vld [vmem:[%s224 + $0xb8] sm:$0xff]
      %v4143 = vld [vmem:[%s224 + $0xc0] sm:$0xff]
      %v4144 = vld [vmem:[%s224 + $0xc8] sm:$0xff]
      %v4145 = vld [vmem:[%s224 + $0xd0] sm:$0xff]
      %v4146 = vld [vmem:[%s224 + $0xd8] sm:$0xff]
      %v4147 = vld [vmem:[%s224 + $0xe0] sm:$0xff]
      %v4148 = vld [vmem:[%s224 + $0xe8] sm:$0xff]
      %v4149 = vld [vmem:[%s224 + $0xf0] sm:$0xff]
      %v4150 = vld [vmem:[%s224 + $0xf8] sm:$0xff]
      %v4151 = vadd.f32 %v4119, %v3993
      %v4152 = vadd.f32 %v4120, %v3996
      %v4153 = vadd.f32 %v4121, %v4001
      %v4154 = vadd.f32 %v4122, %v4004
      %v4155 = vadd.f32 %v4123, %v4009
      %v4156 = vadd.f32 %v4124, %v4012
      %v4157 = vadd.f32 %v4125, %v4017
      %v4158 = vadd.f32 %v4126, %v4020
      %v4159 = vadd.f32 %v4127, %v4025
      %v4160 = vadd.f32 %v4128, %v4028
      %v4161 = vadd.f32 %v4129, %v4033
      %v4162 = vadd.f32 %v4130, %v4036
      %v4163 = vadd.f32 %v4131, %v4041
      %v4164 = vadd.f32 %v4132, %v4044
      %v4165 = vadd.f32 %v4133, %v4049
      %v4166 = vadd.f32 %v4134, %v4052
      %v4167 = vadd.f32 %v4135, %v4057
      %v4168 = vadd.f32 %v4136, %v4060
      %v4169 = vadd.f32 %v4137, %v4065
      %v4170 = vadd.f32 %v4138, %v4068
      %v4171 = vadd.f32 %v4139, %v4073
      %v4172 = vadd.f32 %v4140, %v4076
      %v4173 = vadd.f32 %v4141, %v4081
      %v4174 = vadd.f32 %v4142, %v4084
      %v4175 = vadd.f32 %v4143, %v4089
      %v4176 = vadd.f32 %v4144, %v4092
      %v4177 = vadd.f32 %v4145, %v4097
      %v4178 = vadd.f32 %v4146, %v4100
      %v4179 = vadd.f32 %v4147, %v4105
      %v4180 = vadd.f32 %v4148, %v4108
      %v4181 = vadd.f32 %v4149, %v4113
      %v4182 = vadd.f32 %v4150, %v4116
      %4183 = vst.msk [vmem:[%s224] sm:$0xff] %vm399, %v4151
      %4184 = vst.msk [vmem:[%s224 + $0x8] sm:$0xff] %vm399, %v4152
      %4185 = vst.msk [vmem:[%s224 + $0x10] sm:$0xff] %vm399, %v4153
      %4186 = vst.msk [vmem:[%s224 + $0x18] sm:$0xff] %vm399, %v4154
      %4187 = vst.msk [vmem:[%s224 + $0x20] sm:$0xff] %vm399, %v4155
      %4188 = vst.msk [vmem:[%s224 + $0x28] sm:$0xff] %vm399, %v4156
      %4189 = vst.msk [vmem:[%s224 + $0x30] sm:$0xff] %vm399, %v4157
      %4190 = vst.msk [vmem:[%s224 + $0x38] sm:$0xff] %vm399, %v4158
      %4191 = vst.msk [vmem:[%s224 + $0x40] sm:$0xff] %vm399, %v4159
      %4192 = vst.msk [vmem:[%s224 + $0x48] sm:$0xff] %vm399, %v4160
      %4193 = vst.msk [vmem:[%s224 + $0x50] sm:$0xff] %vm399, %v4161
      %4194 = vst.msk [vmem:[%s224 + $0x58] sm:$0xff] %vm399, %v4162
      %4195 = vst.msk [vmem:[%s224 + $0x60] sm:$0xff] %vm399, %v4163
      %4196 = vst.msk [vmem:[%s224 + $0x68] sm:$0xff] %vm399, %v4164
      %4197 = vst.msk [vmem:[%s224 + $0x70] sm:$0xff] %vm399, %v4165
      %4198 = vst.msk [vmem:[%s224 + $0x78] sm:$0xff] %vm399, %v4166
      %4199 = vst.msk [vmem:[%s224 + $0x80] sm:$0xff] %vm399, %v4167
      %4200 = vst.msk [vmem:[%s224 + $0x88] sm:$0xff] %vm399, %v4168
      %4201 = vst.msk [vmem:[%s224 + $0x90] sm:$0xff] %vm399, %v4169
      %4202 = vst.msk [vmem:[%s224 + $0x98] sm:$0xff] %vm399, %v4170
      %4203 = vst.msk [vmem:[%s224 + $0xa0] sm:$0xff] %vm399, %v4171
      %4204 = vst.msk [vmem:[%s224 + $0xa8] sm:$0xff] %vm399, %v4172
      %4205 = vst.msk [vmem:[%s224 + $0xb0] sm:$0xff] %vm399, %v4173
      %4206 = vst.msk [vmem:[%s224 + $0xb8] sm:$0xff] %vm399, %v4174
      %4207 = vst.msk [vmem:[%s224 + $0xc0] sm:$0xff] %vm399, %v4175
      %4208 = vst.msk [vmem:[%s224 + $0xc8] sm:$0xff] %vm399, %v4176
      %4209 = vst.msk [vmem:[%s224 + $0xd0] sm:$0xff] %vm399, %v4177
      %4210 = vst.msk [vmem:[%s224 + $0xd8] sm:$0xff] %vm399, %v4178
      %4211 = vst.msk [vmem:[%s224 + $0xe0] sm:$0xff] %vm399, %v4179
      %4212 = vst.msk [vmem:[%s224 + $0xe8] sm:$0xff] %vm399, %v4180
      %4213 = vst.msk [vmem:[%s224 + $0xf0] sm:$0xff] %vm399, %v4181
      %4214 = vst.msk [vmem:[%s224 + $0xf8] sm:$0xff] %vm399, %v4182
      %s4215 = scalar_lea.vmem %s3, 30
      %v4216 = vld [vmem:[%s4215] sm:$0x3]
      %v4218 = vsel %vm403, %v4216, 0
      %4220 = vmatprep.subr.bf16.mxu0 0
      %4221 = vmatpush1.bf16.msra.mxu0 %v4218
      %4222 = vmatprep.subr.bf16.mxu0 0
      %4223 = vmatpush1.bf16.msra.mxu0 0
      %4224 = vmatprep.subr.bf16.mxu0 0
      %4225 = vmatpush1.bf16.msra.mxu0 0
      %4226 = vmatprep.subr.bf16.mxu0 0
      %4227 = vmatpush1.bf16.msra.mxu0 0
      %4228 = vmatprep.subr.bf16.mxu0 0
      %4229 = vmatpush1.bf16.msra.mxu0 0
      %4230 = vmatprep.subr.bf16.mxu0 0
      %4231 = vmatpush1.bf16.msra.mxu0 0
      %4232 = vmatprep.subr.bf16.mxu0 0
      %4233 = vmatpush1.bf16.msra.mxu0 0
      %4234 = vmatprep.subr.bf16.mxu0 0
      %4235 = vmatpush1.bf16.msra.mxu0 0
      %4236 = vmatprep.subr.bf16.mxu0 0
      %4237 = vmatpush1.bf16.msra.mxu0 0
      %4238 = vmatprep.subr.bf16.mxu0 0
      %4239 = vmatpush1.bf16.msra.mxu0 0
      %4240 = vmatprep.subr.bf16.mxu0 0
      %4241 = vmatpush1.bf16.msra.mxu0 0
      %4242 = vmatprep.subr.bf16.mxu0 0
      %4243 = vmatpush1.bf16.msra.mxu0 0
      %4244 = vmatprep.subr.bf16.mxu0 0
      %4245 = vmatpush1.bf16.msra.mxu0 0
      %4246 = vmatprep.subr.bf16.mxu0 0
      %4247 = vmatpush1.bf16.msra.mxu0 0
      %4248 = vmatprep.subr.bf16.mxu0 0
      %4249 = vmatpush1.bf16.msra.mxu0 0
      %4250 = vmatprep.subr.bf16.mxu0 0
      %4251 = vmatpush1.bf16.msra.mxu0 0
      %4252 = vmatprep.mubr.bf16.mxu0 0
      %4253 = vmatmul.mubr.bf16.gmra.mrb[0].mxu0 %v3757
      %v4254 = vpop.f32.mrb[0].mxu0
      %v4255 = vpop.f32.mrb[0].mxu0
      %v4256 = vpop.f32.mrb[0].mxu0
      %v4257 = vpop.f32.mrb[0].mxu0
      %4258 = vmatprep.mubr.bf16.mxu0 0
      %4259 = vmatmul.mubr.bf16.gmra.mrb[0].mxu0 %v3759
      %v4260 = vpop.f32.mrb[0].mxu0
      %v4261 = vpop.f32.mrb[0].mxu0
      %v4262 = vpop.f32.mrb[0].mxu0
      %v4263 = vpop.f32.mrb[0].mxu0
      %4264 = vmatprep.mubr.bf16.mxu0 0
      %4265 = vmatmul.mubr.bf16.gmra.mrb[0].mxu0 %v3761
      %v4266 = vpop.f32.mrb[0].mxu0
      %v4267 = vpop.f32.mrb[0].mxu0
      %v4268 = vpop.f32.mrb[0].mxu0
      %v4269 = vpop.f32.mrb[0].mxu0
      %4270 = vmatprep.mubr.bf16.mxu0 0
      %4271 = vmatmul.mubr.bf16.gmra.mrb[0].mxu0 %v3763
      %v4272 = vpop.f32.mrb[0].mxu0
      %v4273 = vpop.f32.mrb[0].mxu0
      %v4274 = vpop.f32.mrb[0].mxu0
      %v4275 = vpop.f32.mrb[0].mxu0
      %4276 = vmatprep.mubr.bf16.mxu0 0
      %4277 = vmatmul.mubr.bf16.gmra.mrb[0].mxu0 %v3765
      %v4278 = vpop.f32.mrb[0].mxu0
      %v4279 = vpop.f32.mrb[0].mxu0
      %v4280 = vpop.f32.mrb[0].mxu0
      %v4281 = vpop.f32.mrb[0].mxu0
      %4282 = vmatprep.mubr.bf16.mxu0 0
      %4283 = vmatmul.mubr.bf16.gmra.mrb[0].mxu0 %v3767
      %v4284 = vpop.f32.mrb[0].mxu0
      %v4285 = vpop.f32.mrb[0].mxu0
      %v4286 = vpop.f32.mrb[0].mxu0
      %v4287 = vpop.f32.mrb[0].mxu0
      %4288 = vmatprep.mubr.bf16.mxu0 0
      %4289 = vmatmul.mubr.bf16.gmra.mrb[0].mxu0 %v3769
      %v4290 = vpop.f32.mrb[0].mxu0
      %v4291 = vpop.f32.mrb[0].mxu0
      %v4292 = vpop.f32.mrb[0].mxu0
      %v4293 = vpop.f32.mrb[0].mxu0
      %4294 = vmatprep.mubr.bf16.mxu0 0
      %4295 = vmatmul.mubr.bf16.gmra.mrb[0].mxu0 %v3771
      %v4296 = vpop.f32.mrb[0].mxu0
      %v4297 = vpop.f32.mrb[0].mxu0
      %v4298 = vpop.f32.mrb[0].mxu0
      %v4299 = vpop.f32.mrb[0].mxu0
      %4300 = vmatprep.mubr.bf16.mxu0 0
      %4301 = vmatmul.mubr.bf16.gmra.mrb[0].mxu0 %v3773
      %v4302 = vpop.f32.mrb[0].mxu0
      %v4303 = vpop.f32.mrb[0].mxu0
      %v4304 = vpop.f32.mrb[0].mxu0
      %v4305 = vpop.f32.mrb[0].mxu0
      %4306 = vmatprep.mubr.bf16.mxu0 0
      %4307 = vmatmul.mubr.bf16.gmra.mrb[0].mxu0 %v3775
      %v4308 = vpop.f32.mrb[0].mxu0
      %v4309 = vpop.f32.mrb[0].mxu0
      %v4310 = vpop.f32.mrb[0].mxu0
      %v4311 = vpop.f32.mrb[0].mxu0
      %4312 = vmatprep.mubr.bf16.mxu0 0
      %4313 = vmatmul.mubr.bf16.gmra.mrb[0].mxu0 %v3777
      %v4314 = vpop.f32.mrb[0].mxu0
      %v4315 = vpop.f32.mrb[0].mxu0
      %v4316 = vpop.f32.mrb[0].mxu0
      %v4317 = vpop.f32.mrb[0].mxu0
      %4318 = vmatprep.mubr.bf16.mxu0 0
      %4319 = vmatmul.mubr.bf16.gmra.mrb[0].mxu0 %v3779
      %v4320 = vpop.f32.mrb[0].mxu0
      %v4321 = vpop.f32.mrb[0].mxu0
      %v4322 = vpop.f32.mrb[0].mxu0
      %v4323 = vpop.f32.mrb[0].mxu0
      %4324 = vmatprep.mubr.bf16.mxu0 0
      %4325 = vmatmul.mubr.bf16.gmra.mrb[0].mxu0 %v3781
      %v4326 = vpop.f32.mrb[0].mxu0
      %v4327 = vadd.f32 0.0, %v4326
      %v4328 = vpop.f32.mrb[0].mxu0
      %v4329 = vpop.f32.mrb[0].mxu0
      %v4330 = vadd.f32 0.0, %v4329
      %v4331 = vpop.f32.mrb[0].mxu0
      %4332 = vmatprep.mubr.bf16.mxu0 0
      %4333 = vmatmul.mubr.bf16.gmra.mrb[0].mxu0 %v3783
      %v4334 = vpop.f32.mrb[0].mxu0
      %v4335 = vadd.f32 0.0, %v4334
      %v4336 = vpop.f32.mrb[0].mxu0
      %v4337 = vpop.f32.mrb[0].mxu0
      %v4338 = vadd.f32 0.0, %v4337
      %v4339 = vpop.f32.mrb[0].mxu0
      %4340 = vmatprep.mubr.bf16.mxu0 0
      %4341 = vmatmul.mubr.bf16.gmra.mrb[0].mxu0 %v3785
      %v4342 = vpop.f32.mrb[0].mxu0
      %v4343 = vadd.f32 0.0, %v4342
      %v4344 = vpop.f32.mrb[0].mxu0
      %v4345 = vpop.f32.mrb[0].mxu0
      %v4346 = vadd.f32 0.0, %v4345
      %v4347 = vpop.f32.mrb[0].mxu0
      %4348 = vmatprep.mubr.bf16.mxu0 0
      %4349 = vmatmul.mubr.bf16.gmra.mrb[0].mxu0 %v3787
      %v4350 = vpop.f32.mrb[0].mxu0
      %v4351 = vadd.f32 0.0, %v4350
      %v4352 = vpop.f32.mrb[0].mxu0
      %v4353 = vpop.f32.mrb[0].mxu0
      %v4354 = vadd.f32 0.0, %v4353
      %v4355 = vpop.f32.mrb[0].mxu0
      %4356 = vdwg.mxu0
      %v4357 = vld [vmem:[%s224] sm:$0xff]
      %v4358 = vld [vmem:[%s224 + $0x8] sm:$0xff]
      %v4359 = vld [vmem:[%s224 + $0x10] sm:$0xff]
      %v4360 = vld [vmem:[%s224 + $0x18] sm:$0xff]
      %v4361 = vld [vmem:[%s224 + $0x20] sm:$0xff]
      %v4362 = vld [vmem:[%s224 + $0x28] sm:$0xff]
      %v4363 = vld [vmem:[%s224 + $0x30] sm:$0xff]
      %v4364 = vld [vmem:[%s224 + $0x38] sm:$0xff]
      %v4365 = vadd.f32 %v4357, %v4327
      %v4366 = vadd.f32 %v4358, %v4330
      %v4367 = vadd.f32 %v4359, %v4335
      %v4368 = vadd.f32 %v4360, %v4338
      %v4369 = vadd.f32 %v4361, %v4343
      %v4370 = vadd.f32 %v4362, %v4346
      %v4371 = vadd.f32 %v4363, %v4351
      %v4372 = vadd.f32 %v4364, %v4354
      %4373 = vst.msk [vmem:[%s224] sm:$0xff] %vm399, %v4365
      %4374 = vst.msk [vmem:[%s224 + $0x8] sm:$0xff] %vm399, %v4366
      %4375 = vst.msk [vmem:[%s224 + $0x10] sm:$0xff] %vm399, %v4367
      %4376 = vst.msk [vmem:[%s224 + $0x18] sm:$0xff] %vm399, %v4368
      %4377 = vst.msk [vmem:[%s224 + $0x20] sm:$0xff] %vm399, %v4369
      %4378 = vst.msk [vmem:[%s224 + $0x28] sm:$0xff] %vm399, %v4370
      %4379 = vst.msk [vmem:[%s224 + $0x30] sm:$0xff] %vm399, %v4371
      %4380 = vst.msk [vmem:[%s224 + $0x38] sm:$0xff] %vm399, %v4372
      %p4381 = scmp.lt.s32.totalorder %s16, 1
      %s4382 = scalar_select %p4381, %s16, 1
      %s4383 = smul.addr %s4382, 32
      %s4384 = smul.addr %s4383, 8
      %s4385 = scalar_lea.vmem %s5, %s4384
      // Predicated region
      $region41: #{aspp_forward.1} parent=39 // pred_check
        %p4386 = pneg %p144
      $region42: #{aspp_forward.1} parent=39 // pred_check_branch
        %4388 = sbr.rel (%p4386) target = $region44
      $region43: #{aspp_forward.1} parent=39 // pred_region
        _
      $region44: #{aspp_forward.1} parent=39 // pred_fallthru
        _
    $region40: #{aspp_forward.1} parent=5 // pred_fallthru
      _
    %p4389 = scmp.le.s32.totalorder 2, %s11
    // Predicated region
    $region45: #{aspp_forward.1} parent=5 // pred_check
      %p4390 = pneg %p4389
    $region46: #{aspp_forward.1} parent=5 // pred_check_branch
      %4392 = sbr.rel (%p4390) target = $region48
    $region47: #{aspp_forward.1} parent=5 // pred_region
      %s4393 = ssub.s32 %s11, 2
      // Predicated region
      $region49: #{aspp_forward.1} parent=47 // pred_check
        %p4394 = pneg %p150
      $region50: #{aspp_forward.1} parent=47 // pred_check_branch
        %4396 = sbr.rel (%p4394) target = $region52
      $region51: #{aspp_forward.1} parent=47 // pred_region
        %p4397 = scmp.lt.s32.totalorder %s17, 1
        %s4398 = scalar_select %p4397, %s17, 1
        %s4399 = smul.addr %s4398, 32
        %s4400 = smul.addr %s4399, 8
        %s4401 = scalar_lea.vmem %s5, %s4400
      $region52: #{aspp_forward.1} parent=47 // pred_fallthru
        _
    $region48: #{aspp_forward.1} parent=5 // pred_fallthru
      _
  $region6: #{aspp_forward.1} parent=0 // loop_footer
    %s15 = sadd.s32 1, %s11
  $region7: #{aspp_forward.1} parent=0 // loop_footer_branch
    %10 = sbr.rel target = $region3
  $region8: #{aspp_forward.1} parent=0 // loop_exit
    _

</llo_original>
